<compile_context>
chip_gen: v7x
topology: tpu7x:2x2x1
jax: 0.10.0
libtpu: 0.0.40
codegen_flags: <defaults>
</compile_context>

<pallas_src>
import functools

import jax
import jax.numpy as jnp
import numpy as np
from jax import lax
from jax.experimental import pallas as pl
from jax.experimental.pallas import tpu as pltpu

BN_EPS = 1e-5
LANE = 128


def _round_up(x, m):
    return (x + m - 1) // m * m


def _vmem_limit_bytes():
    """Generation-aware scoped-VMEM limit (96 MiB on 128-MiB parts, 48 on v7x)."""
    try:
        info = pltpu.get_tpu_info()
        cap = getattr(info, "vmem_capacity_bytes", None)
    except Exception:
        cap = None
    if not cap:
        return 32 * 1024 * 1024
    return int(min(cap * 3 // 4, 112 * 1024 * 1024))


def _pick_tile_rows(N, H, W, Cp, itemsize, vmem_limit):
    """Largest row-tile TH (divisor of H) whose stage-2 working set fits VMEM,
    preferring enough grid steps for pipelining / 2-TC sharding."""
    fixed = 2 * 9 * Cp * Cp * itemsize                 # double-buffered w2
    per_row = W * Cp * (6 * itemsize                   # a1/skip/a2, 2-deep each
                        + itemsize                     # halo slab scratch
                        + 8)                           # f32 accumulator + temps
    budget = int(vmem_limit * 0.6)
    th_cap = max(1, (budget - fixed) // per_row)
    divisors = [d for d in range(1, H + 1) if H % d == 0]
    fitting = [d for d in divisors if d <= th_cap] or [1]
    deep = [d for d in fitting if N * (H // d) >= 8]   # >=8 grid steps if possible
    return max(deep) if deep else max(fitting)


# --------------------------------------------------------------------------- #
# Pass 1: one MXU matmul per row block on the wrapper-built im2col slab:
#   columns [0:Cp)   -> a1   = relu(conv3x3_1(x))
#   columns [Cp:2Cp) -> skip = relu(conv1x1(x))   (weights in the centre tap)
# plus per-block mean-shifted BN moments of a1 and skip.
# --------------------------------------------------------------------------- #
def _stage1_kernel(xc_ref, wbig_ref, bbig_ref, a1_ref, skip_ref, stats_ref,
                   *, TH, W, K, Cp):
    m = TH * W
    xc = xc_ref[0].reshape(m, K)
    y = jnp.dot(xc, wbig_ref[...], preferred_element_type=jnp.float32)
    y = jnp.maximum(y + bbig_ref[...], 0.0)            # (m, 2*Cp) f32
    a1 = y[:, :Cp]
    sk = y[:, Cp:]
    a1_ref[0] = a1.reshape(TH, W, Cp).astype(a1_ref.dtype)
    skip_ref[0] = sk.reshape(TH, W, Cp).astype(skip_ref.dtype)

    s_a1 = jnp.sum(a1, axis=0, keepdims=True)
    d_a1 = a1 - s_a1 / m
    m2_a1 = jnp.sum(d_a1 * d_a1, axis=0, keepdims=True)
    s_sk = jnp.sum(sk, axis=0, keepdims=True)
    d_sk = sk - s_sk / m
    m2_sk = jnp.sum(d_sk * d_sk, axis=0, keepdims=True)
    # Single coalesced (4, Cp) store instead of four 1-sublane masked stores.
    stats_ref[0, 0] = jnp.concatenate([s_a1, m2_a1, s_sk, m2_sk], axis=0)


# --------------------------------------------------------------------------- #
# Pass 2: h1 = BN(a1) (per-channel affine), a2 = relu(conv3x3_2(h1)), moments
# of a2 and the centered a2/skip cross moment (so the last two BNs need no
# extra data pass).  The 3x3 conv is 9 accumulating matmuls on shifted slices
# of a (TH+2, W+2, Cp) halo slab written once per step.
# --------------------------------------------------------------------------- #
def _stage2_kernel(a1m_ref, a1t_ref, a1b_ref, skip_ref, w2_ref, b2_ref,
                   sc1_ref, sh1_ref, a2_ref, stats_ref, hpad_ref,
                   *, TH, W, Cp, R):
    r = pl.program_id(1)
    sc = sc1_ref[...]                                   # (1, Cp) f32
    sh = sh1_ref[...]

    def bn1(v):                                         # (rows, W, Cp) -> f32
        return v.astype(jnp.float32) * sc + sh

    h_m = bn1(a1m_ref[0])                               # (TH, W, Cp)
    h_t = jnp.where(r == 0, 0.0, bn1(a1t_ref[0]))       # (1, W, Cp) halo / zero
    h_b = jnp.where(r == R - 1, 0.0, bn1(a1b_ref[0]))
    rows = jnp.concatenate([h_t, h_m, h_b], axis=0)     # (TH+2, W, Cp)
    zcol = jnp.zeros((TH + 2, 1, Cp), jnp.float32)
    hpad_ref[...] = jnp.concatenate([zcol, rows, zcol],
                                    axis=1).astype(hpad_ref.dtype)

    acc = jnp.zeros((TH * W, Cp), jnp.float32)
    for k in range(9):                                  # unrolled, K=Cp per tap
        dy, dx = k // 3, k % 3
        tap = hpad_ref[dy:dy + TH, dx:dx + W, :].reshape(TH * W, Cp)
        acc = acc + jnp.dot(tap, w2_ref[k], preferred_element_type=jnp.float32)
    a2 = jnp.maximum(acc + b2_ref[...], 0.0)            # (TH*W, Cp) f32
    a2_ref[0] = a2.reshape(TH, W, Cp).astype(a2_ref.dtype)

    m = TH * W
    sk = skip_ref[0].astype(jnp.float32).reshape(m, Cp)
    s_a2 = jnp.sum(a2, axis=0, keepdims=True)
    d_a2 = a2 - s_a2 / m
    m2_a2 = jnp.sum(d_a2 * d_a2, axis=0, keepdims=True)
    s_sk = jnp.sum(sk, axis=0, keepdims=True)
    d_sk = sk - s_sk / m
    c_b = jnp.sum(d_a2 * d_sk, axis=0, keepdims=True)   # centered cross moment
    stats_ref[0, 0] = jnp.concatenate([s_a2, m2_a2, c_b, s_sk], axis=0)


# --------------------------------------------------------------------------- #
# Forward wrapper.
# --------------------------------------------------------------------------- #
@functools.partial(jax.jit, static_argnames=("compute_dtype",))
def resnet_conv_forward(x_nchw, params, *, compute_dtype=jnp.bfloat16):
    dt = compute_dtype
    N, Cin, H, W = x_nchw.shape
    Cout = params["w11"].shape[0]
    # TODO(synk): for Cout far below 128 the channel padding inflates HBM
    # traffic / MXU work by Cp/Cout; packing a spatial factor into the lane dim
    # (or storing unpadded HBM intermediates) would remove that multiplier.
    Cp = _round_up(Cout, LANE)
    M = N * H * W

    vmem_limit = _vmem_limit_bytes()
    TH = _pick_tile_rows(N, H, W, Cp, jnp.dtype(dt).itemsize, vmem_limit)
    R = H // TH
    m = TH * W

    # NCHW -> NHWC, zero-pad spatially, and build the 9*Cin im2col slab in XLA
    # (fuses with the pad/transpose; lane-dense for the kernel).
    # TODO(synk): for large Cin, replace the 9x wrapper im2col with an
    # in-kernel halo-row gather (as done for conv3x3_2) to avoid 9x input DMA.
    x = jnp.transpose(x_nchw, (0, 2, 3, 1)).astype(jnp.float32)
    xp = jnp.pad(x, ((0, 0), (1, 1), (1, 1), (0, 0)))
    xcol = jnp.concatenate(
        [xp[:, dy:dy + H, dx:dx + W, :] for dy in range(3) for dx in range(3)],
        axis=-1).astype(dt)                             # (N, H, W, 9*Cin)
    K1 = 9 * Cin

    def pad_c(a):  # zero-pad the last (channel) axis Cout -> Cp
        return jnp.pad(a, [(0, 0)] * (a.ndim - 1) + [(0, Cp - Cout)])

    # conv3x3_1 weights (9*Cin, Cp); conv1x1 rides along as extra output
    # columns, its weights living in the rows of the centre tap (k == 4).
    w33_1 = jnp.transpose(params["w33_1"], (2, 3, 1, 0)).reshape(K1, Cout)
    w11 = jnp.transpose(params["w11"][:, :, 0, 0], (1, 0))            # (Cin, Cout)
    w11_tap = jnp.zeros((K1, Cout), jnp.float32).at[4 * Cin:5 * Cin].set(w11)
    wbig = jnp.concatenate([pad_c(w33_1), pad_c(w11_tap)], axis=1).astype(dt)
    bbig = jnp.concatenate([pad_c(params["b33_1"].reshape(1, Cout)),
                            pad_c(params["b11"].reshape(1, Cout))], axis=1)

    # conv3x3_2 as 9 per-tap (Cp, Cp) matrices (zero rows/cols for padding).
    w2 = jnp.transpose(params["w33_2"], (2, 3, 1, 0))                 # (3,3,Ci,Co)
    w2 = jnp.pad(w2, ((0, 0), (0, 0), (0, Cp - Cout), (0, Cp - Cout)))
    w2 = w2.reshape(9, Cp, Cp).astype(dt)
    b2 = pad_c(params["b33_2"].reshape(1, Cout))

    gamma = pad_c(params["bn_gamma"].reshape(1, Cout))
    beta = pad_c(params["bn_beta"].reshape(1, Cout))

    cparams = pltpu.CompilerParams(
        dimension_semantics=("parallel", "parallel"),
        vmem_limit_bytes=vmem_limit)
    img_block = (1, TH, W, Cp)
    img_idx = lambda n, r: (n, r, 0, 0)
    stats_spec = pl.BlockSpec((1, 1, 4, Cp), lambda n, r: (n, r, 0, 0))

    def vec_spec(c):
        return pl.BlockSpec((1, c), lambda n, r: (0, 0))

    # ---- pass 1: conv1x1 + conv3x3_1 + ReLU + partial BN moments ----------- #
    a1, skip, st1 = pl.pallas_call(
        functools.partial(_stage1_kernel, TH=TH, W=W, K=K1, Cp=Cp),
        out_shape=(jax.ShapeDtypeStruct((N, H, W, Cp), dt),
                   jax.ShapeDtypeStruct((N, H, W, Cp), dt),
                   jax.ShapeDtypeStruct((N, R, 4, Cp), jnp.float32)),
        grid=(N, R),
        in_specs=[pl.BlockSpec((1, TH, W, K1), img_idx),
                  pl.BlockSpec((K1, 2 * Cp), lambda n, r: (0, 0)),
                  vec_spec(2 * Cp)],
        out_specs=(pl.BlockSpec(img_block, img_idx),
                   pl.BlockSpec(img_block, img_idx),
                   stats_spec),
        compiler_params=cparams,
    )(xcol, wbig, bbig)

    # ---- finalise BN(a1) as a per-channel affine (O(C) glue) --------------- #
    g = gamma[0]
    b = beta[0]
    s1 = st1.reshape(N * R, 4, Cp)

    def combine(sum_b, m2_b):
        mu = jnp.sum(sum_b, axis=0) / M
        mb = sum_b / m
        var = (jnp.sum(m2_b, axis=0)
               + m * jnp.sum((mb - mu) ** 2, axis=0)) / M
        return mu, jnp.maximum(var, 0.0)

    mu_a1, var_a1 = combine(s1[:, 0], s1[:, 1])
    mu_sk, var_sk = combine(s1[:, 2], s1[:, 3])
    sc1 = g * lax.rsqrt(var_a1 + BN_EPS)
    sh1 = b - mu_a1 * sc1

    # ---- pass 2: BN(a1) -> conv3x3_2 + ReLU + moments of a2 / a2*skip ------ #
    a2, st2 = pl.pallas_call(
        functools.partial(_stage2_kernel, TH=TH, W=W, Cp=Cp, R=R),
        out_shape=(jax.ShapeDtypeStruct((N, H, W, Cp), dt),
                   jax.ShapeDtypeStruct((N, R, 4, Cp), jnp.float32)),
        grid=(N, R),
        in_specs=[pl.BlockSpec(img_block, img_idx),
                  # 1-row halo blocks (clamped at the image boundary; the
                  # kernel replaces the clamped duplicates with zeros):
                  pl.BlockSpec((1, 1, W, Cp),
                               lambda n, r: (n, jnp.maximum(r * TH - 1, 0), 0, 0)),
                  pl.BlockSpec((1, 1, W, Cp),
                               lambda n, r: (n, jnp.minimum((r + 1) * TH, H - 1), 0, 0)),
                  pl.BlockSpec(img_block, img_idx),      # skip (for cross moment)
                  pl.BlockSpec((9, Cp, Cp), lambda n, r: (0, 0, 0)),
                  vec_spec(Cp), vec_spec(Cp), vec_spec(Cp)],
        out_specs=(pl.BlockSpec(img_block, img_idx), stats_spec),
        scratch_shapes=[pltpu.VMEM((TH + 2, W + 2, Cp), dt)],
        compiler_params=cparams,
    )(a1, a1, a1, skip, w2, b2, sc1.reshape(1, Cp), sh1.reshape(1, Cp))

    # ---- finalise BN(a2) and BN(h2 + skip) analytically (variance/covariance
    #      form, Chan-combined from per-block mean-shifted moments) ----------- #
    s2 = st2.reshape(N * R, 4, Cp)
    mu_a2, var_a2 = combine(s2[:, 0], s2[:, 1])
    mb_a2 = s2[:, 0] / m
    mb_sk2 = s2[:, 3] / m
    mu_sk2 = jnp.sum(s2[:, 3], axis=0) / M
    cov = (jnp.sum(s2[:, 2], axis=0)
           + m * jnp.sum((mb_a2 - mu_a2) * (mb_sk2 - mu_sk2), axis=0)) / M

    s2c = g * lax.rsqrt(var_a2 + BN_EPS)                # h2 = s2c*a2 + t2
    t2 = b - mu_a2 * s2c
    mu3 = s2c * mu_a2 + t2 + mu_sk2                     # stats of s = h2 + skip
    var3 = jnp.maximum(s2c * s2c * var_a2 + var_sk + 2.0 * s2c * cov, 0.0)
    g3 = g * lax.rsqrt(var3 + BN_EPS)
    coef_a2 = (s2c * g3)[:Cout]                         # out = a2*ca + skip*cs + cc
    coef_sk = g3[:Cout]
    coef_c = ((t2 - mu3) * g3 + b)[:Cout]

    # ---- final fused affine: left to XLA so the channel un-padding slice and
    #      the NHWC->NCHW transpose fuse into the same elementwise pass ------- #
    out = (a2[..., :Cout].astype(jnp.float32) * coef_a2
           + skip[..., :Cout].astype(jnp.float32) * coef_sk + coef_c)
    return jnp.transpose(out, (0, 3, 1, 2))             # NHWC -> NCHW, f32


# ----------------------- parameters & pure-JAX reference -------------------- #
def init_params(key, cin, cout):
    ks = jax.random.split(key, 8)

    def conv_w(k, shape):
        fan_in = shape[1] * shape[2] * shape[3]
        bound = 1.0 / np.sqrt(fan_in)
        return jax.random.uniform(k, shape, jnp.float32, -bound, bound)

    def conv_b(k, n, fan_in):
        bound = 1.0 / np.sqrt(fan_in)
        return jax.random.uniform(k, (n,), jnp.float32, -bound, bound)

    return {
        "w11": conv_w(ks[0], (cout, cin, 1, 1)),
        "b11": conv_b(ks[1], cout, cin),
        "w33_1": conv_w(ks[2], (cout, cin, 3, 3)),
        "b33_1": conv_b(ks[3], cout, cin * 9),
        "w33_2": conv_w(ks[4], (cout, cout, 3, 3)),
        "b33_2": conv_b(ks[5], cout, cout * 9),
        "bn_gamma": 1.0 + 0.1 * jax.random.normal(ks[6], (cout,), jnp.float32),
        "bn_beta": 0.1 * jax.random.normal(ks[7], (cout,), jnp.float32),
    }


def ref_forward(x_nchw, params):
    x = jnp.transpose(x_nchw, (0, 2, 3, 1)).astype(jnp.float32)

    def conv(a, w, b):
        w_hwio = jnp.transpose(w, (2, 3, 1, 0))
        y = jax.lax.conv_general_dilated(
            a, w_hwio, (1, 1), "SAME",
            dimension_numbers=("NHWC", "HWIO", "NHWC"))
        return y + b[None, None, None, :]

    def bn(a, g, b):
        mu = jnp.mean(a, axis=(0, 1, 2), keepdims=True)
        var = jnp.mean((a - mu) ** 2, axis=(0, 1, 2), keepdims=True)
        return (a - mu) * jax.lax.rsqrt(var + BN_EPS) * g + b

    g = params["bn_gamma"][None, None, None, :]
    be = params["bn_beta"][None, None, None, :]
    skip = jax.nn.relu(conv(x, params["w11"], params["b11"]))
    h = bn(jax.nn.relu(conv(x, params["w33_1"], params["b33_1"])), g, be)
    h = bn(jax.nn.relu(conv(h, params["w33_2"], params["b33_2"])), g, be)
    out = bn(h + skip, g, be)
    return jnp.transpose(out, (0, 3, 1, 2))


if __name__ == "__main__":
    key = jax.random.PRNGKey(0)
    kx, kp = jax.random.split(key)
    N, Cin, Cout, H, W = 2, 4, 8, 16, 16
    x = jax.random.normal(kx, (N, Cin, H, W), jnp.float32)
    params = init_params(kp, Cin, Cout)

    ref = jax.block_until_ready(ref_forward(x, params))

    # Strict correctness check: full-f32 compute path.
    out32 = jax.block_until_ready(
        resnet_conv_forward(x, params, compute_dtype=jnp.float32))
    assert out32.shape == (N, Cout, H, W)
    if not np.allclose(np.asarray(out32), np.asarray(ref), atol=1e-3, rtol=1e-3):
        err = float(np.max(np.abs(np.asarray(out32) - np.asarray(ref))))
        raise AssertionError(
            f"f32 Pallas output mismatch vs JAX reference (max abs err {err:.3e})")

    # Production default: bf16 MXU operands + bf16 inter-pass activations
    # (accumulation / BN stats stay f32).  Loose tolerance: bf16 rounding of
    # the conv inputs/intermediates alone is ~1e-2; the strict check above is
    # the f32 path.
    out16 = jax.block_until_ready(
        resnet_conv_forward(x, params, compute_dtype=jnp.bfloat16))
    if not np.allclose(np.asarray(out16), np.asarray(ref), atol=1e-1, rtol=1e-1):
        err = float(np.max(np.abs(np.asarray(out16) - np.asarray(ref))))
        raise AssertionError(
            f"bf16 Pallas output mismatch vs JAX reference (max abs err {err:.3e})")

    print("KERNEL_OK")
</pallas_src>

<mosaic_0001>
module attributes {stable_mosaic.version = 11 : i64} {
  func.func @_stage1_kernel(%arg0: i32, %arg1: i32, %arg2: memref<1x4x16x36xf32, #tpu.memory_space<vmem>>, %arg3: memref<36x256xf32, #tpu.memory_space<vmem>>, %arg4: memref<1x256xf32, #tpu.memory_space<vmem>>, %arg5: memref<1x4x16x128xf32, #tpu.memory_space<vmem>>, %arg6: memref<1x4x16x128xf32, #tpu.memory_space<vmem>>, %arg7: memref<1x1x4x128xf32, #tpu.memory_space<vmem>>) attributes {dimension_semantics = [#tpu.dimension_semantics<parallel>, #tpu.dimension_semantics<parallel>], iteration_bounds = array<i64: 2, 4>, scalar_prefetch = 0 : i64, scratch_operands = 0 : i64, tpu.core_type = #tpu.core_type<tc>, window_params = [{transform_indices = @transform_0, window_bounds = array<i64: 1, 4, 16, 36>}, {pipeline_mode = #tpu.pipeline_mode<synchronous>, transform_indices = @transform_1, window_bounds = array<i64: 36, 256>}, {pipeline_mode = #tpu.pipeline_mode<synchronous>, transform_indices = @transform_2, window_bounds = array<i64: 1, 256>}, {transform_indices = @transform_3, window_bounds = array<i64: 1, 4, 16, 128>}, {transform_indices = @transform_4, window_bounds = array<i64: 1, 4, 16, 128>}, {transform_indices = @transform_5, window_bounds = array<i64: 1, 1, 4, 128>}]} {
    %c0 = arith.constant 0 : index
    %c0_0 = arith.constant 0 : index
    %c0_1 = arith.constant 0 : index
    %c0_2 = arith.constant 0 : index
    %0 = vector.load %arg2[%c0, %c0_0, %c0_1, %c0_2] : memref<1x4x16x36xf32, #tpu.memory_space<vmem>>, vector<1x4x16x36xf32>
    %1 = vector.shape_cast %0 : vector<1x4x16x36xf32> to vector<4x16x36xf32>
    %2 = vector.shape_cast %1 : vector<4x16x36xf32> to vector<64x36xf32>
    %c0_3 = arith.constant 0 : index
    %c0_4 = arith.constant 0 : index
    %3 = vector.load %arg3[%c0_3, %c0_4] : memref<36x256xf32, #tpu.memory_space<vmem>>, vector<36x256xf32>
    %cst = arith.constant dense<0.000000e+00> : vector<64x256xf32>
    %4 = tpu.matmul %2, %3, %cst {dimension_numbers = #tpu.dot_dimension_numbers<[1], [0], [0], [1], [0, 0, 1, 1], [], []>} : vector<64x36xf32>, vector<36x256xf32>, vector<64x256xf32> -> vector<64x256xf32>
    %c0_5 = arith.constant 0 : index
    %c0_6 = arith.constant 0 : index
    %5 = vector.load %arg4[%c0_5, %c0_6] : memref<1x256xf32, #tpu.memory_space<vmem>>, vector<1x256xf32>
    %6 = vector.broadcast %5 : vector<1x256xf32> to vector<64x256xf32>
    %7 = arith.addf %4, %6 : vector<64x256xf32>
    %cst_7 = arith.constant 0.000000e+00 : f32
    %8 = vector.broadcast %cst_7 : f32 to vector<64x256xf32>
    %9 = arith.maximumf %7, %8 : vector<64x256xf32>
    %10 = vector.extract_strided_slice %9 {offsets = [0, 0], sizes = [64, 128], strides = [1, 1]} : vector<64x256xf32> to vector<64x128xf32>
    %11 = vector.extract_strided_slice %9 {offsets = [0, 128], sizes = [64, 128], strides = [1, 1]} : vector<64x256xf32> to vector<64x128xf32>
    %12 = vector.shape_cast %10 : vector<64x128xf32> to vector<4x16x128xf32>
    %c0_8 = arith.constant 0 : index
    %c0_9 = arith.constant 0 : index
    %c0_10 = arith.constant 0 : index
    %c0_11 = arith.constant 0 : index
    %13 = vector.load %arg5[%c0_8, %c0_9, %c0_10, %c0_11] : memref<1x4x16x128xf32, #tpu.memory_space<vmem>>, vector<1x4x16x128xf32>
    %14 = vector.shape_cast %13 : vector<1x4x16x128xf32> to vector<4x16x128xf32>
    %15 = vector.shape_cast %12 : vector<4x16x128xf32> to vector<1x4x16x128xf32>
    tpu.vector_store %arg5[%c0_8, %c0_9, %c0_10, %c0_11], %15 {strides = array<i32>} : memref<1x4x16x128xf32, #tpu.memory_space<vmem>>, vector<1x4x16x128xf32>,
    %16 = vector.shape_cast %11 : vector<64x128xf32> to vector<4x16x128xf32>
    %c0_12 = arith.constant 0 : index
    %c0_13 = arith.constant 0 : index
    %c0_14 = arith.constant 0 : index
    %c0_15 = arith.constant 0 : index
    %17 = vector.load %arg6[%c0_12, %c0_13, %c0_14, %c0_15] : memref<1x4x16x128xf32, #tpu.memory_space<vmem>>, vector<1x4x16x128xf32>
    %18 = vector.shape_cast %17 : vector<1x4x16x128xf32> to vector<4x16x128xf32>
    %19 = vector.shape_cast %16 : vector<4x16x128xf32> to vector<1x4x16x128xf32>
    tpu.vector_store %arg6[%c0_12, %c0_13, %c0_14, %c0_15], %19 {strides = array<i32>} : memref<1x4x16x128xf32, #tpu.memory_space<vmem>>, vector<1x4x16x128xf32>,
    %cst_16 = arith.constant dense<0.000000e+00> : vector<128xf32>
    %20 = vector.multi_reduction <add>, %10, %cst_16 [0] : vector<64x128xf32> to vector<128xf32>
    %21 = vector.shape_cast %20 : vector<128xf32> to vector<1x128xf32>
    %cst_17 = arith.constant 6.400000e+01 : f32
    %22 = vector.broadcast %cst_17 : f32 to vector<1x128xf32>
    %23 = arith.divf %21, %22 : vector<1x128xf32>
    %24 = vector.broadcast %23 : vector<1x128xf32> to vector<64x128xf32>
    %25 = arith.subf %10, %24 : vector<64x128xf32>
    %26 = arith.mulf %25, %25 : vector<64x128xf32>
    %cst_18 = arith.constant dense<0.000000e+00> : vector<128xf32>
    %27 = vector.multi_reduction <add>, %26, %cst_18 [0] : vector<64x128xf32> to vector<128xf32>
    %28 = vector.shape_cast %27 : vector<128xf32> to vector<1x128xf32>
    %cst_19 = arith.constant dense<0.000000e+00> : vector<128xf32>
    %29 = vector.multi_reduction <add>, %11, %cst_19 [0] : vector<64x128xf32> to vector<128xf32>
    %30 = vector.shape_cast %29 : vector<128xf32> to vector<1x128xf32>
    %cst_20 = arith.constant 6.400000e+01 : f32
    %31 = vector.broadcast %cst_20 : f32 to vector<1x128xf32>
    %32 = arith.divf %30, %31 : vector<1x128xf32>
    %33 = vector.broadcast %32 : vector<1x128xf32> to vector<64x128xf32>
    %34 = arith.subf %11, %33 : vector<64x128xf32>
    %35 = arith.mulf %34, %34 : vector<64x128xf32>
    %cst_21 = arith.constant dense<0.000000e+00> : vector<128xf32>
    %36 = vector.multi_reduction <add>, %35, %cst_21 [0] : vector<64x128xf32> to vector<128xf32>
    %37 = vector.shape_cast %36 : vector<128xf32> to vector<1x128xf32>
    %38 = tpu.concatenate %21, %28, %30, %37 in 0 : vector<1x128xf32>, vector<1x128xf32>, vector<1x128xf32>, vector<1x128xf32> -> vector<4x128xf32>
    %c0_22 = arith.constant 0 : index
    %c0_23 = arith.constant 0 : index
    %c0_24 = arith.constant 0 : index
    %c0_25 = arith.constant 0 : index
    %39 = vector.load %arg7[%c0_22, %c0_23, %c0_24, %c0_25] : memref<1x1x4x128xf32, #tpu.memory_space<vmem>>, vector<1x1x4x128xf32>
    %40 = vector.shape_cast %39 : vector<1x1x4x128xf32> to vector<4x128xf32>
    %41 = vector.shape_cast %38 : vector<4x128xf32> to vector<1x1x4x128xf32>
    tpu.vector_store %arg7[%c0_22, %c0_23, %c0_24, %c0_25], %41 {strides = array<i32>} : memref<1x1x4x128xf32, #tpu.memory_space<vmem>>, vector<1x1x4x128xf32>,
    return
  }
  func.func @transform_0(%arg0: i32, %arg1: i32) -> (i32, i32, i32, i32) {
    %c0_i32 = arith.constant 0 : i32
    %c0_i32_0 = arith.constant 0 : i32
    %c0_i32_1 = arith.constant 0 : i32
    return %arg0, %arg1, %c0_i32, %c0_i32_0 : i32, i32, i32, i32
  }
  func.func @transform_1(%arg0: i32, %arg1: i32) -> (i32, i32) {
    %c0_i32 = arith.constant 0 : i32
    %c0_i32_0 = arith.constant 0 : i32
    %c0_i32_1 = arith.constant 0 : i32
    return %c0_i32, %c0_i32_0 : i32, i32
  }
  func.func @transform_2(%arg0: i32, %arg1: i32) -> (i32, i32) {
    %c0_i32 = arith.constant 0 : i32
    %c0_i32_0 = arith.constant 0 : i32
    %c0_i32_1 = arith.constant 0 : i32
    return %c0_i32, %c0_i32_0 : i32, i32
  }
  func.func @transform_3(%arg0: i32, %arg1: i32) -> (i32, i32, i32, i32) {
    %c0_i32 = arith.constant 0 : i32
    %c0_i32_0 = arith.constant 0 : i32
    %c0_i32_1 = arith.constant 0 : i32
    return %arg0, %arg1, %c0_i32, %c0_i32_0 : i32, i32, i32, i32
  }
  func.func @transform_4(%arg0: i32, %arg1: i32) -> (i32, i32, i32, i32) {
    %c0_i32 = arith.constant 0 : i32
    %c0_i32_0 = arith.constant 0 : i32
    %c0_i32_1 = arith.constant 0 : i32
    return %arg0, %arg1, %c0_i32, %c0_i32_0 : i32, i32, i32, i32
  }
  func.func @transform_5(%arg0: i32, %arg1: i32) -> (i32, i32, i32, i32) {
    %c0_i32 = arith.constant 0 : i32
    %c0_i32_0 = arith.constant 0 : i32
    %c0_i32_1 = arith.constant 0 : i32
    return %arg0, %arg1, %c0_i32, %c0_i32_0 : i32, i32, i32, i32
  }
}

module attributes {stable_mosaic.version = 11 : i64} {
  func.func @_stage2_kernel(%arg0: i32, %arg1: i32, %arg2: memref<1x4x16x128xf32, #tpu.memory_space<vmem>>, %arg3: memref<1x1x16x128xf32, #tpu.memory_space<vmem>>, %arg4: memref<1x1x16x128xf32, #tpu.memory_space<vmem>>, %arg5: memref<1x4x16x128xf32, #tpu.memory_space<vmem>>, %arg6: memref<9x128x128xf32, #tpu.memory_space<vmem>>, %arg7: memref<1x128xf32, #tpu.memory_space<vmem>>, %arg8: memref<1x128xf32, #tpu.memory_space<vmem>>, %arg9: memref<1x128xf32, #tpu.memory_space<vmem>>, %arg10: memref<1x4x16x128xf32, #tpu.memory_space<vmem>>, %arg11: memref<1x1x4x128xf32, #tpu.memory_space<vmem>>, %arg12: memref<6x18x128xf32, #tpu.memory_space<vmem>>) attributes {dimension_semantics = [#tpu.dimension_semantics<parallel>, #tpu.dimension_semantics<parallel>], iteration_bounds = array<i64: 2, 4>, scalar_prefetch = 0 : i64, scratch_operands = 1 : i64, tpu.core_type = #tpu.core_type<tc>, window_params = [{transform_indices = @transform_0, window_bounds = array<i64: 1, 4, 16, 128>}, {transform_indices = @transform_1, window_bounds = array<i64: 1, 1, 16, 128>}, {transform_indices = @transform_2, window_bounds = array<i64: 1, 1, 16, 128>}, {transform_indices = @transform_3, window_bounds = array<i64: 1, 4, 16, 128>}, {pipeline_mode = #tpu.pipeline_mode<synchronous>, transform_indices = @transform_4, window_bounds = array<i64: 9, 128, 128>}, {pipeline_mode = #tpu.pipeline_mode<synchronous>, transform_indices = @transform_5, window_bounds = array<i64: 1, 128>}, {pipeline_mode = #tpu.pipeline_mode<synchronous>, transform_indices = @transform_6, window_bounds = array<i64: 1, 128>}, {pipeline_mode = #tpu.pipeline_mode<synchronous>, transform_indices = @transform_7, window_bounds = array<i64: 1, 128>}, {transform_indices = @transform_8, window_bounds = array<i64: 1, 4, 16, 128>}, {transform_indices = @transform_9, window_bounds = array<i64: 1, 1, 4, 128>}]} {
    %c0 = arith.constant 0 : index
    %c0_0 = arith.constant 0 : index
    %0 = vector.load %arg8[%c0, %c0_0] : memref<1x128xf32, #tpu.memory_space<vmem>>, vector<1x128xf32>
    %c0_1 = arith.constant 0 : index
    %c0_2 = arith.constant 0 : index
    %1 = vector.load %arg9[%c0_1, %c0_2] : memref<1x128xf32, #tpu.memory_space<vmem>>, vector<1x128xf32>
    %c0_3 = arith.constant 0 : index
    %c0_4 = arith.constant 0 : index
    %c0_5 = arith.constant 0 : index
    %c0_6 = arith.constant 0 : index
    %2 = vector.load %arg2[%c0_3, %c0_4, %c0_5, %c0_6] : memref<1x4x16x128xf32, #tpu.memory_space<vmem>>, vector<1x4x16x128xf32>
    %3 = vector.shape_cast %2 : vector<1x4x16x128xf32> to vector<4x16x128xf32>
    %4 = vector.shape_cast %0 : vector<1x128xf32> to vector<1x1x128xf32>
    %5 = vector.broadcast %4 : vector<1x1x128xf32> to vector<4x16x128xf32>
    %6 = arith.mulf %3, %5 : vector<4x16x128xf32>
    %7 = vector.shape_cast %1 : vector<1x128xf32> to vector<1x1x128xf32>
    %8 = vector.broadcast %7 : vector<1x1x128xf32> to vector<4x16x128xf32>
    %9 = arith.addf %6, %8 : vector<4x16x128xf32>
    %c0_i32 = arith.constant 0 : i32
    %10 = arith.cmpi eq, %arg1, %c0_i32 : i32
    %c0_7 = arith.constant 0 : index
    %c0_8 = arith.constant 0 : index
    %c0_9 = arith.constant 0 : index
    %c0_10 = arith.constant 0 : index
    %11 = vector.load %arg3[%c0_7, %c0_8, %c0_9, %c0_10] : memref<1x1x16x128xf32, #tpu.memory_space<vmem>>, vector<1x1x16x128xf32>
    %12 = vector.shape_cast %11 : vector<1x1x16x128xf32> to vector<1x16x128xf32>
    %13 = vector.shape_cast %0 : vector<1x128xf32> to vector<1x1x128xf32>
    %14 = vector.broadcast %13 : vector<1x1x128xf32> to vector<1x16x128xf32>
    %15 = arith.mulf %12, %14 : vector<1x16x128xf32>
    %16 = vector.shape_cast %1 : vector<1x128xf32> to vector<1x1x128xf32>
    %17 = vector.broadcast %16 : vector<1x1x128xf32> to vector<1x16x128xf32>
    %18 = arith.addf %15, %17 : vector<1x16x128xf32>
    %cst = arith.constant 0.000000e+00 : f32
    %19 = vector.broadcast %cst : f32 to vector<1x16x128xf32>
    %20 = arith.select %10, %19, %18 : vector<1x16x128xf32>
    %c3_i32 = arith.constant 3 : i32
    %21 = arith.cmpi eq, %arg1, %c3_i32 : i32
    %c0_11 = arith.constant 0 : index
    %c0_12 = arith.constant 0 : index
    %c0_13 = arith.constant 0 : index
    %c0_14 = arith.constant 0 : index
    %22 = vector.load %arg4[%c0_11, %c0_12, %c0_13, %c0_14] : memref<1x1x16x128xf32, #tpu.memory_space<vmem>>, vector<1x1x16x128xf32>
    %23 = vector.shape_cast %22 : vector<1x1x16x128xf32> to vector<1x16x128xf32>
    %24 = vector.shape_cast %0 : vector<1x128xf32> to vector<1x1x128xf32>
    %25 = vector.broadcast %24 : vector<1x1x128xf32> to vector<1x16x128xf32>
    %26 = arith.mulf %23, %25 : vector<1x16x128xf32>
    %27 = vector.shape_cast %1 : vector<1x128xf32> to vector<1x1x128xf32>
    %28 = vector.broadcast %27 : vector<1x1x128xf32> to vector<1x16x128xf32>
    %29 = arith.addf %26, %28 : vector<1x16x128xf32>
    %cst_15 = arith.constant 0.000000e+00 : f32
    %30 = vector.broadcast %cst_15 : f32 to vector<1x16x128xf32>
    %31 = arith.select %21, %30, %29 : vector<1x16x128xf32>
    %32 = tpu.concatenate %20, %9, %31 in 0 : vector<1x16x128xf32>, vector<4x16x128xf32>, vector<1x16x128xf32> -> vector<6x16x128xf32>
    %cst_16 = arith.constant 0.000000e+00 : f32
    %33 = vector.broadcast %cst_16 : f32 to vector<6x1x128xf32>
    %34 = tpu.concatenate %33, %32, %33 in 1 : vector<6x1x128xf32>, vector<6x16x128xf32>, vector<6x1x128xf32> -> vector<6x18x128xf32>
    %c0_17 = arith.constant 0 : index
    %c0_18 = arith.constant 0 : index
    %c0_19 = arith.constant 0 : index
    %35 = vector.load %arg12[%c0_17, %c0_18, %c0_19] : memref<6x18x128xf32, #tpu.memory_space<vmem>>, vector<6x18x128xf32>
    tpu.vector_store %arg12[%c0_17, %c0_18, %c0_19], %34 {strides = array<i32>} : memref<6x18x128xf32, #tpu.memory_space<vmem>>, vector<6x18x128xf32>,
    %cst_20 = arith.constant 0.000000e+00 : f32
    %36 = vector.broadcast %cst_20 : f32 to vector<64x128xf32>
    %c0_21 = arith.constant 0 : index
    %c0_22 = arith.constant 0 : index
    %c0_23 = arith.constant 0 : index
    %37 = vector.load %arg12[%c0_21, %c0_22, %c0_23] : memref<6x18x128xf32, #tpu.memory_space<vmem>>, vector<4x16x128xf32>
    %38 = vector.shape_cast %37 : vector<4x16x128xf32> to vector<64x128xf32>
    %c0_24 = arith.constant 0 : index
    %c0_25 = arith.constant 0 : index
    %c0_26 = arith.constant 0 : index
    %39 = vector.load %arg6[%c0_24, %c0_25, %c0_26] : memref<9x128x128xf32, #tpu.memory_space<vmem>>, vector<1x128x128xf32>
    %40 = vector.shape_cast %39 : vector<1x128x128xf32> to vector<128x128xf32>
    %cst_27 = arith.constant dense<0.000000e+00> : vector<64x128xf32>
    %41 = tpu.matmul %38, %40, %cst_27 {dimension_numbers = #tpu.dot_dimension_numbers<[1], [0], [0], [1], [0, 0, 1, 1], [], []>} : vector<64x128xf32>, vector<128x128xf32>, vector<64x128xf32> -> vector<64x128xf32>
    %42 = arith.addf %36, %41 : vector<64x128xf32>
    %c0_28 = arith.constant 0 : index
    %c1 = arith.constant 1 : index
    %c0_29 = arith.constant 0 : index
    %43 = vector.load %arg12[%c0_28, %c1, %c0_29] : memref<6x18x128xf32, #tpu.memory_space<vmem>>, vector<4x16x128xf32>
    %44 = vector.shape_cast %43 : vector<4x16x128xf32> to vector<64x128xf32>
    %c1_30 = arith.constant 1 : index
    %c0_31 = arith.constant 0 : index
    %c0_32 = arith.constant 0 : index
    %45 = vector.load %arg6[%c1_30, %c0_31, %c0_32] : memref<9x128x128xf32, #tpu.memory_space<vmem>>, vector<1x128x128xf32>
    %46 = vector.shape_cast %45 : vector<1x128x128xf32> to vector<128x128xf32>
    %cst_33 = arith.constant dense<0.000000e+00> : vector<64x128xf32>
    %47 = tpu.matmul %44, %46, %cst_33 {dimension_numbers = #tpu.dot_dimension_numbers<[1], [0], [0], [1], [0, 0, 1, 1], [], []>} : vector<64x128xf32>, vector<128x128xf32>, vector<64x128xf32> -> vector<64x128xf32>
    %48 = arith.addf %42, %47 : vector<64x128xf32>
    %c0_34 = arith.constant 0 : index
    %c2 = arith.constant 2 : index
    %c0_35 = arith.constant 0 : index
    %49 = vector.load %arg12[%c0_34, %c2, %c0_35] : memref<6x18x128xf32, #tpu.memory_space<vmem>>, vector<4x16x128xf32>
    %50 = vector.shape_cast %49 : vector<4x16x128xf32> to vector<64x128xf32>
    %c2_36 = arith.constant 2 : index
    %c0_37 = arith.constant 0 : index
    %c0_38 = arith.constant 0 : index
    %51 = vector.load %arg6[%c2_36, %c0_37, %c0_38] : memref<9x128x128xf32, #tpu.memory_space<vmem>>, vector<1x128x128xf32>
    %52 = vector.shape_cast %51 : vector<1x128x128xf32> to vector<128x128xf32>
    %cst_39 = arith.constant dense<0.000000e+00> : vector<64x128xf32>
    %53 = tpu.matmul %50, %52, %cst_39 {dimension_numbers = #tpu.dot_dimension_numbers<[1], [0], [0], [1], [0, 0, 1, 1], [], []>} : vector<64x128xf32>, vector<128x128xf32>, vector<64x128xf32> -> vector<64x128xf32>
    %54 = arith.addf %48, %53 : vector<64x128xf32>
    %c1_40 = arith.constant 1 : index
    %c0_41 = arith.constant 0 : index
    %c0_42 = arith.constant 0 : index
    %55 = vector.load %arg12[%c1_40, %c0_41, %c0_42] : memref<6x18x128xf32, #tpu.memory_space<vmem>>, vector<4x16x128xf32>
    %56 = vector.shape_cast %55 : vector<4x16x128xf32> to vector<64x128xf32>
    %c3 = arith.constant 3 : index
    %c0_43 = arith.constant 0 : index
    %c0_44 = arith.constant 0 : index
    %57 = vector.load %arg6[%c3, %c0_43, %c0_44] : memref<9x128x128xf32, #tpu.memory_space<vmem>>, vector<1x128x128xf32>
    %58 = vector.shape_cast %57 : vector<1x128x128xf32> to vector<128x128xf32>
    %cst_45 = arith.constant dense<0.000000e+00> : vector<64x128xf32>
    %59 = tpu.matmul %56, %58, %cst_45 {dimension_numbers = #tpu.dot_dimension_numbers<[1], [0], [0], [1], [0, 0, 1, 1], [], []>} : vector<64x128xf32>, vector<128x128xf32>, vector<64x128xf32> -> vector<64x128xf32>
    %60 = arith.addf %54, %59 : vector<64x128xf32>
    %c1_46 = arith.constant 1 : index
    %c1_47 = arith.constant 1 : index
    %c0_48 = arith.constant 0 : index
    %61 = vector.load %arg12[%c1_46, %c1_47, %c0_48] : memref<6x18x128xf32, #tpu.memory_space<vmem>>, vector<4x16x128xf32>
    %62 = vector.shape_cast %61 : vector<4x16x128xf32> to vector<64x128xf32>
    %c4 = arith.constant 4 : index
    %c0_49 = arith.constant 0 : index
    %c0_50 = arith.constant 0 : index
    %63 = vector.load %arg6[%c4, %c0_49, %c0_50] : memref<9x128x128xf32, #tpu.memory_space<vmem>>, vector<1x128x128xf32>
    %64 = vector.shape_cast %63 : vector<1x128x128xf32> to vector<128x128xf32>
    %cst_51 = arith.constant dense<0.000000e+00> : vector<64x128xf32>
    %65 = tpu.matmul %62, %64, %cst_51 {dimension_numbers = #tpu.dot_dimension_numbers<[1], [0], [0], [1], [0, 0, 1, 1], [], []>} : vector<64x128xf32>, vector<128x128xf32>, vector<64x128xf32> -> vector<64x128xf32>
    %66 = arith.addf %60, %65 : vector<64x128xf32>
    %c1_52 = arith.constant 1 : index
    %c2_53 = arith.constant 2 : index
    %c0_54 = arith.constant 0 : index
    %67 = vector.load %arg12[%c1_52, %c2_53, %c0_54] : memref<6x18x128xf32, #tpu.memory_space<vmem>>, vector<4x16x128xf32>
    %68 = vector.shape_cast %67 : vector<4x16x128xf32> to vector<64x128xf32>
    %c5 = arith.constant 5 : index
    %c0_55 = arith.constant 0 : index
    %c0_56 = arith.constant 0 : index
    %69 = vector.load %arg6[%c5, %c0_55, %c0_56] : memref<9x128x128xf32, #tpu.memory_space<vmem>>, vector<1x128x128xf32>
    %70 = vector.shape_cast %69 : vector<1x128x128xf32> to vector<128x128xf32>
    %cst_57 = arith.constant dense<0.000000e+00> : vector<64x128xf32>
    %71 = tpu.matmul %68, %70, %cst_57 {dimension_numbers = #tpu.dot_dimension_numbers<[1], [0], [0], [1], [0, 0, 1, 1], [], []>} : vector<64x128xf32>, vector<128x128xf32>, vector<64x128xf32> -> vector<64x128xf32>
    %72 = arith.addf %66, %71 : vector<64x128xf32>
    %c2_58 = arith.constant 2 : index
    %c0_59 = arith.constant 0 : index
    %c0_60 = arith.constant 0 : index
    %73 = vector.load %arg12[%c2_58, %c0_59, %c0_60] : memref<6x18x128xf32, #tpu.memory_space<vmem>>, vector<4x16x128xf32>
    %74 = vector.shape_cast %73 : vector<4x16x128xf32> to vector<64x128xf32>
    %c6 = arith.constant 6 : index
    %c0_61 = arith.constant 0 : index
    %c0_62 = arith.constant 0 : index
    %75 = vector.load %arg6[%c6, %c0_61, %c0_62] : memref<9x128x128xf32, #tpu.memory_space<vmem>>, vector<1x128x128xf32>
    %76 = vector.shape_cast %75 : vector<1x128x128xf32> to vector<128x128xf32>
    %cst_63 = arith.constant dense<0.000000e+00> : vector<64x128xf32>
    %77 = tpu.matmul %74, %76, %cst_63 {dimension_numbers = #tpu.dot_dimension_numbers<[1], [0], [0], [1], [0, 0, 1, 1], [], []>} : vector<64x128xf32>, vector<128x128xf32>, vector<64x128xf32> -> vector<64x128xf32>
    %78 = arith.addf %72, %77 : vector<64x128xf32>
    %c2_64 = arith.constant 2 : index
    %c1_65 = arith.constant 1 : index
    %c0_66 = arith.constant 0 : index
    %79 = vector.load %arg12[%c2_64, %c1_65, %c0_66] : memref<6x18x128xf32, #tpu.memory_space<vmem>>, vector<4x16x128xf32>
    %80 = vector.shape_cast %79 : vector<4x16x128xf32> to vector<64x128xf32>
    %c7 = arith.constant 7 : index
    %c0_67 = arith.constant 0 : index
    %c0_68 = arith.constant 0 : index
    %81 = vector.load %arg6[%c7, %c0_67, %c0_68] : memref<9x128x128xf32, #tpu.memory_space<vmem>>, vector<1x128x128xf32>
    %82 = vector.shape_cast %81 : vector<1x128x128xf32> to vector<128x128xf32>
    %cst_69 = arith.constant dense<0.000000e+00> : vector<64x128xf32>
    %83 = tpu.matmul %80, %82, %cst_69 {dimension_numbers = #tpu.dot_dimension_numbers<[1], [0], [0], [1], [0, 0, 1, 1], [], []>} : vector<64x128xf32>, vector<128x128xf32>, vector<64x128xf32> -> vector<64x128xf32>
    %84 = arith.addf %78, %83 : vector<64x128xf32>
    %c2_70 = arith.constant 2 : index
    %c2_71 = arith.constant 2 : index
    %c0_72 = arith.constant 0 : index
    %85 = vector.load %arg12[%c2_70, %c2_71, %c0_72] : memref<6x18x128xf32, #tpu.memory_space<vmem>>, vector<4x16x128xf32>
    %86 = vector.shape_cast %85 : vector<4x16x128xf32> to vector<64x128xf32>
    %c8 = arith.constant 8 : index
    %c0_73 = arith.constant 0 : index
    %c0_74 = arith.constant 0 : index
    %87 = vector.load %arg6[%c8, %c0_73, %c0_74] : memref<9x128x128xf32, #tpu.memory_space<vmem>>, vector<1x128x128xf32>
    %88 = vector.shape_cast %87 : vector<1x128x128xf32> to vector<128x128xf32>
    %cst_75 = arith.constant dense<0.000000e+00> : vector<64x128xf32>
    %89 = tpu.matmul %86, %88, %cst_75 {dimension_numbers = #tpu.dot_dimension_numbers<[1], [0], [0], [1], [0, 0, 1, 1], [], []>} : vector<64x128xf32>, vector<128x128xf32>, vector<64x128xf32> -> vector<64x128xf32>
    %90 = arith.addf %84, %89 : vector<64x128xf32>
    %c0_76 = arith.constant 0 : index
    %c0_77 = arith.constant 0 : index
    %91 = vector.load %arg7[%c0_76, %c0_77] : memref<1x128xf32, #tpu.memory_space<vmem>>, vector<1x128xf32>
    %92 = vector.broadcast %91 : vector<1x128xf32> to vector<64x128xf32>
    %93 = arith.addf %90, %92 : vector<64x128xf32>
    %cst_78 = arith.constant 0.000000e+00 : f32
    %94 = vector.broadcast %cst_78 : f32 to vector<64x128xf32>
    %95 = arith.maximumf %93, %94 : vector<64x128xf32>
    %96 = vector.shape_cast %95 : vector<64x128xf32> to vector<4x16x128xf32>
    %c0_79 = arith.constant 0 : index
    %c0_80 = arith.constant 0 : index
    %c0_81 = arith.constant 0 : index
    %c0_82 = arith.constant 0 : index
    %97 = vector.load %arg10[%c0_79, %c0_80, %c0_81, %c0_82] : memref<1x4x16x128xf32, #tpu.memory_space<vmem>>, vector<1x4x16x128xf32>
    %98 = vector.shape_cast %97 : vector<1x4x16x128xf32> to vector<4x16x128xf32>
    %99 = vector.shape_cast %96 : vector<4x16x128xf32> to vector<1x4x16x128xf32>
    tpu.vector_store %arg10[%c0_79, %c0_80, %c0_81, %c0_82], %99 {strides = array<i32>} : memref<1x4x16x128xf32, #tpu.memory_space<vmem>>, vector<1x4x16x128xf32>,
    %c0_83 = arith.constant 0 : index
    %c0_84 = arith.constant 0 : index
    %c0_85 = arith.constant 0 : index
    %c0_86 = arith.constant 0 : index
    %100 = vector.load %arg5[%c0_83, %c0_84, %c0_85, %c0_86] : memref<1x4x16x128xf32, #tpu.memory_space<vmem>>, vector<1x4x16x128xf32>
    %101 = vector.shape_cast %100 : vector<1x4x16x128xf32> to vector<4x16x128xf32>
    %102 = vector.shape_cast %101 : vector<4x16x128xf32> to vector<64x128xf32>
    %cst_87 = arith.constant dense<0.000000e+00> : vector<128xf32>
    %103 = vector.multi_reduction <add>, %95, %cst_87 [0] : vector<64x128xf32> to vector<128xf32>
    %104 = vector.shape_cast %103 : vector<128xf32> to vector<1x128xf32>
    %cst_88 = arith.constant 6.400000e+01 : f32
    %105 = vector.broadcast %cst_88 : f32 to vector<1x128xf32>
    %106 = arith.divf %104, %105 : vector<1x128xf32>
    %107 = vector.broadcast %106 : vector<1x128xf32> to vector<64x128xf32>
    %108 = arith.subf %95, %107 : vector<64x128xf32>
    %109 = arith.mulf %108, %108 : vector<64x128xf32>
    %cst_89 = arith.constant dense<0.000000e+00> : vector<128xf32>
    %110 = vector.multi_reduction <add>, %109, %cst_89 [0] : vector<64x128xf32> to vector<128xf32>
    %111 = vector.shape_cast %110 : vector<128xf32> to vector<1x128xf32>
    %cst_90 = arith.constant dense<0.000000e+00> : vector<128xf32>
    %112 = vector.multi_reduction <add>, %102, %cst_90 [0] : vector<64x128xf32> to vector<128xf32>
    %113 = vector.shape_cast %112 : vector<128xf32> to vector<1x128xf32>
    %cst_91 = arith.constant 6.400000e+01 : f32
    %114 = vector.broadcast %cst_91 : f32 to vector<1x128xf32>
    %115 = arith.divf %113, %114 : vector<1x128xf32>
    %116 = vector.broadcast %115 : vector<1x128xf32> to vector<64x128xf32>
    %117 = arith.subf %102, %116 : vector<64x128xf32>
    %118 = arith.mulf %108, %117 : vector<64x128xf32>
    %cst_92 = arith.constant dense<0.000000e+00> : vector<128xf32>
    %119 = vector.multi_reduction <add>, %118, %cst_92 [0] : vector<64x128xf32> to vector<128xf32>
    %120 = vector.shape_cast %119 : vector<128xf32> to vector<1x128xf32>
    %121 = tpu.concatenate %104, %111, %120, %113 in 0 : vector<1x128xf32>, vector<1x128xf32>, vector<1x128xf32>, vector<1x128xf32> -> vector<4x128xf32>
    %c0_93 = arith.constant 0 : index
    %c0_94 = arith.constant 0 : index
    %c0_95 = arith.constant 0 : index
    %c0_96 = arith.constant 0 : index
    %122 = vector.load %arg11[%c0_93, %c0_94, %c0_95, %c0_96] : memref<1x1x4x128xf32, #tpu.memory_space<vmem>>, vector<1x1x4x128xf32>
    %123 = vector.shape_cast %122 : vector<1x1x4x128xf32> to vector<4x128xf32>
    %124 = vector.shape_cast %121 : vector<4x128xf32> to vector<1x1x4x128xf32>
    tpu.vector_store %arg11[%c0_93, %c0_94, %c0_95, %c0_96], %124 {strides = array<i32>} : memref<1x1x4x128xf32, #tpu.memory_space<vmem>>, vector<1x1x4x128xf32>,
    return
  }
  func.func @transform_0(%arg0: i32, %arg1: i32) -> (i32, i32, i32, i32) {
    %c0_i32 = arith.constant 0 : i32
    %c0_i32_0 = arith.constant 0 : i32
    %c0_i32_1 = arith.constant 0 : i32
    return %arg0, %arg1, %c0_i32, %c0_i32_0 : i32, i32, i32, i32
  }
  func.func @transform_1(%arg0: i32, %arg1: i32) -> (i32, i32, i32, i32) {
    %c4_i32 = arith.constant 4 : i32
    %0 = arith.muli %arg1, %c4_i32 : i32
    %c1_i32 = arith.constant 1 : i32
    %1 = arith.subi %0, %c1_i32 : i32
    %c0_i32 = arith.constant 0 : i32
    %2 = arith.maxsi %1, %c0_i32 : i32
    %c0_i32_0 = arith.constant 0 : i32
    %c0_i32_1 = arith.constant 0 : i32
    %c0_i32_2 = arith.constant 0 : i32
    return %arg0, %2, %c0_i32_0, %c0_i32_1 : i32, i32, i32, i32
  }
  func.func @transform_2(%arg0: i32, %arg1: i32) -> (i32, i32, i32, i32) {
    %c1_i32 = arith.constant 1 : i32
    %0 = arith.addi %arg1, %c1_i32 : i32
    %c4_i32 = arith.constant 4 : i32
    %1 = arith.muli %0, %c4_i32 : i32
    %c15_i32 = arith.constant 15 : i32
    %2 = arith.minsi %1, %c15_i32 : i32
    %c0_i32 = arith.constant 0 : i32
    %c0_i32_0 = arith.constant 0 : i32
    %c0_i32_1 = arith.constant 0 : i32
    return %arg0, %2, %c0_i32, %c0_i32_0 : i32, i32, i32, i32
  }
  func.func @transform_3(%arg0: i32, %arg1: i32) -> (i32, i32, i32, i32) {
    %c0_i32 = arith.constant 0 : i32
    %c0_i32_0 = arith.constant 0 : i32
    %c0_i32_1 = arith.constant 0 : i32
    return %arg0, %arg1, %c0_i32, %c0_i32_0 : i32, i32, i32, i32
  }
  func.func @transform_4(%arg0: i32, %arg1: i32) -> (i32, i32, i32) {
    %c0_i32 = arith.constant 0 : i32
    %c0_i32_0 = arith.constant 0 : i32
    %c0_i32_1 = arith.constant 0 : i32
    %c0_i32_2 = arith.constant 0 : i32
    return %c0_i32, %c0_i32_0, %c0_i32_1 : i32, i32, i32
  }
  func.func @transform_5(%arg0: i32, %arg1: i32) -> (i32, i32) {
    %c0_i32 = arith.constant 0 : i32
    %c0_i32_0 = arith.constant 0 : i32
    %c0_i32_1 = arith.constant 0 : i32
    return %c0_i32, %c0_i32_0 : i32, i32
  }
  func.func @transform_6(%arg0: i32, %arg1: i32) -> (i32, i32) {
    %c0_i32 = arith.constant 0 : i32
    %c0_i32_0 = arith.constant 0 : i32
    %c0_i32_1 = arith.constant 0 : i32
    return %c0_i32, %c0_i32_0 : i32, i32
  }
  func.func @transform_7(%arg0: i32, %arg1: i32) -> (i32, i32) {
    %c0_i32 = arith.constant 0 : i32
    %c0_i32_0 = arith.constant 0 : i32
    %c0_i32_1 = arith.constant 0 : i32
    return %c0_i32, %c0_i32_0 : i32, i32
  }
  func.func @transform_8(%arg0: i32, %arg1: i32) -> (i32, i32, i32, i32) {
    %c0_i32 = arith.constant 0 : i32
    %c0_i32_0 = arith.constant 0 : i32
    %c0_i32_1 = arith.constant 0 : i32
    return %arg0, %arg1, %c0_i32, %c0_i32_0 : i32, i32, i32, i32
  }
  func.func @transform_9(%arg0: i32, %arg1: i32) -> (i32, i32, i32, i32) {
    %c0_i32 = arith.constant 0 : i32
    %c0_i32_0 = arith.constant 0 : i32
    %c0_i32_1 = arith.constant 0 : i32
    return %arg0, %arg1, %c0_i32, %c0_i32_0 : i32, i32, i32, i32
  }
}

</mosaic_0001>

<llo_original>
// kernel: resnet_conv_forward.2
$region0: #{resnet_conv_forward.2}
  #allocation0 [shape = 'u32[]', space=smem, size = 0x4, offset = 0x4, fixed_abs, tag = 'smem constant byte address 0x4 - core index']
  #allocation1 [shape = 'u32[144,128]{1,0:T(1,128)}', space=vmem, size = 0x12000, scoped, tag = 'internal scratch']
  %s0 = inlined_call_operand.vmem [shape: f32[2,16,16,36], index: 0, kind: input, shape index: {}]
  %s1 = inlined_call_operand.vmem [shape: f32[36,256], index: 1, kind: input, shape index: {}]
  %s2 = inlined_call_operand.vmem [shape: f32[1,256], index: 2, kind: input, shape index: {}]
  %s3 = inlined_call_operand.vmem [shape: f32[2,16,16,128], index: 3, kind: output, shape index: {0}]
  %s4 = inlined_call_operand.vmem [shape: f32[2,16,16,128], index: 4, kind: output, shape index: {1}]
  %s5 = inlined_call_operand.vmem [shape: f32[2,4,4,128], index: 5, kind: output, shape index: {2}]
  %6 = xla_tuple %s3, %s4, %s5
  %s7 = sld [smem:[#allocation0]]
  $region61: #{resnet_conv_forward.2} parent=0
    _
  %s9 = ssub.s32 1, %s7
  %s10 = scalar_select 0, %s9, %s7
  loop: start=0, step=1, limit=10
  $region2: #{resnet_conv_forward.2} parent=0 // loop_pre_header
    _
  $region3: #{resnet_conv_forward.2} parent=0 // loop_header
    %s12 = sphi 0, %s16
    %p13 = scmp.ge.s32.totalorder %s12, 10
    %s19 = sphi 0, %s31
    %s20 = sphi 0, %s27
    %s21 = sphi 0, %s19
    %s22 = sphi 0, %s20
    %s23 = sphi 0, %s21
    %s24 = sphi 0, %s22
    %s36 = sphi 0, %s38
    %s39 = sphi 0, %s36
    %s40 = sphi 0, %s39
    %s56 = sphi 0, %s40
    %s60 = sphi 0, %s60
    %s62 = sphi 0, %s60
    %s63 = sphi 0, %s62
    %s77 = sphi 0, %s63
    %s81 = sphi 0, %s81
    %s83 = sphi 0, %s81
    %s84 = sphi 0, %s83
    %s98 = sphi 0, %s84
    %s106 = sphi 0, %s108
    %s109 = sphi 0, %s106
    %s110 = sphi 0, %s109
    %s126 = sphi 0, %s110
    %s134 = sphi 0, %s136
    %s137 = sphi 0, %s134
    %s138 = sphi 0, %s137
    %s154 = sphi 0, %s138
    %s162 = sphi 0, %s164
    %s165 = sphi 0, %s162
    %s166 = sphi 0, %s165
    %s182 = sphi 0, %s166
  $region4: #{resnet_conv_forward.2} parent=0 // loop_header_branch
    %15 = sbr.rel (%p13) target = $region8
  $region5: #{resnet_conv_forward.2} parent=0 // loop_body
    %s17 = ssub.s32 %s12, 1
    %s18 = ssub.s32 %s12, 2
    %s25 = sadd.s32 1, %s20
    %p26 = scmp.ge.s32.totalorder %s25, 4
    %s27 = scalar_select %p26, 0, %s25
    %s28 = sadd.s32 1, %s19
    %s29 = scalar_select %p26, %s28, %s19
    %p30 = scmp.ge.s32.totalorder %s29, 2
    %s31 = scalar_select %p30, 0, %s29
    %s32 = ssub.s32 %s19, %s31
    %s33 = ssub.s32 %s20, %s27
    %s34 = sor.u32 %s32, %s33
    %p35 = scmp.eq.s32.totalorder %s34, 0
    %s37 = sadd.s32 %s36, 1
    %s38 = scalar_select %p35, %s36, %s37
    %p41 = pneg %p35
    %p42 = scmp.eq.s32.totalorder %s12, 7
    %p43 = por %p41, %p42
    %p44 = scmp.ne.s32.totalorder %s36, %s39
    %p45 = scmp.eq.s32.totalorder %s12, 0
    %p46 = por %p44, %p45
    %p47 = scmp.ne.s32.totalorder %s36, %s39
    %p48 = scmp.eq.s32.totalorder %s17, 7
    %p49 = por %p47, %p48
    %p50 = scmp.ne.s32.totalorder %s39, %s40
    %p51 = scmp.eq.s32.totalorder %s17, 0
    %p52 = por %p50, %p51
    %p53 = scmp.ne.s32.totalorder %s39, %s40
    %p54 = scmp.eq.s32.totalorder %s18, 7
    %p55 = por %p53, %p54
    %p57 = scmp.ne.s32.totalorder %s40, %s56
    %p58 = scmp.eq.s32.totalorder %s18, 0
    %p59 = por %p57, %p58
    %s61 = sadd.s32 %s60, 1
    %p64 = scmp.eq.s32.totalorder %s12, 7
    %p65 = scmp.ne.s32.totalorder %s60, %s62
    %p66 = scmp.eq.s32.totalorder %s12, 0
    %p67 = por %p65, %p66
    %p68 = scmp.ne.s32.totalorder %s60, %s62
    %p69 = scmp.eq.s32.totalorder %s17, 7
    %p70 = por %p68, %p69
    %p71 = scmp.ne.s32.totalorder %s62, %s63
    %p72 = scmp.eq.s32.totalorder %s17, 0
    %p73 = por %p71, %p72
    %p74 = scmp.ne.s32.totalorder %s62, %s63
    %p75 = scmp.eq.s32.totalorder %s18, 7
    %p76 = por %p74, %p75
    %p78 = scmp.ne.s32.totalorder %s63, %s77
    %p79 = scmp.eq.s32.totalorder %s18, 0
    %p80 = por %p78, %p79
    %s82 = sadd.s32 %s81, 1
    %p85 = scmp.eq.s32.totalorder %s12, 7
    %p86 = scmp.ne.s32.totalorder %s81, %s83
    %p87 = scmp.eq.s32.totalorder %s12, 0
    %p88 = por %p86, %p87
    %p89 = scmp.ne.s32.totalorder %s81, %s83
    %p90 = scmp.eq.s32.totalorder %s17, 7
    %p91 = por %p89, %p90
    %p92 = scmp.ne.s32.totalorder %s83, %s84
    %p93 = scmp.eq.s32.totalorder %s17, 0
    %p94 = por %p92, %p93
    %p95 = scmp.ne.s32.totalorder %s83, %s84
    %p96 = scmp.eq.s32.totalorder %s18, 7
    %p97 = por %p95, %p96
    %p99 = scmp.ne.s32.totalorder %s84, %s98
    %p100 = scmp.eq.s32.totalorder %s18, 0
    %p101 = por %p99, %p100
    %s102 = ssub.s32 %s19, %s31
    %s103 = ssub.s32 %s20, %s27
    %s104 = sor.u32 %s102, %s103
    %p105 = scmp.eq.s32.totalorder %s104, 0
    %s107 = sadd.s32 %s106, 1
    %s108 = scalar_select %p105, %s106, %s107
    %p111 = pneg %p105
    %p112 = scmp.eq.s32.totalorder %s12, 7
    %p113 = por %p111, %p112
    %p114 = scmp.ne.s32.totalorder %s106, %s109
    %p115 = scmp.eq.s32.totalorder %s12, 0
    %p116 = por %p114, %p115
    %p117 = scmp.ne.s32.totalorder %s106, %s109
    %p118 = scmp.eq.s32.totalorder %s17, 7
    %p119 = por %p117, %p118
    %p120 = scmp.ne.s32.totalorder %s109, %s110
    %p121 = scmp.eq.s32.totalorder %s17, 0
    %p122 = por %p120, %p121
    %p123 = scmp.ne.s32.totalorder %s109, %s110
    %p124 = scmp.eq.s32.totalorder %s18, 7
    %p125 = por %p123, %p124
    %p127 = scmp.ne.s32.totalorder %s110, %s126
    %p128 = scmp.eq.s32.totalorder %s18, 0
    %p129 = por %p127, %p128
    %s130 = ssub.s32 %s19, %s31
    %s131 = ssub.s32 %s20, %s27
    %s132 = sor.u32 %s130, %s131
    %p133 = scmp.eq.s32.totalorder %s132, 0
    %s135 = sadd.s32 %s134, 1
    %s136 = scalar_select %p133, %s134, %s135
    %p139 = pneg %p133
    %p140 = scmp.eq.s32.totalorder %s12, 7
    %p141 = por %p139, %p140
    %p142 = scmp.ne.s32.totalorder %s134, %s137
    %p143 = scmp.eq.s32.totalorder %s12, 0
    %p144 = por %p142, %p143
    %p145 = scmp.ne.s32.totalorder %s134, %s137
    %p146 = scmp.eq.s32.totalorder %s17, 7
    %p147 = por %p145, %p146
    %p148 = scmp.ne.s32.totalorder %s137, %s138
    %p149 = scmp.eq.s32.totalorder %s17, 0
    %p150 = por %p148, %p149
    %p151 = scmp.ne.s32.totalorder %s137, %s138
    %p152 = scmp.eq.s32.totalorder %s18, 7
    %p153 = por %p151, %p152
    %p155 = scmp.ne.s32.totalorder %s138, %s154
    %p156 = scmp.eq.s32.totalorder %s18, 0
    %p157 = por %p155, %p156
    %s158 = ssub.s32 %s19, %s31
    %s159 = ssub.s32 %s20, %s27
    %s160 = sor.u32 %s158, %s159
    %p161 = scmp.eq.s32.totalorder %s160, 0
    %s163 = sadd.s32 %s162, 1
    %s164 = scalar_select %p161, %s162, %s163
    %p167 = pneg %p161
    %p168 = scmp.eq.s32.totalorder %s12, 7
    %p169 = por %p167, %p168
    %p170 = scmp.ne.s32.totalorder %s162, %s165
    %p171 = scmp.eq.s32.totalorder %s12, 0
    %p172 = por %p170, %p171
    %p173 = scmp.ne.s32.totalorder %s162, %s165
    %p174 = scmp.eq.s32.totalorder %s17, 7
    %p175 = por %p173, %p174
    %p176 = scmp.ne.s32.totalorder %s165, %s166
    %p177 = scmp.eq.s32.totalorder %s17, 0
    %p178 = por %p176, %p177
    %p179 = scmp.ne.s32.totalorder %s165, %s166
    %p180 = scmp.eq.s32.totalorder %s18, 7
    %p181 = por %p179, %p180
    %p183 = scmp.ne.s32.totalorder %s166, %s182
    %p184 = scmp.eq.s32.totalorder %s18, 0
    %p185 = por %p183, %p184
    %p186 = scmp.le.s32.totalorder 1, %s12
    %p187 = scmp.lt.s32.totalorder %s12, 9
    %p188 = pnand %p186, %p187
    %p189 = pneg %p188
    // Predicated region
    $region9: #{resnet_conv_forward.2} parent=5 // pred_check
      _
    $region10: #{resnet_conv_forward.2} parent=5 // pred_check_branch
      %191 = sbr.rel (%p188) target = $region12
    $region11: #{resnet_conv_forward.2} parent=5 // pred_region
      %s192 = ssub.s32 %s12, 1
      // Predicated region
      $region13: #{resnet_conv_forward.2} parent=11 // pred_check
        %p193 = pneg %p73
      $region14: #{resnet_conv_forward.2} parent=11 // pred_check_branch
        %195 = sbr.rel (%p193) target = $region16
      $region15: #{resnet_conv_forward.2} parent=11 // pred_region
        _
      $region16: #{resnet_conv_forward.2} parent=11 // pred_fallthru
        _
      // Predicated region
      $region17: #{resnet_conv_forward.2} parent=11 // pred_check
        %p196 = pneg %p94
      $region18: #{resnet_conv_forward.2} parent=11 // pred_check_branch
        %198 = sbr.rel (%p196) target = $region20
      $region19: #{resnet_conv_forward.2} parent=11 // pred_region
        _
      $region20: #{resnet_conv_forward.2} parent=11 // pred_fallthru
        _
    $region12: #{resnet_conv_forward.2} parent=5 // pred_fallthru
      _
    %p199 = scmp.lt.s32.totalorder %s12, 8
    // Predicated region
    $region21: #{resnet_conv_forward.2} parent=5 // pred_check
      %p200 = pneg %p199
    $region22: #{resnet_conv_forward.2} parent=5 // pred_check_branch
      %202 = sbr.rel (%p200) target = $region24
    $region23: #{resnet_conv_forward.2} parent=5 // pred_region
      // Predicated region
      $region25: #{resnet_conv_forward.2} parent=23 // pred_check
        %p203 = pneg %p46
      $region26: #{resnet_conv_forward.2} parent=23 // pred_check_branch
        %205 = sbr.rel (%p203) target = $region28
      $region27: #{resnet_conv_forward.2} parent=23 // pred_region
        %s206 = smul.u32 4, %s20
        %p207 = scmp.lt.s32.totalorder %s19, 1
        %s208 = scalar_select %p207, %s19, 1
        %p209 = scmp.lt.s32.totalorder %s206, 15
        %s210 = scalar_select %p209, %s206, 15
        %s211 = smul.addr %s210, 2
        %s212 = smul.addr %s208, 32
        %s213 = sadd.s32 %s211, %s212
        %s214 = smul.addr %s213, 8
        %s215 = scalar_lea.vmem %s0, %s214
        %s216 = smul.u32 4, %s20
      $region28: #{resnet_conv_forward.2} parent=23 // pred_fallthru
        _
    $region24: #{resnet_conv_forward.2} parent=5 // pred_fallthru
      _
    %p217 = scmp.le.s32.totalorder 1, %s12
    %p218 = scmp.lt.s32.totalorder %s12, 9
    %p219 = pnand %p217, %p218
    %p220 = pneg %p219
    // Predicated region
    $region29: #{resnet_conv_forward.2} parent=5 // pred_check
      _
    $region30: #{resnet_conv_forward.2} parent=5 // pred_check_branch
      %222 = sbr.rel (%p219) target = $region32
    $region31: #{resnet_conv_forward.2} parent=5 // pred_region
      %s223 = ssub.s32 %s12, 1
      %s224 = smul.u32 4, %s22
      %p225 = scmp.lt.s32.totalorder %s21, 1
      %s226 = scalar_select %p225, %s21, 1
      %p227 = scmp.lt.s32.totalorder %s224, 15
      %s228 = scalar_select %p227, %s224, 15
      %s229 = smul.addr %s228, 2
      %s230 = smul.addr %s226, 32
      %s231 = sadd.s32 %s229, %s230
      %s232 = smul.addr %s231, 8
      %s233 = scalar_lea.vmem %s0, %s232
      %p234 = pneg %p52
      %p235 = pneg %p49
      %p236 = pneg %p73
      %p237 = pneg %p70
      %p238 = pneg %p94
      %p239 = pneg %p91
      %p240 = pneg %p122
      %p241 = pneg %p119
      %s242 = smul.u32 4, %s22
      %p243 = scmp.lt.s32.totalorder %s21, 1
      %s244 = scalar_select %p243, %s21, 1
      %p245 = scmp.lt.s32.totalorder %s242, 15
      %s246 = scalar_select %p245, %s242, 15
      %s247 = smul.addr %s246, 2
      %s248 = smul.addr %s244, 32
      %s249 = sadd.s32 %s247, %s248
      %s250 = smul.addr %s249, 8
      %s251 = scalar_lea.vmem %s3, %s250
      %p252 = pneg %p150
      %p253 = pneg %p147
      %s254 = smul.u32 4, %s22
      %p255 = scmp.lt.s32.totalorder %s21, 1
      %s256 = scalar_select %p255, %s21, 1
      %p257 = scmp.lt.s32.totalorder %s254, 15
      %s258 = scalar_select %p257, %s254, 15
      %s259 = smul.addr %s258, 2
      %s260 = smul.addr %s256, 32
      %s261 = sadd.s32 %s259, %s260
      %s262 = smul.addr %s261, 8
      %s263 = scalar_lea.vmem %s4, %s262
      %p264 = pneg %p178
      %p265 = pneg %p175
      %p266 = scmp.lt.s32.totalorder %s21, 1
      %s267 = scalar_select %p266, %s21, 1
      %p268 = scmp.lt.s32.totalorder %s22, 3
      %s269 = scalar_select %p268, %s22, 3
      %s270 = smul.addr %s267, 4
      %s271 = sadd.s32 %s269, %s270
      %s272 = smul.addr %s271, 4
      %s273 = scalar_lea.vmem %s5, %s272
      %s274 = smul.u32 4, %s22
      %p275 = scmp.lt.s32.totalorder %s21, 1
      %s276 = scalar_select %p275, %s21, 1
      %p277 = scmp.lt.s32.totalorder %s274, 15
      %s278 = scalar_select %p277, %s274, 15
      %s279 = smul.addr %s278, 2
      %s280 = smul.addr %s276, 32
      %s281 = sadd.s32 %s279, %s280
      %s282 = smul.addr %s281, 8
      %s283 = scalar_lea.vmem %s0, %s282
      %s284 = smul.u32 4, %s22
      %s285 = smul.u32 4, %s22
      %p286 = scmp.lt.s32.totalorder %s21, 1
      %s287 = scalar_select %p286, %s21, 1
      %p288 = scmp.lt.s32.totalorder %s285, 15
      %s289 = scalar_select %p288, %s285, 15
      %s290 = smul.addr %s289, 2
      %s291 = smul.addr %s287, 32
      %s292 = sadd.s32 %s290, %s291
      %s293 = smul.addr %s292, 8
      %s294 = scalar_lea.vmem %s3, %s293
      %s295 = smul.u32 4, %s22
      %s296 = smul.u32 4, %s22
      %p297 = scmp.lt.s32.totalorder %s21, 1
      %s298 = scalar_select %p297, %s21, 1
      %p299 = scmp.lt.s32.totalorder %s296, 15
      %s300 = scalar_select %p299, %s296, 15
      %s301 = smul.addr %s300, 2
      %s302 = smul.addr %s298, 32
      %s303 = sadd.s32 %s301, %s302
      %s304 = smul.addr %s303, 8
      %s305 = scalar_lea.vmem %s4, %s304
      %s306 = smul.u32 4, %s22
      %p307 = scmp.lt.s32.totalorder %s21, 1
      %s308 = scalar_select %p307, %s21, 1
      %p309 = scmp.lt.s32.totalorder %s22, 3
      %s310 = scalar_select %p309, %s22, 3
      %s311 = smul.addr %s308, 4
      %s312 = sadd.s32 %s310, %s311
      %s313 = smul.addr %s312, 4
      %s314 = scalar_lea.vmem %s5, %s313
      %v315 = vld [vmem:[%s283] sm:$0xff]
      %v316 = vld [vmem:[%s283 + $0x8] sm:$0xff]
      %v317 = vld [vmem:[%s283 + $0x10] sm:$0xff]
      %v318 = vld [vmem:[%s283 + $0x18] sm:$0xff]
      %v319 = vld [vmem:[%s283 + $0x20] sm:$0xff]
      %v320 = vld [vmem:[%s283 + $0x28] sm:$0xff]
      %v321 = vld [vmem:[%s283 + $0x30] sm:$0xff]
      %v322 = vld [vmem:[%s283 + $0x38] sm:$0xff]
      %v323 = vld [vmem:[%s1] sm:$0xff]
      %v324 = vld [vmem:[%s1 + $0x8] sm:$0xff]
      %v325 = vld [vmem:[%s1 + $0x10] sm:$0xff]
      %v326 = vld [vmem:[%s1 + $0x18] sm:$0xff]
      %v327 = vld [vmem:[%s1 + $0x20] sm:$0xff]
      %v328 = vld [vmem:[%s1 + $0x28] sm:$0xff]
      %v329 = vld [vmem:[%s1 + $0x30] sm:$0xff]
      %v330 = vld [vmem:[%s1 + $0x38] sm:$0xff]
      %v331 = vld [vmem:[%s1 + $0x40] sm:$0xf]
      %v332 = vld [vmem:[%s1 + $0x48] sm:$0xf]
      %v333 = vld [vmem:[%s2] sm:$0x3]
      %v335 = vlaneseq
      %v336 = vshrl.u32 %v335, 7
      %v337 = vsub.s32 0, %v336
      %v338 = vrot.slane %v333, %v337
      %v339 = vlaneseq
      %v340 = vshrl.u32 %v339, 7
      %v341 = vsub.s32 1, %v340
      %v342 = vrot.slane %v333, %v341
      %vm345 = vcmask 293888
      %v347 = vsel %vm345, %v315, 0
      %v350 = vsel %vm345, %v316, 0
      %v353 = vsel %vm345, %v317, 0
      %v356 = vsel %vm345, %v318, 0
      %v359 = vsel %vm345, %v319, 0
      %v362 = vsel %vm345, %v320, 0
      %v365 = vsel %vm345, %v321, 0
      %v368 = vsel %vm345, %v322, 0
      %vm370 = vcmask 1043456
      %v372 = vsel %vm370, %v331, 0
      %v375 = vsel %vm370, %v332, 0
      %377 = vmatprep.subr.mxu0 %v324
      %378 = vmatpush1.msra.mxu0 %v323
      %379 = vmatprep.subr.mxu0 %v326
      %380 = vmatpush1.msra.mxu0 %v325
      %381 = vmatprep.subr.mxu0 %v328
      %382 = vmatpush1.msra.mxu0 %v327
      %383 = vmatprep.subr.mxu0 %v330
      %384 = vmatpush1.msra.mxu0 %v329
      %385 = vmatprep.subr.mxu0 %v375
      %386 = vmatpush1.msra.mxu0 %v372
      %387 = vmatprep.subr.mxu0 0.0
      %388 = vmatpush1.msra.mxu0 0.0
      %389 = vmatprep.subr.mxu0 0.0
      %390 = vmatpush1.msra.mxu0 0.0
      %391 = vmatprep.subr.mxu0 0.0
      %392 = vmatpush1.msra.mxu0 0.0
      %393 = vmatprep.subr.mxu0 0.0
      %394 = vmatpush1.msra.mxu0 0.0
      %395 = vmatprep.subr.mxu0 0.0
      %396 = vmatpush1.msra.mxu0 0.0
      %397 = vmatprep.subr.mxu0 0.0
      %398 = vmatpush1.msra.mxu0 0.0
      %399 = vmatprep.subr.mxu0 0.0
      %400 = vmatpush1.msra.mxu0 0.0
      %401 = vmatprep.subr.mxu0 0.0
      %402 = vmatpush1.msra.mxu0 0.0
      %403 = vmatprep.subr.mxu0 0.0
      %404 = vmatpush1.msra.mxu0 0.0
      %405 = vmatprep.subr.mxu0 0.0
      %406 = vmatpush1.msra.mxu0 0.0
      %407 = vmatprep.subr.mxu0 0.0
      %408 = vmatpush1.msra.mxu0 0.0
      %409 = vmatprep.subr.mxu0 0.0
      %410 = vmatpush1.msra.mxu0 0.0
      %411 = vmatprep.subr.mxu0 0.0
      %412 = vmatpush1.msra.mxu0 0.0
      %413 = vmatprep.subr.mxu0 0.0
      %414 = vmatpush1.msra.mxu0 0.0
      %415 = vmatprep.subr.mxu0 0.0
      %416 = vmatpush1.msra.mxu0 0.0
      %417 = vmatprep.subr.mxu0 0.0
      %418 = vmatpush1.msra.mxu0 0.0
      %419 = vmatprep.subr.mxu0 0.0
      %420 = vmatpush1.msra.mxu0 0.0
      %421 = vmatprep.subr.mxu0 0.0
      %422 = vmatpush1.msra.mxu0 0.0
      %423 = vmatprep.subr.mxu0 0.0
      %424 = vmatpush1.msra.mxu0 0.0
      %425 = vmatprep.subr.mxu0 0.0
      %426 = vmatpush1.msra.mxu0 0.0
      %427 = vmatprep.subr.mxu0 0.0
      %428 = vmatpush1.msra.mxu0 0.0
      %429 = vmatprep.subr.mxu0 0.0
      %430 = vmatpush1.msra.mxu0 0.0
      %431 = vmatprep.subr.mxu0 0.0
      %432 = vmatpush1.msra.mxu0 0.0
      %433 = vmatprep.subr.mxu0 0.0
      %434 = vmatpush1.msra.mxu0 0.0
      %435 = vmatprep.subr.mxu0 0.0
      %436 = vmatpush1.msra.mxu0 0.0
      %437 = vmatprep.subr.mxu0 0.0
      %438 = vmatpush1.msra.mxu0 0.0
      %439 = vmatprep.subr.mxu0 0.0
      %440 = vmatpush1.msra.mxu0 0.0
      %441 = vmatprep.mubr.f32.mxu0 0.0
      %442 = vmatmul.mubr.f32.gmra.mrb[0].mxu0 %v347
      %v443 = vpop.f32.mrb[0].mxu0
      %v444 = vadd.f32 %v338, %v443
      %v445 = vpop.f32.mrb[0].mxu0
      %v446 = vadd.f32 %v342, %v445
      %447 = vmatprep.mubr.f32.mxu0 0.0
      %448 = vmatmul.mubr.f32.gmra.mrb[0].mxu0 %v350
      %v449 = vpop.f32.mrb[0].mxu0
      %v450 = vadd.f32 %v338, %v449
      %v451 = vpop.f32.mrb[0].mxu0
      %v452 = vadd.f32 %v342, %v451
      %453 = vmatprep.mubr.f32.mxu0 0.0
      %454 = vmatmul.mubr.f32.gmra.mrb[0].mxu0 %v353
      %v455 = vpop.f32.mrb[0].mxu0
      %v456 = vadd.f32 %v338, %v455
      %v457 = vpop.f32.mrb[0].mxu0
      %v458 = vadd.f32 %v342, %v457
      %459 = vmatprep.mubr.f32.mxu0 0.0
      %460 = vmatmul.mubr.f32.gmra.mrb[0].mxu0 %v356
      %v461 = vpop.f32.mrb[0].mxu0
      %v462 = vadd.f32 %v338, %v461
      %v463 = vpop.f32.mrb[0].mxu0
      %v464 = vadd.f32 %v342, %v463
      %465 = vmatprep.mubr.f32.mxu0 0.0
      %466 = vmatmul.mubr.f32.gmra.mrb[0].mxu0 %v359
      %v467 = vpop.f32.mrb[0].mxu0
      %v468 = vadd.f32 %v338, %v467
      %v469 = vpop.f32.mrb[0].mxu0
      %v470 = vadd.f32 %v342, %v469
      %471 = vmatprep.mubr.f32.mxu0 0.0
      %472 = vmatmul.mubr.f32.gmra.mrb[0].mxu0 %v362
      %v473 = vpop.f32.mrb[0].mxu0
      %v474 = vadd.f32 %v338, %v473
      %v475 = vpop.f32.mrb[0].mxu0
      %v476 = vadd.f32 %v342, %v475
      %477 = vmatprep.mubr.f32.mxu0 0.0
      %478 = vmatmul.mubr.f32.gmra.mrb[0].mxu0 %v365
      %v479 = vpop.f32.mrb[0].mxu0
      %v480 = vadd.f32 %v338, %v479
      %v481 = vpop.f32.mrb[0].mxu0
      %v482 = vadd.f32 %v342, %v481
      %483 = vmatprep.mubr.f32.mxu0 0.0
      %484 = vmatmul.mubr.f32.gmra.mrb[0].mxu0 %v368
      %v485 = vpop.f32.mrb[0].mxu0
      %v486 = vadd.f32 %v338, %v485
      %v487 = vpop.f32.mrb[0].mxu0
      %v488 = vadd.f32 %v342, %v487
      %489 = vdwg.mxu0
      %v490 = vmax.f32 %v444, 0.0
      %v491 = vmax.f32 %v446, 0.0
      %v492 = vmax.f32 %v450, 0.0
      %v493 = vmax.f32 %v452, 0.0
      %v494 = vmax.f32 %v456, 0.0
      %v495 = vmax.f32 %v458, 0.0
      %v496 = vmax.f32 %v462, 0.0
      %v497 = vmax.f32 %v464, 0.0
      %v498 = vmax.f32 %v468, 0.0
      %v499 = vmax.f32 %v470, 0.0
      %v500 = vmax.f32 %v474, 0.0
      %v501 = vmax.f32 %v476, 0.0
      %v502 = vmax.f32 %v480, 0.0
      %v503 = vmax.f32 %v482, 0.0
      %v504 = vmax.f32 %v486, 0.0
      %v505 = vmax.f32 %v488, 0.0
      %506 = vst [vmem:[%s294] sm:$0xff] %v490
      %507 = vst [vmem:[%s294 + $0x8] sm:$0xff] %v492
      %508 = vst [vmem:[%s294 + $0x10] sm:$0xff] %v494
      %509 = vst [vmem:[%s294 + $0x18] sm:$0xff] %v496
      %510 = vst [vmem:[%s294 + $0x20] sm:$0xff] %v498
      %511 = vst [vmem:[%s294 + $0x28] sm:$0xff] %v500
      %512 = vst [vmem:[%s294 + $0x30] sm:$0xff] %v502
      %513 = vst [vmem:[%s294 + $0x38] sm:$0xff] %v504
      %514 = vst [vmem:[%s305] sm:$0xff] %v491
      %515 = vst [vmem:[%s305 + $0x8] sm:$0xff] %v493
      %516 = vst [vmem:[%s305 + $0x10] sm:$0xff] %v495
      %517 = vst [vmem:[%s305 + $0x18] sm:$0xff] %v497
      %518 = vst [vmem:[%s305 + $0x20] sm:$0xff] %v499
      %519 = vst [vmem:[%s305 + $0x28] sm:$0xff] %v501
      %520 = vst [vmem:[%s305 + $0x30] sm:$0xff] %v503
      %521 = vst [vmem:[%s305 + $0x38] sm:$0xff] %v505
      %v522 = vadd.f32 %v490, %v492
      %v523 = vadd.f32 %v522, %v494
      %v524 = vadd.f32 %v523, %v496
      %v525 = vadd.f32 %v524, %v498
      %v526 = vadd.f32 %v525, %v500
      %v527 = vadd.f32 %v526, %v502
      %v528 = vadd.f32 %v527, %v504
      %v529 = vrot.slane %v528, 4
      %v530 = vadd.f32 %v528, %v529
      %v531 = vrot.slane %v530, 2
      %v532 = vadd.f32 %v530, %v531
      %v533 = vrot.slane %v532, 1
      %v534 = vadd.f32 %v532, %v533
      %v535 = vrcp.pop 64.0
      %v536 = vmul.f32 %v534, %v535
      %v537 = vsub.f32 %v490, %v536
      %v538 = vsub.f32 %v492, %v536
      %v539 = vsub.f32 %v494, %v536
      %v540 = vsub.f32 %v496, %v536
      %v541 = vsub.f32 %v498, %v536
      %v542 = vsub.f32 %v500, %v536
      %v543 = vsub.f32 %v502, %v536
      %v544 = vsub.f32 %v504, %v536
      %v545 = vmul.f32 %v537, %v537
      %v546 = vmul.f32 %v538, %v538
      %v547 = vmul.f32 %v539, %v539
      %v548 = vmul.f32 %v540, %v540
      %v549 = vmul.f32 %v541, %v541
      %v550 = vmul.f32 %v542, %v542
      %v551 = vmul.f32 %v543, %v543
      %v552 = vmul.f32 %v544, %v544
      %v553 = vadd.f32 %v545, %v546
      %v554 = vadd.f32 %v553, %v547
      %v555 = vadd.f32 %v554, %v548
      %v556 = vadd.f32 %v555, %v549
      %v557 = vadd.f32 %v556, %v550
      %v558 = vadd.f32 %v557, %v551
      %v559 = vadd.f32 %v558, %v552
      %v560 = vrot.slane %v559, 4
      %v561 = vadd.f32 %v559, %v560
      %v562 = vrot.slane %v561, 2
      %v563 = vadd.f32 %v561, %v562
      %v564 = vrot.slane %v563, 1
      %v565 = vadd.f32 %v563, %v564
      %v566 = vadd.f32 %v491, %v493
      %v567 = vadd.f32 %v566, %v495
      %v568 = vadd.f32 %v567, %v497
      %v569 = vadd.f32 %v568, %v499
      %v570 = vadd.f32 %v569, %v501
      %v571 = vadd.f32 %v570, %v503
      %v572 = vadd.f32 %v571, %v505
      %v573 = vrot.slane %v572, 4
      %v574 = vadd.f32 %v572, %v573
      %v575 = vrot.slane %v574, 2
      %v576 = vadd.f32 %v574, %v575
      %v577 = vrot.slane %v576, 1
      %v578 = vadd.f32 %v576, %v577
      %v579 = vmul.f32 %v578, %v535
      %v580 = vsub.f32 %v491, %v579
      %v581 = vsub.f32 %v493, %v579
      %v582 = vsub.f32 %v495, %v579
      %v583 = vsub.f32 %v497, %v579
      %v584 = vsub.f32 %v499, %v579
      %v585 = vsub.f32 %v501, %v579
      %v586 = vsub.f32 %v503, %v579
      %v587 = vsub.f32 %v505, %v579
      %v588 = vmul.f32 %v580, %v580
      %v589 = vmul.f32 %v581, %v581
      %v590 = vmul.f32 %v582, %v582
      %v591 = vmul.f32 %v583, %v583
      %v592 = vmul.f32 %v584, %v584
      %v593 = vmul.f32 %v585, %v585
      %v594 = vmul.f32 %v586, %v586
      %v595 = vmul.f32 %v587, %v587
      %v596 = vadd.f32 %v588, %v589
      %v597 = vadd.f32 %v596, %v590
      %v598 = vadd.f32 %v597, %v591
      %v599 = vadd.f32 %v598, %v592
      %v600 = vadd.f32 %v599, %v593
      %v601 = vadd.f32 %v600, %v594
      %v602 = vadd.f32 %v601, %v595
      %v603 = vrot.slane %v602, 4
      %v604 = vadd.f32 %v602, %v603
      %v605 = vrot.slane %v604, 2
      %v606 = vadd.f32 %v604, %v605
      %v607 = vrot.slane %v606, 1
      %v608 = vadd.f32 %v606, %v607
      %vm609 = vcmask 1040384
      %v610 = vsel %vm609, %v534, %v565
      %vm611 = vcmask 1041408
      %v612 = vsel %vm611, %v610, %v578
      %vm613 = vcmask 1042432
      %v614 = vsel %vm613, %v612, %v608
      %615 = vst [vmem:[%s314] sm:$0xf] %v614
      %s616 = smul.u32 4, %s22
      %p617 = scmp.lt.s32.totalorder %s21, 1
      %s618 = scalar_select %p617, %s21, 1
      %p619 = scmp.lt.s32.totalorder %s616, 15
      %s620 = scalar_select %p619, %s616, 15
      %s621 = smul.addr %s620, 2
      %s622 = smul.addr %s618, 32
      %s623 = sadd.s32 %s621, %s622
      %s624 = smul.addr %s623, 8
      %s625 = scalar_lea.vmem %s3, %s624
      %s626 = smul.u32 4, %s22
      %p627 = scmp.lt.s32.totalorder %s21, 1
      %s628 = scalar_select %p627, %s21, 1
      %p629 = scmp.lt.s32.totalorder %s626, 15
      %s630 = scalar_select %p629, %s626, 15
      %s631 = smul.addr %s630, 2
      %s632 = smul.addr %s628, 32
      %s633 = sadd.s32 %s631, %s632
      %s634 = smul.addr %s633, 8
      %s635 = scalar_lea.vmem %s4, %s634
      %p636 = scmp.lt.s32.totalorder %s21, 1
      %s637 = scalar_select %p636, %s21, 1
      %p638 = scmp.lt.s32.totalorder %s22, 3
      %s639 = scalar_select %p638, %s22, 3
      %s640 = smul.addr %s637, 4
      %s641 = sadd.s32 %s639, %s640
      %s642 = smul.addr %s641, 4
      %s643 = scalar_lea.vmem %s5, %s642
      // Predicated region
      $region33: #{resnet_conv_forward.2} parent=31 // pred_check
        %p644 = pneg %p119
      $region34: #{resnet_conv_forward.2} parent=31 // pred_check_branch
        %646 = sbr.rel (%p644) target = $region36
      $region35: #{resnet_conv_forward.2} parent=31 // pred_region
        %s647 = smul.u32 4, %s22
      $region36: #{resnet_conv_forward.2} parent=31 // pred_fallthru
        _
      // Predicated region
      $region37: #{resnet_conv_forward.2} parent=31 // pred_check
        %p648 = pneg %p147
      $region38: #{resnet_conv_forward.2} parent=31 // pred_check_branch
        %650 = sbr.rel (%p648) target = $region40
      $region39: #{resnet_conv_forward.2} parent=31 // pred_region
        %s651 = smul.u32 4, %s22
      $region40: #{resnet_conv_forward.2} parent=31 // pred_fallthru
        _
      // Predicated region
      $region41: #{resnet_conv_forward.2} parent=31 // pred_check
        %p652 = pneg %p175
      $region42: #{resnet_conv_forward.2} parent=31 // pred_check_branch
        %654 = sbr.rel (%p652) target = $region44
      $region43: #{resnet_conv_forward.2} parent=31 // pred_region
        _
      $region44: #{resnet_conv_forward.2} parent=31 // pred_fallthru
        _
    $region32: #{resnet_conv_forward.2} parent=5 // pred_fallthru
      _
    %p655 = scmp.le.s32.totalorder 2, %s12
    // Predicated region
    $region45: #{resnet_conv_forward.2} parent=5 // pred_check
      %p656 = pneg %p655
    $region46: #{resnet_conv_forward.2} parent=5 // pred_check_branch
      %658 = sbr.rel (%p656) target = $region48
    $region47: #{resnet_conv_forward.2} parent=5 // pred_region
      %s659 = ssub.s32 %s12, 2
      // Predicated region
      $region49: #{resnet_conv_forward.2} parent=47 // pred_check
        %p660 = pneg %p125
      $region50: #{resnet_conv_forward.2} parent=47 // pred_check_branch
        %662 = sbr.rel (%p660) target = $region52
      $region51: #{resnet_conv_forward.2} parent=47 // pred_region
        %s663 = smul.u32 4, %s24
        %p664 = scmp.lt.s32.totalorder %s23, 1
        %s665 = scalar_select %p664, %s23, 1
        %p666 = scmp.lt.s32.totalorder %s663, 15
        %s667 = scalar_select %p666, %s663, 15
        %s668 = smul.addr %s667, 2
        %s669 = smul.addr %s665, 32
        %s670 = sadd.s32 %s668, %s669
        %s671 = smul.addr %s670, 8
        %s672 = scalar_lea.vmem %s3, %s671
      $region52: #{resnet_conv_forward.2} parent=47 // pred_fallthru
        _
      // Predicated region
      $region53: #{resnet_conv_forward.2} parent=47 // pred_check
        %p673 = pneg %p153
      $region54: #{resnet_conv_forward.2} parent=47 // pred_check_branch
        %675 = sbr.rel (%p673) target = $region56
      $region55: #{resnet_conv_forward.2} parent=47 // pred_region
        %s676 = smul.u32 4, %s24
        %p677 = scmp.lt.s32.totalorder %s23, 1
        %s678 = scalar_select %p677, %s23, 1
        %p679 = scmp.lt.s32.totalorder %s676, 15
        %s680 = scalar_select %p679, %s676, 15
        %s681 = smul.addr %s680, 2
        %s682 = smul.addr %s678, 32
        %s683 = sadd.s32 %s681, %s682
        %s684 = smul.addr %s683, 8
        %s685 = scalar_lea.vmem %s4, %s684
      $region56: #{resnet_conv_forward.2} parent=47 // pred_fallthru
        _
      // Predicated region
      $region57: #{resnet_conv_forward.2} parent=47 // pred_check
        %p686 = pneg %p181
      $region58: #{resnet_conv_forward.2} parent=47 // pred_check_branch
        %688 = sbr.rel (%p686) target = $region60
      $region59: #{resnet_conv_forward.2} parent=47 // pred_region
        %p689 = scmp.lt.s32.totalorder %s23, 1
        %s690 = scalar_select %p689, %s23, 1
        %p691 = scmp.lt.s32.totalorder %s24, 3
        %s692 = scalar_select %p691, %s24, 3
        %s693 = smul.addr %s690, 4
        %s694 = sadd.s32 %s692, %s693
        %s695 = smul.addr %s694, 4
        %s696 = scalar_lea.vmem %s5, %s695
      $region60: #{resnet_conv_forward.2} parent=47 // pred_fallthru
        _
    $region48: #{resnet_conv_forward.2} parent=5 // pred_fallthru
      _
  $region6: #{resnet_conv_forward.2} parent=0 // loop_footer
    %s16 = sadd.s32 1, %s12
  $region7: #{resnet_conv_forward.2} parent=0 // loop_footer_branch
    %11 = sbr.rel target = $region3
  $region8: #{resnet_conv_forward.2} parent=0 // loop_exit
    _

// kernel: resnet_conv_forward.3
$region0: #{resnet_conv_forward.3}
  #allocation0 [shape = 'u32[]', space=smem, size = 0x4, offset = 0x4, fixed_abs, tag = 'smem constant byte address 0x4 - core index']
  #allocation1 [shape = 'u32[144,128]{1,0:T(1,128)}', space=vmem, size = 0x12000, scoped, tag = 'internal scratch']
  #allocation2 [shape = 'f32[6,18,128]{2,1,0:T(8,128)}', space=vmem, size = 0x12000, scoped, tag = 'scratch operand']
  %s0 = inlined_call_operand.vmem [shape: f32[2,16,16,128], index: 0, kind: input, shape index: {}, may-alias: {0,1,2}]
  %s1 = inlined_call_operand.vmem [shape: f32[2,16,16,128], index: 1, kind: input, shape index: {}, may-alias: {0,1,2}]
  %s2 = inlined_call_operand.vmem [shape: f32[2,16,16,128], index: 2, kind: input, shape index: {}, may-alias: {0,1,2}]
  %s3 = inlined_call_operand.vmem [shape: f32[2,16,16,128], index: 3, kind: input, shape index: {}]
  %s4 = inlined_call_operand.vmem [shape: f32[9,128,128], index: 4, kind: input, shape index: {}]
  %s5 = inlined_call_operand.vmem [shape: f32[1,128], index: 5, kind: input, shape index: {}]
  %s6 = inlined_call_operand.vmem [shape: f32[1,128], index: 6, kind: input, shape index: {}]
  %s7 = inlined_call_operand.vmem [shape: f32[1,128], index: 7, kind: input, shape index: {}]
  %s8 = inlined_call_operand.vmem [shape: f32[2,16,16,128], index: 8, kind: output, shape index: {0}]
  %s9 = inlined_call_operand.vmem [shape: f32[2,4,4,128], index: 9, kind: output, shape index: {1}]
  %10 = xla_tuple %s8, %s9
  %s11 = sld [smem:[#allocation0]]
  $region73: #{resnet_conv_forward.3} parent=0
    _
  %s13 = ssub.s32 1, %s11
  %s14 = scalar_select 0, %s13, %s11
  loop: start=0, step=1, limit=10
  $region2: #{resnet_conv_forward.3} parent=0 // loop_pre_header
    _
  $region3: #{resnet_conv_forward.3} parent=0 // loop_header
    %s16 = sphi 0, %s20
    %p17 = scmp.ge.s32.totalorder %s16, 10
    %s23 = sphi 0, %s35
    %s24 = sphi 0, %s31
    %s25 = sphi 0, %s23
    %s26 = sphi 0, %s24
    %s27 = sphi 0, %s25
    %s28 = sphi 0, %s26
    %s40 = sphi 0, %s42
    %s43 = sphi 0, %s40
    %s44 = sphi 0, %s43
    %s60 = sphi 0, %s44
    %s76 = sphi 0, %s78
    %s79 = sphi 0, %s76
    %s80 = sphi 0, %s79
    %s96 = sphi 0, %s80
    %s112 = sphi 0, %s114
    %s115 = sphi 0, %s112
    %s116 = sphi 0, %s115
    %s132 = sphi 0, %s116
    %s140 = sphi 0, %s142
    %s143 = sphi 0, %s140
    %s144 = sphi 0, %s143
    %s160 = sphi 0, %s144
    %s164 = sphi 0, %s164
    %s166 = sphi 0, %s164
    %s167 = sphi 0, %s166
    %s181 = sphi 0, %s167
    %s185 = sphi 0, %s185
    %s187 = sphi 0, %s185
    %s188 = sphi 0, %s187
    %s202 = sphi 0, %s188
    %s206 = sphi 0, %s206
    %s208 = sphi 0, %s206
    %s209 = sphi 0, %s208
    %s223 = sphi 0, %s209
    %s227 = sphi 0, %s227
    %s229 = sphi 0, %s227
    %s230 = sphi 0, %s229
    %s244 = sphi 0, %s230
    %s252 = sphi 0, %s254
    %s255 = sphi 0, %s252
    %s256 = sphi 0, %s255
    %s272 = sphi 0, %s256
    %s280 = sphi 0, %s282
    %s283 = sphi 0, %s280
    %s284 = sphi 0, %s283
    %s300 = sphi 0, %s284
  $region4: #{resnet_conv_forward.3} parent=0 // loop_header_branch
    %19 = sbr.rel (%p17) target = $region8
  $region5: #{resnet_conv_forward.3} parent=0 // loop_body
    %s21 = ssub.s32 %s16, 1
    %s22 = ssub.s32 %s16, 2
    %s29 = sadd.s32 1, %s24
    %p30 = scmp.ge.s32.totalorder %s29, 4
    %s31 = scalar_select %p30, 0, %s29
    %s32 = sadd.s32 1, %s23
    %s33 = scalar_select %p30, %s32, %s23
    %p34 = scmp.ge.s32.totalorder %s33, 2
    %s35 = scalar_select %p34, 0, %s33
    %s36 = ssub.s32 %s23, %s35
    %s37 = ssub.s32 %s24, %s31
    %s38 = sor.u32 %s36, %s37
    %p39 = scmp.eq.s32.totalorder %s38, 0
    %s41 = sadd.s32 %s40, 1
    %s42 = scalar_select %p39, %s40, %s41
    %p45 = pneg %p39
    %p46 = scmp.eq.s32.totalorder %s16, 7
    %p47 = por %p45, %p46
    %p48 = scmp.ne.s32.totalorder %s40, %s43
    %p49 = scmp.eq.s32.totalorder %s16, 0
    %p50 = por %p48, %p49
    %p51 = scmp.ne.s32.totalorder %s40, %s43
    %p52 = scmp.eq.s32.totalorder %s21, 7
    %p53 = por %p51, %p52
    %p54 = scmp.ne.s32.totalorder %s43, %s44
    %p55 = scmp.eq.s32.totalorder %s21, 0
    %p56 = por %p54, %p55
    %p57 = scmp.ne.s32.totalorder %s43, %s44
    %p58 = scmp.eq.s32.totalorder %s22, 7
    %p59 = por %p57, %p58
    %p61 = scmp.ne.s32.totalorder %s44, %s60
    %p62 = scmp.eq.s32.totalorder %s22, 0
    %p63 = por %p61, %p62
    %s64 = smul.u32 %s24, 4
    %s65 = ssub.s32 %s64, 1
    %p66 = scmp.gt.s32.totalorder %s65, 0
    %s67 = scalar_select %p66, %s65, 0
    %s68 = smul.u32 %s31, 4
    %s69 = ssub.s32 %s68, 1
    %p70 = scmp.gt.s32.totalorder %s69, 0
    %s71 = scalar_select %p70, %s69, 0
    %s72 = ssub.s32 %s23, %s35
    %s73 = ssub.s32 %s67, %s71
    %s74 = sor.u32 %s72, %s73
    %p75 = scmp.eq.s32.totalorder %s74, 0
    %s77 = sadd.s32 %s76, 1
    %s78 = scalar_select %p75, %s76, %s77
    %p81 = pneg %p75
    %p82 = scmp.eq.s32.totalorder %s16, 7
    %p83 = por %p81, %p82
    %p84 = scmp.ne.s32.totalorder %s76, %s79
    %p85 = scmp.eq.s32.totalorder %s16, 0
    %p86 = por %p84, %p85
    %p87 = scmp.ne.s32.totalorder %s76, %s79
    %p88 = scmp.eq.s32.totalorder %s21, 7
    %p89 = por %p87, %p88
    %p90 = scmp.ne.s32.totalorder %s79, %s80
    %p91 = scmp.eq.s32.totalorder %s21, 0
    %p92 = por %p90, %p91
    %p93 = scmp.ne.s32.totalorder %s79, %s80
    %p94 = scmp.eq.s32.totalorder %s22, 7
    %p95 = por %p93, %p94
    %p97 = scmp.ne.s32.totalorder %s80, %s96
    %p98 = scmp.eq.s32.totalorder %s22, 0
    %p99 = por %p97, %p98
    %s100 = sadd.s32 %s24, 1
    %s101 = smul.u32 %s100, 4
    %p102 = scmp.lt.s32.totalorder %s101, 15
    %s103 = scalar_select %p102, %s101, 15
    %s104 = sadd.s32 %s31, 1
    %s105 = smul.u32 %s104, 4
    %p106 = scmp.lt.s32.totalorder %s105, 15
    %s107 = scalar_select %p106, %s105, 15
    %s108 = ssub.s32 %s23, %s35
    %s109 = ssub.s32 %s103, %s107
    %s110 = sor.u32 %s108, %s109
    %p111 = scmp.eq.s32.totalorder %s110, 0
    %s113 = sadd.s32 %s112, 1
    %s114 = scalar_select %p111, %s112, %s113
    %p117 = pneg %p111
    %p118 = scmp.eq.s32.totalorder %s16, 7
    %p119 = por %p117, %p118
    %p120 = scmp.ne.s32.totalorder %s112, %s115
    %p121 = scmp.eq.s32.totalorder %s16, 0
    %p122 = por %p120, %p121
    %p123 = scmp.ne.s32.totalorder %s112, %s115
    %p124 = scmp.eq.s32.totalorder %s21, 7
    %p125 = por %p123, %p124
    %p126 = scmp.ne.s32.totalorder %s115, %s116
    %p127 = scmp.eq.s32.totalorder %s21, 0
    %p128 = por %p126, %p127
    %p129 = scmp.ne.s32.totalorder %s115, %s116
    %p130 = scmp.eq.s32.totalorder %s22, 7
    %p131 = por %p129, %p130
    %p133 = scmp.ne.s32.totalorder %s116, %s132
    %p134 = scmp.eq.s32.totalorder %s22, 0
    %p135 = por %p133, %p134
    %s136 = ssub.s32 %s23, %s35
    %s137 = ssub.s32 %s24, %s31
    %s138 = sor.u32 %s136, %s137
    %p139 = scmp.eq.s32.totalorder %s138, 0
    %s141 = sadd.s32 %s140, 1
    %s142 = scalar_select %p139, %s140, %s141
    %p145 = pneg %p139
    %p146 = scmp.eq.s32.totalorder %s16, 7
    %p147 = por %p145, %p146
    %p148 = scmp.ne.s32.totalorder %s140, %s143
    %p149 = scmp.eq.s32.totalorder %s16, 0
    %p150 = por %p148, %p149
    %p151 = scmp.ne.s32.totalorder %s140, %s143
    %p152 = scmp.eq.s32.totalorder %s21, 7
    %p153 = por %p151, %p152
    %p154 = scmp.ne.s32.totalorder %s143, %s144
    %p155 = scmp.eq.s32.totalorder %s21, 0
    %p156 = por %p154, %p155
    %p157 = scmp.ne.s32.totalorder %s143, %s144
    %p158 = scmp.eq.s32.totalorder %s22, 7
    %p159 = por %p157, %p158
    %p161 = scmp.ne.s32.totalorder %s144, %s160
    %p162 = scmp.eq.s32.totalorder %s22, 0
    %p163 = por %p161, %p162
    %s165 = sadd.s32 %s164, 1
    %p168 = scmp.eq.s32.totalorder %s16, 7
    %p169 = scmp.ne.s32.totalorder %s164, %s166
    %p170 = scmp.eq.s32.totalorder %s16, 0
    %p171 = por %p169, %p170
    %p172 = scmp.ne.s32.totalorder %s164, %s166
    %p173 = scmp.eq.s32.totalorder %s21, 7
    %p174 = por %p172, %p173
    %p175 = scmp.ne.s32.totalorder %s166, %s167
    %p176 = scmp.eq.s32.totalorder %s21, 0
    %p177 = por %p175, %p176
    %p178 = scmp.ne.s32.totalorder %s166, %s167
    %p179 = scmp.eq.s32.totalorder %s22, 7
    %p180 = por %p178, %p179
    %p182 = scmp.ne.s32.totalorder %s167, %s181
    %p183 = scmp.eq.s32.totalorder %s22, 0
    %p184 = por %p182, %p183
    %s186 = sadd.s32 %s185, 1
    %p189 = scmp.eq.s32.totalorder %s16, 7
    %p190 = scmp.ne.s32.totalorder %s185, %s187
    %p191 = scmp.eq.s32.totalorder %s16, 0
    %p192 = por %p190, %p191
    %p193 = scmp.ne.s32.totalorder %s185, %s187
    %p194 = scmp.eq.s32.totalorder %s21, 7
    %p195 = por %p193, %p194
    %p196 = scmp.ne.s32.totalorder %s187, %s188
    %p197 = scmp.eq.s32.totalorder %s21, 0
    %p198 = por %p196, %p197
    %p199 = scmp.ne.s32.totalorder %s187, %s188
    %p200 = scmp.eq.s32.totalorder %s22, 7
    %p201 = por %p199, %p200
    %p203 = scmp.ne.s32.totalorder %s188, %s202
    %p204 = scmp.eq.s32.totalorder %s22, 0
    %p205 = por %p203, %p204
    %s207 = sadd.s32 %s206, 1
    %p210 = scmp.eq.s32.totalorder %s16, 7
    %p211 = scmp.ne.s32.totalorder %s206, %s208
    %p212 = scmp.eq.s32.totalorder %s16, 0
    %p213 = por %p211, %p212
    %p214 = scmp.ne.s32.totalorder %s206, %s208
    %p215 = scmp.eq.s32.totalorder %s21, 7
    %p216 = por %p214, %p215
    %p217 = scmp.ne.s32.totalorder %s208, %s209
    %p218 = scmp.eq.s32.totalorder %s21, 0
    %p219 = por %p217, %p218
    %p220 = scmp.ne.s32.totalorder %s208, %s209
    %p221 = scmp.eq.s32.totalorder %s22, 7
    %p222 = por %p220, %p221
    %p224 = scmp.ne.s32.totalorder %s209, %s223
    %p225 = scmp.eq.s32.totalorder %s22, 0
    %p226 = por %p224, %p225
    %s228 = sadd.s32 %s227, 1
    %p231 = scmp.eq.s32.totalorder %s16, 7
    %p232 = scmp.ne.s32.totalorder %s227, %s229
    %p233 = scmp.eq.s32.totalorder %s16, 0
    %p234 = por %p232, %p233
    %p235 = scmp.ne.s32.totalorder %s227, %s229
    %p236 = scmp.eq.s32.totalorder %s21, 7
    %p237 = por %p235, %p236
    %p238 = scmp.ne.s32.totalorder %s229, %s230
    %p239 = scmp.eq.s32.totalorder %s21, 0
    %p240 = por %p238, %p239
    %p241 = scmp.ne.s32.totalorder %s229, %s230
    %p242 = scmp.eq.s32.totalorder %s22, 7
    %p243 = por %p241, %p242
    %p245 = scmp.ne.s32.totalorder %s230, %s244
    %p246 = scmp.eq.s32.totalorder %s22, 0
    %p247 = por %p245, %p246
    %s248 = ssub.s32 %s23, %s35
    %s249 = ssub.s32 %s24, %s31
    %s250 = sor.u32 %s248, %s249
    %p251 = scmp.eq.s32.totalorder %s250, 0
    %s253 = sadd.s32 %s252, 1
    %s254 = scalar_select %p251, %s252, %s253
    %p257 = pneg %p251
    %p258 = scmp.eq.s32.totalorder %s16, 7
    %p259 = por %p257, %p258
    %p260 = scmp.ne.s32.totalorder %s252, %s255
    %p261 = scmp.eq.s32.totalorder %s16, 0
    %p262 = por %p260, %p261
    %p263 = scmp.ne.s32.totalorder %s252, %s255
    %p264 = scmp.eq.s32.totalorder %s21, 7
    %p265 = por %p263, %p264
    %p266 = scmp.ne.s32.totalorder %s255, %s256
    %p267 = scmp.eq.s32.totalorder %s21, 0
    %p268 = por %p266, %p267
    %p269 = scmp.ne.s32.totalorder %s255, %s256
    %p270 = scmp.eq.s32.totalorder %s22, 7
    %p271 = por %p269, %p270
    %p273 = scmp.ne.s32.totalorder %s256, %s272
    %p274 = scmp.eq.s32.totalorder %s22, 0
    %p275 = por %p273, %p274
    %s276 = ssub.s32 %s23, %s35
    %s277 = ssub.s32 %s24, %s31
    %s278 = sor.u32 %s276, %s277
    %p279 = scmp.eq.s32.totalorder %s278, 0
    %s281 = sadd.s32 %s280, 1
    %s282 = scalar_select %p279, %s280, %s281
    %p285 = pneg %p279
    %p286 = scmp.eq.s32.totalorder %s16, 7
    %p287 = por %p285, %p286
    %p288 = scmp.ne.s32.totalorder %s280, %s283
    %p289 = scmp.eq.s32.totalorder %s16, 0
    %p290 = por %p288, %p289
    %p291 = scmp.ne.s32.totalorder %s280, %s283
    %p292 = scmp.eq.s32.totalorder %s21, 7
    %p293 = por %p291, %p292
    %p294 = scmp.ne.s32.totalorder %s283, %s284
    %p295 = scmp.eq.s32.totalorder %s21, 0
    %p296 = por %p294, %p295
    %p297 = scmp.ne.s32.totalorder %s283, %s284
    %p298 = scmp.eq.s32.totalorder %s22, 7
    %p299 = por %p297, %p298
    %p301 = scmp.ne.s32.totalorder %s284, %s300
    %p302 = scmp.eq.s32.totalorder %s22, 0
    %p303 = por %p301, %p302
    %p304 = scmp.le.s32.totalorder 1, %s16
    %p305 = scmp.lt.s32.totalorder %s16, 9
    %p306 = pnand %p304, %p305
    %p307 = pneg %p306
    // Predicated region
    $region9: #{resnet_conv_forward.3} parent=5 // pred_check
      _
    $region10: #{resnet_conv_forward.3} parent=5 // pred_check_branch
      %309 = sbr.rel (%p306) target = $region12
    $region11: #{resnet_conv_forward.3} parent=5 // pred_region
      %s310 = ssub.s32 %s16, 1
      // Predicated region
      $region13: #{resnet_conv_forward.3} parent=11 // pred_check
        %p311 = pneg %p177
      $region14: #{resnet_conv_forward.3} parent=11 // pred_check_branch
        %313 = sbr.rel (%p311) target = $region16
      $region15: #{resnet_conv_forward.3} parent=11 // pred_region
        _
      $region16: #{resnet_conv_forward.3} parent=11 // pred_fallthru
        _
      // Predicated region
      $region17: #{resnet_conv_forward.3} parent=11 // pred_check
        %p314 = pneg %p198
      $region18: #{resnet_conv_forward.3} parent=11 // pred_check_branch
        %316 = sbr.rel (%p314) target = $region20
      $region19: #{resnet_conv_forward.3} parent=11 // pred_region
        _
      $region20: #{resnet_conv_forward.3} parent=11 // pred_fallthru
        _
      // Predicated region
      $region21: #{resnet_conv_forward.3} parent=11 // pred_check
        %p317 = pneg %p219
      $region22: #{resnet_conv_forward.3} parent=11 // pred_check_branch
        %319 = sbr.rel (%p317) target = $region24
      $region23: #{resnet_conv_forward.3} parent=11 // pred_region
        _
      $region24: #{resnet_conv_forward.3} parent=11 // pred_fallthru
        _
      // Predicated region
      $region25: #{resnet_conv_forward.3} parent=11 // pred_check
        %p320 = pneg %p240
      $region26: #{resnet_conv_forward.3} parent=11 // pred_check_branch
        %322 = sbr.rel (%p320) target = $region28
      $region27: #{resnet_conv_forward.3} parent=11 // pred_region
        _
      $region28: #{resnet_conv_forward.3} parent=11 // pred_fallthru
        _
    $region12: #{resnet_conv_forward.3} parent=5 // pred_fallthru
      _
    %p323 = scmp.lt.s32.totalorder %s16, 8
    // Predicated region
    $region29: #{resnet_conv_forward.3} parent=5 // pred_check
      %p324 = pneg %p323
    $region30: #{resnet_conv_forward.3} parent=5 // pred_check_branch
      %326 = sbr.rel (%p324) target = $region32
    $region31: #{resnet_conv_forward.3} parent=5 // pred_region
      // Predicated region
      $region33: #{resnet_conv_forward.3} parent=31 // pred_check
        %p327 = pneg %p50
      $region34: #{resnet_conv_forward.3} parent=31 // pred_check_branch
        %329 = sbr.rel (%p327) target = $region36
      $region35: #{resnet_conv_forward.3} parent=31 // pred_region
        %s330 = smul.u32 4, %s24
        %p331 = scmp.lt.s32.totalorder %s23, 1
        %s332 = scalar_select %p331, %s23, 1
        %p333 = scmp.lt.s32.totalorder %s330, 15
        %s334 = scalar_select %p333, %s330, 15
        %s335 = smul.addr %s334, 2
        %s336 = smul.addr %s332, 32
        %s337 = sadd.s32 %s335, %s336
        %s338 = smul.addr %s337, 8
        %s339 = scalar_lea.vmem %s0, %s338
        %s340 = smul.u32 4, %s24
      $region36: #{resnet_conv_forward.3} parent=31 // pred_fallthru
        _
      // Predicated region
      $region37: #{resnet_conv_forward.3} parent=31 // pred_check
        %p341 = pneg %p86
      $region38: #{resnet_conv_forward.3} parent=31 // pred_check_branch
        %343 = sbr.rel (%p341) target = $region40
      $region39: #{resnet_conv_forward.3} parent=31 // pred_region
        %s344 = smul.u32 %s24, 4
        %s345 = ssub.s32 %s344, 1
        %p346 = scmp.gt.s32.totalorder %s345, 0
        %s347 = scalar_select %p346, %s345, 0
        %p348 = scmp.lt.s32.totalorder %s23, 1
        %s349 = scalar_select %p348, %s23, 1
        %p350 = scmp.lt.s32.totalorder %s347, 15
        %s351 = scalar_select %p350, %s347, 15
        %s352 = smul.addr %s351, 2
        %s353 = smul.addr %s349, 32
        %s354 = sadd.s32 %s352, %s353
        %s355 = smul.addr %s354, 8
        %s356 = scalar_lea.vmem %s1, %s355
        %s357 = smul.u32 %s24, 4
        %s358 = ssub.s32 %s357, 1
        %p359 = scmp.gt.s32.totalorder %s358, 0
        %s360 = scalar_select %p359, %s358, 0
      $region40: #{resnet_conv_forward.3} parent=31 // pred_fallthru
        _
      // Predicated region
      $region41: #{resnet_conv_forward.3} parent=31 // pred_check
        %p361 = pneg %p122
      $region42: #{resnet_conv_forward.3} parent=31 // pred_check_branch
        %363 = sbr.rel (%p361) target = $region44
      $region43: #{resnet_conv_forward.3} parent=31 // pred_region
        %s364 = sadd.s32 %s24, 1
        %s365 = smul.u32 %s364, 4
        %p366 = scmp.lt.s32.totalorder %s365, 15
        %s367 = scalar_select %p366, %s365, 15
        %p368 = scmp.lt.s32.totalorder %s23, 1
        %s369 = scalar_select %p368, %s23, 1
        %p370 = scmp.lt.s32.totalorder %s367, 15
        %s371 = scalar_select %p370, %s367, 15
        %s372 = smul.addr %s371, 2
        %s373 = smul.addr %s369, 32
        %s374 = sadd.s32 %s372, %s373
        %s375 = smul.addr %s374, 8
        %s376 = scalar_lea.vmem %s2, %s375
        %s377 = sadd.s32 %s24, 1
        %s378 = smul.u32 %s377, 4
        %p379 = scmp.lt.s32.totalorder %s378, 15
        %s380 = scalar_select %p379, %s378, 15
      $region44: #{resnet_conv_forward.3} parent=31 // pred_fallthru
        _
      // Predicated region
      $region45: #{resnet_conv_forward.3} parent=31 // pred_check
        %p381 = pneg %p150
      $region46: #{resnet_conv_forward.3} parent=31 // pred_check_branch
        %383 = sbr.rel (%p381) target = $region48
      $region47: #{resnet_conv_forward.3} parent=31 // pred_region
        %s384 = smul.u32 4, %s24
        %p385 = scmp.lt.s32.totalorder %s23, 1
        %s386 = scalar_select %p385, %s23, 1
        %p387 = scmp.lt.s32.totalorder %s384, 15
        %s388 = scalar_select %p387, %s384, 15
        %s389 = smul.addr %s388, 2
        %s390 = smul.addr %s386, 32
        %s391 = sadd.s32 %s389, %s390
        %s392 = smul.addr %s391, 8
        %s393 = scalar_lea.vmem %s3, %s392
        %s394 = smul.u32 4, %s24
      $region48: #{resnet_conv_forward.3} parent=31 // pred_fallthru
        _
    $region32: #{resnet_conv_forward.3} parent=5 // pred_fallthru
      _
    %p395 = scmp.le.s32.totalorder 1, %s16
    %p396 = scmp.lt.s32.totalorder %s16, 9
    %p397 = pnand %p395, %p396
    %p398 = pneg %p397
    // Predicated region
    $region49: #{resnet_conv_forward.3} parent=5 // pred_check
      _
    $region50: #{resnet_conv_forward.3} parent=5 // pred_check_branch
      %400 = sbr.rel (%p397) target = $region52
    $region51: #{resnet_conv_forward.3} parent=5 // pred_region
      %s401 = ssub.s32 %s16, 1
      %s402 = smul.u32 4, %s26
      %p403 = scmp.lt.s32.totalorder %s25, 1
      %s404 = scalar_select %p403, %s25, 1
      %p405 = scmp.lt.s32.totalorder %s402, 15
      %s406 = scalar_select %p405, %s402, 15
      %s407 = smul.addr %s406, 2
      %s408 = smul.addr %s404, 32
      %s409 = sadd.s32 %s407, %s408
      %s410 = smul.addr %s409, 8
      %s411 = scalar_lea.vmem %s0, %s410
      %p412 = pneg %p56
      %p413 = pneg %p53
      %s414 = smul.u32 %s26, 4
      %s415 = ssub.s32 %s414, 1
      %p416 = scmp.gt.s32.totalorder %s415, 0
      %s417 = scalar_select %p416, %s415, 0
      %p418 = scmp.lt.s32.totalorder %s25, 1
      %s419 = scalar_select %p418, %s25, 1
      %p420 = scmp.lt.s32.totalorder %s417, 15
      %s421 = scalar_select %p420, %s417, 15
      %s422 = smul.addr %s421, 2
      %s423 = smul.addr %s419, 32
      %s424 = sadd.s32 %s422, %s423
      %s425 = smul.addr %s424, 8
      %s426 = scalar_lea.vmem %s1, %s425
      %p427 = pneg %p92
      %p428 = pneg %p89
      %s429 = sadd.s32 %s26, 1
      %s430 = smul.u32 %s429, 4
      %p431 = scmp.lt.s32.totalorder %s430, 15
      %s432 = scalar_select %p431, %s430, 15
      %p433 = scmp.lt.s32.totalorder %s25, 1
      %s434 = scalar_select %p433, %s25, 1
      %p435 = scmp.lt.s32.totalorder %s432, 15
      %s436 = scalar_select %p435, %s432, 15
      %s437 = smul.addr %s436, 2
      %s438 = smul.addr %s434, 32
      %s439 = sadd.s32 %s437, %s438
      %s440 = smul.addr %s439, 8
      %s441 = scalar_lea.vmem %s2, %s440
      %p442 = pneg %p128
      %p443 = pneg %p125
      %s444 = smul.u32 4, %s26
      %p445 = scmp.lt.s32.totalorder %s25, 1
      %s446 = scalar_select %p445, %s25, 1
      %p447 = scmp.lt.s32.totalorder %s444, 15
      %s448 = scalar_select %p447, %s444, 15
      %s449 = smul.addr %s448, 2
      %s450 = smul.addr %s446, 32
      %s451 = sadd.s32 %s449, %s450
      %s452 = smul.addr %s451, 8
      %s453 = scalar_lea.vmem %s3, %s452
      %p454 = pneg %p156
      %p455 = pneg %p153
      %p456 = pneg %p177
      %p457 = pneg %p174
      %p458 = pneg %p198
      %p459 = pneg %p195
      %p460 = pneg %p219
      %p461 = pneg %p216
      %p462 = pneg %p240
      %p463 = pneg %p237
      %p464 = pneg %p268
      %p465 = pneg %p265
      %s466 = smul.u32 4, %s26
      %p467 = scmp.lt.s32.totalorder %s25, 1
      %s468 = scalar_select %p467, %s25, 1
      %p469 = scmp.lt.s32.totalorder %s466, 15
      %s470 = scalar_select %p469, %s466, 15
      %s471 = smul.addr %s470, 2
      %s472 = smul.addr %s468, 32
      %s473 = sadd.s32 %s471, %s472
      %s474 = smul.addr %s473, 8
      %s475 = scalar_lea.vmem %s8, %s474
      %p476 = pneg %p296
      %p477 = pneg %p293
      %p478 = scmp.lt.s32.totalorder %s25, 1
      %s479 = scalar_select %p478, %s25, 1
      %p480 = scmp.lt.s32.totalorder %s26, 3
      %s481 = scalar_select %p480, %s26, 3
      %s482 = smul.addr %s479, 4
      %s483 = sadd.s32 %s481, %s482
      %s484 = smul.addr %s483, 4
      %s485 = scalar_lea.vmem %s9, %s484
      %s486 = smul.u32 4, %s26
      %p487 = scmp.lt.s32.totalorder %s25, 1
      %s488 = scalar_select %p487, %s25, 1
      %p489 = scmp.lt.s32.totalorder %s486, 15
      %s490 = scalar_select %p489, %s486, 15
      %s491 = smul.addr %s490, 2
      %s492 = smul.addr %s488, 32
      %s493 = sadd.s32 %s491, %s492
      %s494 = smul.addr %s493, 8
      %s495 = scalar_lea.vmem %s0, %s494
      %s496 = smul.u32 4, %s26
      %s497 = smul.u32 %s26, 4
      %s498 = ssub.s32 %s497, 1
      %p499 = scmp.gt.s32.totalorder %s498, 0
      %s500 = scalar_select %p499, %s498, 0
      %p501 = scmp.lt.s32.totalorder %s25, 1
      %s502 = scalar_select %p501, %s25, 1
      %p503 = scmp.lt.s32.totalorder %s500, 15
      %s504 = scalar_select %p503, %s500, 15
      %s505 = smul.addr %s504, 2
      %s506 = smul.addr %s502, 32
      %s507 = sadd.s32 %s505, %s506
      %s508 = smul.addr %s507, 8
      %s509 = scalar_lea.vmem %s1, %s508
      %s510 = smul.u32 %s26, 4
      %s511 = ssub.s32 %s510, 1
      %p512 = scmp.gt.s32.totalorder %s511, 0
      %s513 = scalar_select %p512, %s511, 0
      %s514 = sadd.s32 %s26, 1
      %s515 = smul.u32 %s514, 4
      %p516 = scmp.lt.s32.totalorder %s515, 15
      %s517 = scalar_select %p516, %s515, 15
      %p518 = scmp.lt.s32.totalorder %s25, 1
      %s519 = scalar_select %p518, %s25, 1
      %p520 = scmp.lt.s32.totalorder %s517, 15
      %s521 = scalar_select %p520, %s517, 15
      %s522 = smul.addr %s521, 2
      %s523 = smul.addr %s519, 32
      %s524 = sadd.s32 %s522, %s523
      %s525 = smul.addr %s524, 8
      %s526 = scalar_lea.vmem %s2, %s525
      %s527 = sadd.s32 %s26, 1
      %s528 = smul.u32 %s527, 4
      %p529 = scmp.lt.s32.totalorder %s528, 15
      %s530 = scalar_select %p529, %s528, 15
      %s531 = smul.u32 4, %s26
      %p532 = scmp.lt.s32.totalorder %s25, 1
      %s533 = scalar_select %p532, %s25, 1
      %p534 = scmp.lt.s32.totalorder %s531, 15
      %s535 = scalar_select %p534, %s531, 15
      %s536 = smul.addr %s535, 2
      %s537 = smul.addr %s533, 32
      %s538 = sadd.s32 %s536, %s537
      %s539 = smul.addr %s538, 8
      %s540 = scalar_lea.vmem %s3, %s539
      %s541 = smul.u32 4, %s26
      %s542 = smul.u32 4, %s26
      %p543 = scmp.lt.s32.totalorder %s25, 1
      %s544 = scalar_select %p543, %s25, 1
      %p545 = scmp.lt.s32.totalorder %s542, 15
      %s546 = scalar_select %p545, %s542, 15
      %s547 = smul.addr %s546, 2
      %s548 = smul.addr %s544, 32
      %s549 = sadd.s32 %s547, %s548
      %s550 = smul.addr %s549, 8
      %s551 = scalar_lea.vmem %s8, %s550
      %s552 = smul.u32 4, %s26
      %p553 = scmp.lt.s32.totalorder %s25, 1
      %s554 = scalar_select %p553, %s25, 1
      %p555 = scmp.lt.s32.totalorder %s26, 3
      %s556 = scalar_select %p555, %s26, 3
      %s557 = smul.addr %s554, 4
      %s558 = sadd.s32 %s556, %s557
      %s559 = smul.addr %s558, 4
      %s560 = scalar_lea.vmem %s9, %s559
      %v561 = vld [vmem:[%s6] sm:$0x1]
      %v562 = vld [vmem:[%s7] sm:$0x1]
      %v563 = vld [vmem:[%s495] sm:$0xff]
      %v564 = vld [vmem:[%s495 + $0x8] sm:$0xff]
      %v565 = vld [vmem:[%s495 + $0x10] sm:$0xff]
      %v566 = vld [vmem:[%s495 + $0x18] sm:$0xff]
      %v567 = vld [vmem:[%s495 + $0x20] sm:$0xff]
      %v568 = vld [vmem:[%s495 + $0x28] sm:$0xff]
      %v569 = vld [vmem:[%s495 + $0x30] sm:$0xff]
      %v570 = vld [vmem:[%s495 + $0x38] sm:$0xff]
      %v572 = vlaneseq
      %v573 = vshrl.u32 %v572, 7
      %v574 = vsub.s32 0, %v573
      %v575 = vrot.slane %v561, %v574
      %v577 = vmul.f32 %v563, %v575
      %v578 = vmul.f32 %v564, %v575
      %v579 = vmul.f32 %v565, %v575
      %v580 = vmul.f32 %v566, %v575
      %v581 = vmul.f32 %v567, %v575
      %v582 = vmul.f32 %v568, %v575
      %v583 = vmul.f32 %v569, %v575
      %v584 = vmul.f32 %v570, %v575
      %v586 = vlaneseq
      %v587 = vshrl.u32 %v586, 7
      %v588 = vsub.s32 0, %v587
      %v589 = vrot.slane %v562, %v588
      %v591 = vadd.f32 %v577, %v589
      %v592 = vadd.f32 %v578, %v589
      %v593 = vadd.f32 %v579, %v589
      %v594 = vadd.f32 %v580, %v589
      %v595 = vadd.f32 %v581, %v589
      %v596 = vadd.f32 %v582, %v589
      %v597 = vadd.f32 %v583, %v589
      %v598 = vadd.f32 %v584, %v589
      %p599 = scmp.eq.s32.totalorder %s26, 0
      %v600 = vld [vmem:[%s509] sm:$0xff]
      %v601 = vld [vmem:[%s509 + $0x8] sm:$0xff]
      %v602 = vmul.f32 %v600, %v575
      %v603 = vmul.f32 %v601, %v575
      %v604 = vadd.f32 %v602, %v589
      %v605 = vadd.f32 %v603, %v589
      %s606 = scalar_select %p599, 1, 0
      %v607 = vstv %s606
      %vm608 = vcmp.eq.s32.totalorder %v607, 1
      %v609 = vsel %vm608, 0.0, %v604
      %v610 = vsel %vm608, 0.0, %v605
      %p611 = scmp.eq.s32.totalorder %s26, 3
      %v612 = vld [vmem:[%s526] sm:$0xff]
      %v613 = vld [vmem:[%s526 + $0x8] sm:$0xff]
      %v614 = vmul.f32 %v612, %v575
      %v615 = vmul.f32 %v613, %v575
      %v616 = vadd.f32 %v614, %v589
      %v617 = vadd.f32 %v615, %v589
      %s618 = scalar_select %p611, 1, 0
      %v619 = vstv %s618
      %vm620 = vcmp.eq.s32.totalorder %v619, 1
      %v621 = vsel %vm620, 0.0, %v616
      %v622 = vsel %vm620, 0.0, %v617
      %vm635 = vcmask 1040384
      %v636 = vrot.slane %v609, 7
      %v637 = vrot.slane %v610, 7
      %v638 = vsel %vm635, %v636, %v637
      %v639 = vrot.slane %v591, 7
      %v640 = vrot.slane %v592, 7
      %v641 = vsel %vm635, %v639, %v640
      %v642 = vrot.slane %v593, 7
      %v643 = vrot.slane %v594, 7
      %v644 = vsel %vm635, %v642, %v643
      %v645 = vrot.slane %v595, 7
      %v646 = vrot.slane %v596, 7
      %v647 = vsel %vm635, %v645, %v646
      %v648 = vrot.slane %v597, 7
      %v649 = vrot.slane %v598, 7
      %v650 = vsel %vm635, %v648, %v649
      %v651 = vrot.slane %v621, 7
      %v652 = vrot.slane %v622, 7
      %v653 = vsel %vm635, %v651, %v652
      %v672 = vsel %vm635, 0.0, %v636
      %v673 = vsel %vm635, 0.0, %v639
      %v674 = vsel %vm635, 0.0, %v642
      %v675 = vsel %vm635, 0.0, %v645
      %v676 = vsel %vm635, 0.0, %v648
      %v677 = vsel %vm635, 0.0, %v651
      %v678 = vsel %vm635, %v637, 0.0
      %v679 = vsel %vm635, %v640, 0.0
      %v680 = vsel %vm635, %v643, 0.0
      %v681 = vsel %vm635, %v646, 0.0
      %v682 = vsel %vm635, %v649, 0.0
      %v683 = vsel %vm635, %v652, 0.0
      %684 = vst [vmem:[#allocation2] sm:$0xff] %v672
      %685 = vst [vmem:[#allocation2 + $0x8] sm:$0xff] %v638
      %686 = vst [vmem:[#allocation2 + $0x10] sm:$0x3] %v678
      %687 = vst [vmem:[#allocation2 + $0x18] sm:$0xff] %v673
      %688 = vst [vmem:[#allocation2 + $0x20] sm:$0xff] %v641
      %689 = vst [vmem:[#allocation2 + $0x28] sm:$0x3] %v679
      %690 = vst [vmem:[#allocation2 + $0x30] sm:$0xff] %v674
      %691 = vst [vmem:[#allocation2 + $0x38] sm:$0xff] %v644
      %692 = vst [vmem:[#allocation2 + $0x40] sm:$0x3] %v680
      %693 = vst [vmem:[#allocation2 + $0x48] sm:$0xff] %v675
      %694 = vst [vmem:[#allocation2 + $0x50] sm:$0xff] %v647
      %695 = vst [vmem:[#allocation2 + $0x58] sm:$0x3] %v681
      %696 = vst [vmem:[#allocation2 + $0x60] sm:$0xff] %v676
      %697 = vst [vmem:[#allocation2 + $0x68] sm:$0xff] %v650
      %698 = vst [vmem:[#allocation2 + $0x70] sm:$0x3] %v682
      %699 = vst [vmem:[#allocation2 + $0x78] sm:$0xff] %v677
      %700 = vst [vmem:[#allocation2 + $0x80] sm:$0xff] %v653
      %701 = vst [vmem:[#allocation2 + $0x88] sm:$0x3] %v683
      %v702 = vld [vmem:[#allocation2] sm:$0xff]
      %v703 = vld [vmem:[#allocation2 + $0x8] sm:$0xff]
      %v704 = vld [vmem:[#allocation2 + $0x18] sm:$0xff]
      %v705 = vld [vmem:[#allocation2 + $0x20] sm:$0xff]
      %v706 = vld [vmem:[#allocation2 + $0x30] sm:$0xff]
      %v707 = vld [vmem:[#allocation2 + $0x38] sm:$0xff]
      %v708 = vld [vmem:[#allocation2 + $0x48] sm:$0xff]
      %v709 = vld [vmem:[#allocation2 + $0x50] sm:$0xff]
      %v710 = vld [vmem:[%s4] sm:$0xff]
      %v711 = vld [vmem:[%s4 + $0x8] sm:$0xff]
      %v712 = vld [vmem:[%s4 + $0x10] sm:$0xff]
      %v713 = vld [vmem:[%s4 + $0x18] sm:$0xff]
      %v714 = vld [vmem:[%s4 + $0x20] sm:$0xff]
      %v715 = vld [vmem:[%s4 + $0x28] sm:$0xff]
      %v716 = vld [vmem:[%s4 + $0x30] sm:$0xff]
      %v717 = vld [vmem:[%s4 + $0x38] sm:$0xff]
      %v718 = vld [vmem:[%s4 + $0x40] sm:$0xff]
      %v719 = vld [vmem:[%s4 + $0x48] sm:$0xff]
      %v720 = vld [vmem:[%s4 + $0x50] sm:$0xff]
      %v721 = vld [vmem:[%s4 + $0x58] sm:$0xff]
      %v722 = vld [vmem:[%s4 + $0x60] sm:$0xff]
      %v723 = vld [vmem:[%s4 + $0x68] sm:$0xff]
      %v724 = vld [vmem:[%s4 + $0x70] sm:$0xff]
      %v725 = vld [vmem:[%s4 + $0x78] sm:$0xff]
      %v726 = vld [vmem:[#allocation2 + $0x1] sm:$0xff]
      %v727 = vld [vmem:[#allocation2 + $0x9] sm:$0xff]
      %v728 = vld [vmem:[#allocation2 + $0x19] sm:$0xff]
      %v729 = vld [vmem:[#allocation2 + $0x21] sm:$0xff]
      %v730 = vld [vmem:[#allocation2 + $0x31] sm:$0xff]
      %v731 = vld [vmem:[#allocation2 + $0x39] sm:$0xff]
      %v732 = vld [vmem:[#allocation2 + $0x49] sm:$0xff]
      %v733 = vld [vmem:[#allocation2 + $0x51] sm:$0xff]
      %s734 = scalar_lea.vmem %s4, 128
      %v735 = vld [vmem:[%s734] sm:$0xff]
      %v736 = vld [vmem:[%s734 + $0x8] sm:$0xff]
      %v737 = vld [vmem:[%s734 + $0x10] sm:$0xff]
      %v738 = vld [vmem:[%s734 + $0x18] sm:$0xff]
      %v739 = vld [vmem:[%s734 + $0x20] sm:$0xff]
      %v740 = vld [vmem:[%s734 + $0x28] sm:$0xff]
      %v741 = vld [vmem:[%s734 + $0x30] sm:$0xff]
      %v742 = vld [vmem:[%s734 + $0x38] sm:$0xff]
      %v743 = vld [vmem:[%s734 + $0x40] sm:$0xff]
      %v744 = vld [vmem:[%s734 + $0x48] sm:$0xff]
      %v745 = vld [vmem:[%s734 + $0x50] sm:$0xff]
      %v746 = vld [vmem:[%s734 + $0x58] sm:$0xff]
      %v747 = vld [vmem:[%s734 + $0x60] sm:$0xff]
      %v748 = vld [vmem:[%s734 + $0x68] sm:$0xff]
      %v749 = vld [vmem:[%s734 + $0x70] sm:$0xff]
      %v750 = vld [vmem:[%s734 + $0x78] sm:$0xff]
      %751 = vmatprep.subr.mxu0 0.0
      %752 = vmatpush1.msra.mxu0 %v735
      %753 = vmatprep.subr.mxu0 0.0
      %754 = vmatpush1.msra.mxu0 %v736
      %755 = vmatprep.subr.mxu0 0.0
      %756 = vmatpush1.msra.mxu0 %v737
      %757 = vmatprep.subr.mxu0 0.0
      %758 = vmatpush1.msra.mxu0 %v738
      %759 = vmatprep.subr.mxu0 0.0
      %760 = vmatpush1.msra.mxu0 %v739
      %761 = vmatprep.subr.mxu0 0.0
      %762 = vmatpush1.msra.mxu0 %v740
      %763 = vmatprep.subr.mxu0 0.0
      %764 = vmatpush1.msra.mxu0 %v741
      %765 = vmatprep.subr.mxu0 0.0
      %766 = vmatpush1.msra.mxu0 %v742
      %767 = vmatprep.subr.mxu0 0.0
      %768 = vmatpush1.msra.mxu0 %v743
      %769 = vmatprep.subr.mxu0 0.0
      %770 = vmatpush1.msra.mxu0 %v744
      %771 = vmatprep.subr.mxu0 0.0
      %772 = vmatpush1.msra.mxu0 %v745
      %773 = vmatprep.subr.mxu0 0.0
      %774 = vmatpush1.msra.mxu0 %v746
      %775 = vmatprep.subr.mxu0 0.0
      %776 = vmatpush1.msra.mxu0 %v747
      %777 = vmatprep.subr.mxu0 0.0
      %778 = vmatpush1.msra.mxu0 %v748
      %779 = vmatprep.subr.mxu0 0.0
      %780 = vmatpush1.msra.mxu0 %v749
      %781 = vmatprep.subr.mxu0 0.0
      %782 = vmatpush1.msra.mxu0 %v750
      %783 = vmatprep.subr.mxu0 0.0
      %784 = vmatpush1.msra.mxu0 0.0
      %785 = vmatprep.subr.mxu0 0.0
      %786 = vmatpush1.msra.mxu0 0.0
      %787 = vmatprep.subr.mxu0 0.0
      %788 = vmatpush1.msra.mxu0 0.0
      %789 = vmatprep.subr.mxu0 0.0
      %790 = vmatpush1.msra.mxu0 0.0
      %791 = vmatprep.subr.mxu0 0.0
      %792 = vmatpush1.msra.mxu0 0.0
      %793 = vmatprep.subr.mxu0 0.0
      %794 = vmatpush1.msra.mxu0 0.0
      %795 = vmatprep.subr.mxu0 0.0
      %796 = vmatpush1.msra.mxu0 0.0
      %797 = vmatprep.subr.mxu0 0.0
      %798 = vmatpush1.msra.mxu0 0.0
      %799 = vmatprep.subr.mxu0 0.0
      %800 = vmatpush1.msra.mxu0 0.0
      %801 = vmatprep.subr.mxu0 0.0
      %802 = vmatpush1.msra.mxu0 0.0
      %803 = vmatprep.subr.mxu0 0.0
      %804 = vmatpush1.msra.mxu0 0.0
      %805 = vmatprep.subr.mxu0 0.0
      %806 = vmatpush1.msra.mxu0 0.0
      %807 = vmatprep.subr.mxu0 0.0
      %808 = vmatpush1.msra.mxu0 0.0
      %809 = vmatprep.subr.mxu0 0.0
      %810 = vmatpush1.msra.mxu0 0.0
      %811 = vmatprep.subr.mxu0 0.0
      %812 = vmatpush1.msra.mxu0 0.0
      %813 = vmatprep.subr.mxu0 0.0
      %814 = vmatpush1.msra.mxu0 0.0
      %815 = vmatprep.mubr.f32.mxu0 0.0
      %816 = vmatmul.mubr.f32.gmra.mrb[0].mxu0 %v726
      %v817 = vpop.f32.mrb[0].mxu0
      %v818 = vadd.f32 0.0, %v817
      %v819 = vpop.f32.mrb[0].mxu0
      %820 = vmatprep.mubr.f32.mxu0 0.0
      %821 = vmatmul.mubr.f32.gmra.mrb[0].mxu0 %v727
      %v822 = vpop.f32.mrb[0].mxu0
      %v823 = vadd.f32 0.0, %v822
      %v824 = vpop.f32.mrb[0].mxu0
      %825 = vmatprep.mubr.f32.mxu0 0.0
      %826 = vmatmul.mubr.f32.gmra.mrb[0].mxu0 %v728
      %v827 = vpop.f32.mrb[0].mxu0
      %v828 = vadd.f32 0.0, %v827
      %v829 = vpop.f32.mrb[0].mxu0
      %830 = vmatprep.mubr.f32.mxu0 0.0
      %831 = vmatmul.mubr.f32.gmra.mrb[0].mxu0 %v729
      %v832 = vpop.f32.mrb[0].mxu0
      %v833 = vadd.f32 0.0, %v832
      %v834 = vpop.f32.mrb[0].mxu0
      %835 = vmatprep.mubr.f32.mxu0 0.0
      %836 = vmatmul.mubr.f32.gmra.mrb[0].mxu0 %v730
      %v837 = vpop.f32.mrb[0].mxu0
      %v838 = vadd.f32 0.0, %v837
      %v839 = vpop.f32.mrb[0].mxu0
      %840 = vmatprep.mubr.f32.mxu0 0.0
      %841 = vmatmul.mubr.f32.gmra.mrb[0].mxu0 %v731
      %v842 = vpop.f32.mrb[0].mxu0
      %v843 = vadd.f32 0.0, %v842
      %v844 = vpop.f32.mrb[0].mxu0
      %845 = vmatprep.mubr.f32.mxu0 0.0
      %846 = vmatmul.mubr.f32.gmra.mrb[0].mxu0 %v732
      %v847 = vpop.f32.mrb[0].mxu0
      %v848 = vadd.f32 0.0, %v847
      %v849 = vpop.f32.mrb[0].mxu0
      %850 = vmatprep.mubr.f32.mxu0 0.0
      %851 = vmatmul.mubr.f32.gmra.mrb[0].mxu0 %v733
      %v852 = vpop.f32.mrb[0].mxu0
      %v853 = vadd.f32 0.0, %v852
      %v854 = vpop.f32.mrb[0].mxu0
      %855 = vdwg.mxu0
      %856 = vmatprep.subr.mxu0 0.0
      %857 = vmatpush1.msra.mxu0 %v710
      %858 = vmatprep.subr.mxu0 0.0
      %859 = vmatpush1.msra.mxu0 %v711
      %860 = vmatprep.subr.mxu0 0.0
      %861 = vmatpush1.msra.mxu0 %v712
      %862 = vmatprep.subr.mxu0 0.0
      %863 = vmatpush1.msra.mxu0 %v713
      %864 = vmatprep.subr.mxu0 0.0
      %865 = vmatpush1.msra.mxu0 %v714
      %866 = vmatprep.subr.mxu0 0.0
      %867 = vmatpush1.msra.mxu0 %v715
      %868 = vmatprep.subr.mxu0 0.0
      %869 = vmatpush1.msra.mxu0 %v716
      %870 = vmatprep.subr.mxu0 0.0
      %871 = vmatpush1.msra.mxu0 %v717
      %872 = vmatprep.subr.mxu0 0.0
      %873 = vmatpush1.msra.mxu0 %v718
      %874 = vmatprep.subr.mxu0 0.0
      %875 = vmatpush1.msra.mxu0 %v719
      %876 = vmatprep.subr.mxu0 0.0
      %877 = vmatpush1.msra.mxu0 %v720
      %878 = vmatprep.subr.mxu0 0.0
      %879 = vmatpush1.msra.mxu0 %v721
      %880 = vmatprep.subr.mxu0 0.0
      %881 = vmatpush1.msra.mxu0 %v722
      %882 = vmatprep.subr.mxu0 0.0
      %883 = vmatpush1.msra.mxu0 %v723
      %884 = vmatprep.subr.mxu0 0.0
      %885 = vmatpush1.msra.mxu0 %v724
      %886 = vmatprep.subr.mxu0 0.0
      %887 = vmatpush1.msra.mxu0 %v725
      %888 = vmatprep.subr.mxu0 0.0
      %889 = vmatpush1.msra.mxu0 0.0
      %890 = vmatprep.subr.mxu0 0.0
      %891 = vmatpush1.msra.mxu0 0.0
      %892 = vmatprep.subr.mxu0 0.0
      %893 = vmatpush1.msra.mxu0 0.0
      %894 = vmatprep.subr.mxu0 0.0
      %895 = vmatpush1.msra.mxu0 0.0
      %896 = vmatprep.subr.mxu0 0.0
      %897 = vmatpush1.msra.mxu0 0.0
      %898 = vmatprep.subr.mxu0 0.0
      %899 = vmatpush1.msra.mxu0 0.0
      %900 = vmatprep.subr.mxu0 0.0
      %901 = vmatpush1.msra.mxu0 0.0
      %902 = vmatprep.subr.mxu0 0.0
      %903 = vmatpush1.msra.mxu0 0.0
      %904 = vmatprep.subr.mxu0 0.0
      %905 = vmatpush1.msra.mxu0 0.0
      %906 = vmatprep.subr.mxu0 0.0
      %907 = vmatpush1.msra.mxu0 0.0
      %908 = vmatprep.subr.mxu0 0.0
      %909 = vmatpush1.msra.mxu0 0.0
      %910 = vmatprep.subr.mxu0 0.0
      %911 = vmatpush1.msra.mxu0 0.0
      %912 = vmatprep.subr.mxu0 0.0
      %913 = vmatpush1.msra.mxu0 0.0
      %914 = vmatprep.subr.mxu0 0.0
      %915 = vmatpush1.msra.mxu0 0.0
      %916 = vmatprep.subr.mxu0 0.0
      %917 = vmatpush1.msra.mxu0 0.0
      %918 = vmatprep.subr.mxu0 0.0
      %919 = vmatpush1.msra.mxu0 0.0
      %920 = vmatprep.mubr.f32.mxu0 0.0
      %921 = vmatmul.mubr.f32.gmra.mrb[0].mxu0 %v702
      %v922 = vpop.f32.mrb[0].mxu0
      %v923 = vadd.f32 %v818, %v922
      %v924 = vpop.f32.mrb[0].mxu0
      %925 = vmatprep.mubr.f32.mxu0 0.0
      %926 = vmatmul.mubr.f32.gmra.mrb[0].mxu0 %v703
      %v927 = vpop.f32.mrb[0].mxu0
      %v928 = vadd.f32 %v823, %v927
      %v929 = vpop.f32.mrb[0].mxu0
      %930 = vmatprep.mubr.f32.mxu0 0.0
      %931 = vmatmul.mubr.f32.gmra.mrb[0].mxu0 %v704
      %v932 = vpop.f32.mrb[0].mxu0
      %v933 = vadd.f32 %v828, %v932
      %v934 = vpop.f32.mrb[0].mxu0
      %935 = vmatprep.mubr.f32.mxu0 0.0
      %936 = vmatmul.mubr.f32.gmra.mrb[0].mxu0 %v705
      %v937 = vpop.f32.mrb[0].mxu0
      %v938 = vadd.f32 %v833, %v937
      %v939 = vpop.f32.mrb[0].mxu0
      %940 = vmatprep.mubr.f32.mxu0 0.0
      %941 = vmatmul.mubr.f32.gmra.mrb[0].mxu0 %v706
      %v942 = vpop.f32.mrb[0].mxu0
      %v943 = vadd.f32 %v838, %v942
      %v944 = vpop.f32.mrb[0].mxu0
      %945 = vmatprep.mubr.f32.mxu0 0.0
      %946 = vmatmul.mubr.f32.gmra.mrb[0].mxu0 %v707
      %v947 = vpop.f32.mrb[0].mxu0
      %v948 = vadd.f32 %v843, %v947
      %v949 = vpop.f32.mrb[0].mxu0
      %950 = vmatprep.mubr.f32.mxu0 0.0
      %951 = vmatmul.mubr.f32.gmra.mrb[0].mxu0 %v708
      %v952 = vpop.f32.mrb[0].mxu0
      %v953 = vadd.f32 %v848, %v952
      %v954 = vpop.f32.mrb[0].mxu0
      %955 = vmatprep.mubr.f32.mxu0 0.0
      %956 = vmatmul.mubr.f32.gmra.mrb[0].mxu0 %v709
      %v957 = vpop.f32.mrb[0].mxu0
      %v958 = vadd.f32 %v853, %v957
      %v959 = vpop.f32.mrb[0].mxu0
      %960 = vdwg.mxu0
      %v961 = vld [vmem:[#allocation2 + $0x2] sm:$0xff]
      %v962 = vld [vmem:[#allocation2 + $0xa] sm:$0xff]
      %v963 = vld [vmem:[#allocation2 + $0x1a] sm:$0xff]
      %v964 = vld [vmem:[#allocation2 + $0x22] sm:$0xff]
      %v965 = vld [vmem:[#allocation2 + $0x32] sm:$0xff]
      %v966 = vld [vmem:[#allocation2 + $0x3a] sm:$0xff]
      %v967 = vld [vmem:[#allocation2 + $0x4a] sm:$0xff]
      %v968 = vld [vmem:[#allocation2 + $0x52] sm:$0xff]
      %s969 = scalar_lea.vmem %s4, 256
      %v970 = vld [vmem:[%s969] sm:$0xff]
      %v971 = vld [vmem:[%s969 + $0x8] sm:$0xff]
      %v972 = vld [vmem:[%s969 + $0x10] sm:$0xff]
      %v973 = vld [vmem:[%s969 + $0x18] sm:$0xff]
      %v974 = vld [vmem:[%s969 + $0x20] sm:$0xff]
      %v975 = vld [vmem:[%s969 + $0x28] sm:$0xff]
      %v976 = vld [vmem:[%s969 + $0x30] sm:$0xff]
      %v977 = vld [vmem:[%s969 + $0x38] sm:$0xff]
      %v978 = vld [vmem:[%s969 + $0x40] sm:$0xff]
      %v979 = vld [vmem:[%s969 + $0x48] sm:$0xff]
      %v980 = vld [vmem:[%s969 + $0x50] sm:$0xff]
      %v981 = vld [vmem:[%s969 + $0x58] sm:$0xff]
      %v982 = vld [vmem:[%s969 + $0x60] sm:$0xff]
      %v983 = vld [vmem:[%s969 + $0x68] sm:$0xff]
      %v984 = vld [vmem:[%s969 + $0x70] sm:$0xff]
      %v985 = vld [vmem:[%s969 + $0x78] sm:$0xff]
      %986 = vmatprep.subr.mxu0 0.0
      %987 = vmatpush1.msra.mxu0 %v970
      %988 = vmatprep.subr.mxu0 0.0
      %989 = vmatpush1.msra.mxu0 %v971
      %990 = vmatprep.subr.mxu0 0.0
      %991 = vmatpush1.msra.mxu0 %v972
      %992 = vmatprep.subr.mxu0 0.0
      %993 = vmatpush1.msra.mxu0 %v973
      %994 = vmatprep.subr.mxu0 0.0
      %995 = vmatpush1.msra.mxu0 %v974
      %996 = vmatprep.subr.mxu0 0.0
      %997 = vmatpush1.msra.mxu0 %v975
      %998 = vmatprep.subr.mxu0 0.0
      %999 = vmatpush1.msra.mxu0 %v976
      %1000 = vmatprep.subr.mxu0 0.0
      %1001 = vmatpush1.msra.mxu0 %v977
      %1002 = vmatprep.subr.mxu0 0.0
      %1003 = vmatpush1.msra.mxu0 %v978
      %1004 = vmatprep.subr.mxu0 0.0
      %1005 = vmatpush1.msra.mxu0 %v979
      %1006 = vmatprep.subr.mxu0 0.0
      %1007 = vmatpush1.msra.mxu0 %v980
      %1008 = vmatprep.subr.mxu0 0.0
      %1009 = vmatpush1.msra.mxu0 %v981
      %1010 = vmatprep.subr.mxu0 0.0
      %1011 = vmatpush1.msra.mxu0 %v982
      %1012 = vmatprep.subr.mxu0 0.0
      %1013 = vmatpush1.msra.mxu0 %v983
      %1014 = vmatprep.subr.mxu0 0.0
      %1015 = vmatpush1.msra.mxu0 %v984
      %1016 = vmatprep.subr.mxu0 0.0
      %1017 = vmatpush1.msra.mxu0 %v985
      %1018 = vmatprep.subr.mxu0 0.0
      %1019 = vmatpush1.msra.mxu0 0.0
      %1020 = vmatprep.subr.mxu0 0.0
      %1021 = vmatpush1.msra.mxu0 0.0
      %1022 = vmatprep.subr.mxu0 0.0
      %1023 = vmatpush1.msra.mxu0 0.0
      %1024 = vmatprep.subr.mxu0 0.0
      %1025 = vmatpush1.msra.mxu0 0.0
      %1026 = vmatprep.subr.mxu0 0.0
      %1027 = vmatpush1.msra.mxu0 0.0
      %1028 = vmatprep.subr.mxu0 0.0
      %1029 = vmatpush1.msra.mxu0 0.0
      %1030 = vmatprep.subr.mxu0 0.0
      %1031 = vmatpush1.msra.mxu0 0.0
      %1032 = vmatprep.subr.mxu0 0.0
      %1033 = vmatpush1.msra.mxu0 0.0
      %1034 = vmatprep.subr.mxu0 0.0
      %1035 = vmatpush1.msra.mxu0 0.0
      %1036 = vmatprep.subr.mxu0 0.0
      %1037 = vmatpush1.msra.mxu0 0.0
      %1038 = vmatprep.subr.mxu0 0.0
      %1039 = vmatpush1.msra.mxu0 0.0
      %1040 = vmatprep.subr.mxu0 0.0
      %1041 = vmatpush1.msra.mxu0 0.0
      %1042 = vmatprep.subr.mxu0 0.0
      %1043 = vmatpush1.msra.mxu0 0.0
      %1044 = vmatprep.subr.mxu0 0.0
      %1045 = vmatpush1.msra.mxu0 0.0
      %1046 = vmatprep.subr.mxu0 0.0
      %1047 = vmatpush1.msra.mxu0 0.0
      %1048 = vmatprep.subr.mxu0 0.0
      %1049 = vmatpush1.msra.mxu0 0.0
      %1050 = vmatprep.mubr.f32.mxu0 0.0
      %1051 = vmatmul.mubr.f32.gmra.mrb[0].mxu0 %v961
      %v1052 = vpop.f32.mrb[0].mxu0
      %v1053 = vadd.f32 0.0, %v1052
      %v1054 = vpop.f32.mrb[0].mxu0
      %1055 = vmatprep.mubr.f32.mxu0 0.0
      %1056 = vmatmul.mubr.f32.gmra.mrb[0].mxu0 %v962
      %v1057 = vpop.f32.mrb[0].mxu0
      %v1058 = vadd.f32 0.0, %v1057
      %v1059 = vpop.f32.mrb[0].mxu0
      %1060 = vmatprep.mubr.f32.mxu0 0.0
      %1061 = vmatmul.mubr.f32.gmra.mrb[0].mxu0 %v963
      %v1062 = vpop.f32.mrb[0].mxu0
      %v1063 = vadd.f32 0.0, %v1062
      %v1064 = vpop.f32.mrb[0].mxu0
      %1065 = vmatprep.mubr.f32.mxu0 0.0
      %1066 = vmatmul.mubr.f32.gmra.mrb[0].mxu0 %v964
      %v1067 = vpop.f32.mrb[0].mxu0
      %v1068 = vadd.f32 0.0, %v1067
      %v1069 = vpop.f32.mrb[0].mxu0
      %1070 = vmatprep.mubr.f32.mxu0 0.0
      %1071 = vmatmul.mubr.f32.gmra.mrb[0].mxu0 %v965
      %v1072 = vpop.f32.mrb[0].mxu0
      %v1073 = vadd.f32 0.0, %v1072
      %v1074 = vpop.f32.mrb[0].mxu0
      %1075 = vmatprep.mubr.f32.mxu0 0.0
      %1076 = vmatmul.mubr.f32.gmra.mrb[0].mxu0 %v966
      %v1077 = vpop.f32.mrb[0].mxu0
      %v1078 = vadd.f32 0.0, %v1077
      %v1079 = vpop.f32.mrb[0].mxu0
      %1080 = vmatprep.mubr.f32.mxu0 0.0
      %1081 = vmatmul.mubr.f32.gmra.mrb[0].mxu0 %v967
      %v1082 = vpop.f32.mrb[0].mxu0
      %v1083 = vadd.f32 0.0, %v1082
      %v1084 = vpop.f32.mrb[0].mxu0
      %1085 = vmatprep.mubr.f32.mxu0 0.0
      %1086 = vmatmul.mubr.f32.gmra.mrb[0].mxu0 %v968
      %v1087 = vpop.f32.mrb[0].mxu0
      %v1088 = vadd.f32 0.0, %v1087
      %v1089 = vpop.f32.mrb[0].mxu0
      %1090 = vdwg.mxu0
      %v1091 = vadd.f32 %v923, %v1053
      %v1092 = vadd.f32 %v928, %v1058
      %v1093 = vadd.f32 %v933, %v1063
      %v1094 = vadd.f32 %v938, %v1068
      %v1095 = vadd.f32 %v943, %v1073
      %v1096 = vadd.f32 %v948, %v1078
      %v1097 = vadd.f32 %v953, %v1083
      %v1098 = vadd.f32 %v958, %v1088
      %s1099 = scalar_lea.vmem [#allocation2], 24
      %v1100 = vld [vmem:[%s1099] sm:$0xff]
      %v1101 = vld [vmem:[%s1099 + $0x8] sm:$0xff]
      %v1102 = vld [vmem:[%s1099 + $0x18] sm:$0xff]
      %v1103 = vld [vmem:[%s1099 + $0x20] sm:$0xff]
      %v1104 = vld [vmem:[%s1099 + $0x30] sm:$0xff]
      %v1105 = vld [vmem:[%s1099 + $0x38] sm:$0xff]
      %v1106 = vld [vmem:[%s1099 + $0x48] sm:$0xff]
      %v1107 = vld [vmem:[%s1099 + $0x50] sm:$0xff]
      %s1108 = scalar_lea.vmem %s4, 384
      %v1109 = vld [vmem:[%s1108] sm:$0xff]
      %v1110 = vld [vmem:[%s1108 + $0x8] sm:$0xff]
      %v1111 = vld [vmem:[%s1108 + $0x10] sm:$0xff]
      %v1112 = vld [vmem:[%s1108 + $0x18] sm:$0xff]
      %v1113 = vld [vmem:[%s1108 + $0x20] sm:$0xff]
      %v1114 = vld [vmem:[%s1108 + $0x28] sm:$0xff]
      %v1115 = vld [vmem:[%s1108 + $0x30] sm:$0xff]
      %v1116 = vld [vmem:[%s1108 + $0x38] sm:$0xff]
      %v1117 = vld [vmem:[%s1108 + $0x40] sm:$0xff]
      %v1118 = vld [vmem:[%s1108 + $0x48] sm:$0xff]
      %v1119 = vld [vmem:[%s1108 + $0x50] sm:$0xff]
      %v1120 = vld [vmem:[%s1108 + $0x58] sm:$0xff]
      %v1121 = vld [vmem:[%s1108 + $0x60] sm:$0xff]
      %v1122 = vld [vmem:[%s1108 + $0x68] sm:$0xff]
      %v1123 = vld [vmem:[%s1108 + $0x70] sm:$0xff]
      %v1124 = vld [vmem:[%s1108 + $0x78] sm:$0xff]
      %1125 = vmatprep.subr.mxu0 0.0
      %1126 = vmatpush1.msra.mxu0 %v1109
      %1127 = vmatprep.subr.mxu0 0.0
      %1128 = vmatpush1.msra.mxu0 %v1110
      %1129 = vmatprep.subr.mxu0 0.0
      %1130 = vmatpush1.msra.mxu0 %v1111
      %1131 = vmatprep.subr.mxu0 0.0
      %1132 = vmatpush1.msra.mxu0 %v1112
      %1133 = vmatprep.subr.mxu0 0.0
      %1134 = vmatpush1.msra.mxu0 %v1113
      %1135 = vmatprep.subr.mxu0 0.0
      %1136 = vmatpush1.msra.mxu0 %v1114
      %1137 = vmatprep.subr.mxu0 0.0
      %1138 = vmatpush1.msra.mxu0 %v1115
      %1139 = vmatprep.subr.mxu0 0.0
      %1140 = vmatpush1.msra.mxu0 %v1116
      %1141 = vmatprep.subr.mxu0 0.0
      %1142 = vmatpush1.msra.mxu0 %v1117
      %1143 = vmatprep.subr.mxu0 0.0
      %1144 = vmatpush1.msra.mxu0 %v1118
      %1145 = vmatprep.subr.mxu0 0.0
      %1146 = vmatpush1.msra.mxu0 %v1119
      %1147 = vmatprep.subr.mxu0 0.0
      %1148 = vmatpush1.msra.mxu0 %v1120
      %1149 = vmatprep.subr.mxu0 0.0
      %1150 = vmatpush1.msra.mxu0 %v1121
      %1151 = vmatprep.subr.mxu0 0.0
      %1152 = vmatpush1.msra.mxu0 %v1122
      %1153 = vmatprep.subr.mxu0 0.0
      %1154 = vmatpush1.msra.mxu0 %v1123
      %1155 = vmatprep.subr.mxu0 0.0
      %1156 = vmatpush1.msra.mxu0 %v1124
      %1157 = vmatprep.subr.mxu0 0.0
      %1158 = vmatpush1.msra.mxu0 0.0
      %1159 = vmatprep.subr.mxu0 0.0
      %1160 = vmatpush1.msra.mxu0 0.0
      %1161 = vmatprep.subr.mxu0 0.0
      %1162 = vmatpush1.msra.mxu0 0.0
      %1163 = vmatprep.subr.mxu0 0.0
      %1164 = vmatpush1.msra.mxu0 0.0
      %1165 = vmatprep.subr.mxu0 0.0
      %1166 = vmatpush1.msra.mxu0 0.0
      %1167 = vmatprep.subr.mxu0 0.0
      %1168 = vmatpush1.msra.mxu0 0.0
      %1169 = vmatprep.subr.mxu0 0.0
      %1170 = vmatpush1.msra.mxu0 0.0
      %1171 = vmatprep.subr.mxu0 0.0
      %1172 = vmatpush1.msra.mxu0 0.0
      %1173 = vmatprep.subr.mxu0 0.0
      %1174 = vmatpush1.msra.mxu0 0.0
      %1175 = vmatprep.subr.mxu0 0.0
      %1176 = vmatpush1.msra.mxu0 0.0
      %1177 = vmatprep.subr.mxu0 0.0
      %1178 = vmatpush1.msra.mxu0 0.0
      %1179 = vmatprep.subr.mxu0 0.0
      %1180 = vmatpush1.msra.mxu0 0.0
      %1181 = vmatprep.subr.mxu0 0.0
      %1182 = vmatpush1.msra.mxu0 0.0
      %1183 = vmatprep.subr.mxu0 0.0
      %1184 = vmatpush1.msra.mxu0 0.0
      %1185 = vmatprep.subr.mxu0 0.0
      %1186 = vmatpush1.msra.mxu0 0.0
      %1187 = vmatprep.subr.mxu0 0.0
      %1188 = vmatpush1.msra.mxu0 0.0
      %1189 = vmatprep.mubr.f32.mxu0 0.0
      %1190 = vmatmul.mubr.f32.gmra.mrb[0].mxu0 %v1100
      %v1191 = vpop.f32.mrb[0].mxu0
      %v1192 = vadd.f32 0.0, %v1191
      %v1193 = vpop.f32.mrb[0].mxu0
      %1194 = vmatprep.mubr.f32.mxu0 0.0
      %1195 = vmatmul.mubr.f32.gmra.mrb[0].mxu0 %v1101
      %v1196 = vpop.f32.mrb[0].mxu0
      %v1197 = vadd.f32 0.0, %v1196
      %v1198 = vpop.f32.mrb[0].mxu0
      %1199 = vmatprep.mubr.f32.mxu0 0.0
      %1200 = vmatmul.mubr.f32.gmra.mrb[0].mxu0 %v1102
      %v1201 = vpop.f32.mrb[0].mxu0
      %v1202 = vadd.f32 0.0, %v1201
      %v1203 = vpop.f32.mrb[0].mxu0
      %1204 = vmatprep.mubr.f32.mxu0 0.0
      %1205 = vmatmul.mubr.f32.gmra.mrb[0].mxu0 %v1103
      %v1206 = vpop.f32.mrb[0].mxu0
      %v1207 = vadd.f32 0.0, %v1206
      %v1208 = vpop.f32.mrb[0].mxu0
      %1209 = vmatprep.mubr.f32.mxu0 0.0
      %1210 = vmatmul.mubr.f32.gmra.mrb[0].mxu0 %v1104
      %v1211 = vpop.f32.mrb[0].mxu0
      %v1212 = vadd.f32 0.0, %v1211
      %v1213 = vpop.f32.mrb[0].mxu0
      %1214 = vmatprep.mubr.f32.mxu0 0.0
      %1215 = vmatmul.mubr.f32.gmra.mrb[0].mxu0 %v1105
      %v1216 = vpop.f32.mrb[0].mxu0
      %v1217 = vadd.f32 0.0, %v1216
      %v1218 = vpop.f32.mrb[0].mxu0
      %1219 = vmatprep.mubr.f32.mxu0 0.0
      %1220 = vmatmul.mubr.f32.gmra.mrb[0].mxu0 %v1106
      %v1221 = vpop.f32.mrb[0].mxu0
      %v1222 = vadd.f32 0.0, %v1221
      %v1223 = vpop.f32.mrb[0].mxu0
      %1224 = vmatprep.mubr.f32.mxu0 0.0
      %1225 = vmatmul.mubr.f32.gmra.mrb[0].mxu0 %v1107
      %v1226 = vpop.f32.mrb[0].mxu0
      %v1227 = vadd.f32 0.0, %v1226
      %v1228 = vpop.f32.mrb[0].mxu0
      %1229 = vdwg.mxu0
      %v1230 = vadd.f32 %v1091, %v1192
      %v1231 = vadd.f32 %v1092, %v1197
      %v1232 = vadd.f32 %v1093, %v1202
      %v1233 = vadd.f32 %v1094, %v1207
      %v1234 = vadd.f32 %v1095, %v1212
      %v1235 = vadd.f32 %v1096, %v1217
      %v1236 = vadd.f32 %v1097, %v1222
      %v1237 = vadd.f32 %v1098, %v1227
      %v1238 = vld [vmem:[%s1099 + $0x1] sm:$0xff]
      %v1239 = vld [vmem:[%s1099 + $0x9] sm:$0xff]
      %v1240 = vld [vmem:[%s1099 + $0x19] sm:$0xff]
      %v1241 = vld [vmem:[%s1099 + $0x21] sm:$0xff]
      %v1242 = vld [vmem:[%s1099 + $0x31] sm:$0xff]
      %v1243 = vld [vmem:[%s1099 + $0x39] sm:$0xff]
      %v1244 = vld [vmem:[%s1099 + $0x49] sm:$0xff]
      %v1245 = vld [vmem:[%s1099 + $0x51] sm:$0xff]
      %s1246 = scalar_lea.vmem %s4, 512
      %v1247 = vld [vmem:[%s1246] sm:$0xff]
      %v1248 = vld [vmem:[%s1246 + $0x8] sm:$0xff]
      %v1249 = vld [vmem:[%s1246 + $0x10] sm:$0xff]
      %v1250 = vld [vmem:[%s1246 + $0x18] sm:$0xff]
      %v1251 = vld [vmem:[%s1246 + $0x20] sm:$0xff]
      %v1252 = vld [vmem:[%s1246 + $0x28] sm:$0xff]
      %v1253 = vld [vmem:[%s1246 + $0x30] sm:$0xff]
      %v1254 = vld [vmem:[%s1246 + $0x38] sm:$0xff]
      %v1255 = vld [vmem:[%s1246 + $0x40] sm:$0xff]
      %v1256 = vld [vmem:[%s1246 + $0x48] sm:$0xff]
      %v1257 = vld [vmem:[%s1246 + $0x50] sm:$0xff]
      %v1258 = vld [vmem:[%s1246 + $0x58] sm:$0xff]
      %v1259 = vld [vmem:[%s1246 + $0x60] sm:$0xff]
      %v1260 = vld [vmem:[%s1246 + $0x68] sm:$0xff]
      %v1261 = vld [vmem:[%s1246 + $0x70] sm:$0xff]
      %v1262 = vld [vmem:[%s1246 + $0x78] sm:$0xff]
      %1263 = vmatprep.subr.mxu0 0.0
      %1264 = vmatpush1.msra.mxu0 %v1247
      %1265 = vmatprep.subr.mxu0 0.0
      %1266 = vmatpush1.msra.mxu0 %v1248
      %1267 = vmatprep.subr.mxu0 0.0
      %1268 = vmatpush1.msra.mxu0 %v1249
      %1269 = vmatprep.subr.mxu0 0.0
      %1270 = vmatpush1.msra.mxu0 %v1250
      %1271 = vmatprep.subr.mxu0 0.0
      %1272 = vmatpush1.msra.mxu0 %v1251
      %1273 = vmatprep.subr.mxu0 0.0
      %1274 = vmatpush1.msra.mxu0 %v1252
      %1275 = vmatprep.subr.mxu0 0.0
      %1276 = vmatpush1.msra.mxu0 %v1253
      %1277 = vmatprep.subr.mxu0 0.0
      %1278 = vmatpush1.msra.mxu0 %v1254
      %1279 = vmatprep.subr.mxu0 0.0
      %1280 = vmatpush1.msra.mxu0 %v1255
      %1281 = vmatprep.subr.mxu0 0.0
      %1282 = vmatpush1.msra.mxu0 %v1256
      %1283 = vmatprep.subr.mxu0 0.0
      %1284 = vmatpush1.msra.mxu0 %v1257
      %1285 = vmatprep.subr.mxu0 0.0
      %1286 = vmatpush1.msra.mxu0 %v1258
      %1287 = vmatprep.subr.mxu0 0.0
      %1288 = vmatpush1.msra.mxu0 %v1259
      %1289 = vmatprep.subr.mxu0 0.0
      %1290 = vmatpush1.msra.mxu0 %v1260
      %1291 = vmatprep.subr.mxu0 0.0
      %1292 = vmatpush1.msra.mxu0 %v1261
      %1293 = vmatprep.subr.mxu0 0.0
      %1294 = vmatpush1.msra.mxu0 %v1262
      %1295 = vmatprep.subr.mxu0 0.0
      %1296 = vmatpush1.msra.mxu0 0.0
      %1297 = vmatprep.subr.mxu0 0.0
      %1298 = vmatpush1.msra.mxu0 0.0
      %1299 = vmatprep.subr.mxu0 0.0
      %1300 = vmatpush1.msra.mxu0 0.0
      %1301 = vmatprep.subr.mxu0 0.0
      %1302 = vmatpush1.msra.mxu0 0.0
      %1303 = vmatprep.subr.mxu0 0.0
      %1304 = vmatpush1.msra.mxu0 0.0
      %1305 = vmatprep.subr.mxu0 0.0
      %1306 = vmatpush1.msra.mxu0 0.0
      %1307 = vmatprep.subr.mxu0 0.0
      %1308 = vmatpush1.msra.mxu0 0.0
      %1309 = vmatprep.subr.mxu0 0.0
      %1310 = vmatpush1.msra.mxu0 0.0
      %1311 = vmatprep.subr.mxu0 0.0
      %1312 = vmatpush1.msra.mxu0 0.0
      %1313 = vmatprep.subr.mxu0 0.0
      %1314 = vmatpush1.msra.mxu0 0.0
      %1315 = vmatprep.subr.mxu0 0.0
      %1316 = vmatpush1.msra.mxu0 0.0
      %1317 = vmatprep.subr.mxu0 0.0
      %1318 = vmatpush1.msra.mxu0 0.0
      %1319 = vmatprep.subr.mxu0 0.0
      %1320 = vmatpush1.msra.mxu0 0.0
      %1321 = vmatprep.subr.mxu0 0.0
      %1322 = vmatpush1.msra.mxu0 0.0
      %1323 = vmatprep.subr.mxu0 0.0
      %1324 = vmatpush1.msra.mxu0 0.0
      %1325 = vmatprep.subr.mxu0 0.0
      %1326 = vmatpush1.msra.mxu0 0.0
      %1327 = vmatprep.mubr.f32.mxu0 0.0
      %1328 = vmatmul.mubr.f32.gmra.mrb[0].mxu0 %v1238
      %v1329 = vpop.f32.mrb[0].mxu0
      %v1330 = vadd.f32 0.0, %v1329
      %v1331 = vpop.f32.mrb[0].mxu0
      %1332 = vmatprep.mubr.f32.mxu0 0.0
      %1333 = vmatmul.mubr.f32.gmra.mrb[0].mxu0 %v1239
      %v1334 = vpop.f32.mrb[0].mxu0
      %v1335 = vadd.f32 0.0, %v1334
      %v1336 = vpop.f32.mrb[0].mxu0
      %1337 = vmatprep.mubr.f32.mxu0 0.0
      %1338 = vmatmul.mubr.f32.gmra.mrb[0].mxu0 %v1240
      %v1339 = vpop.f32.mrb[0].mxu0
      %v1340 = vadd.f32 0.0, %v1339
      %v1341 = vpop.f32.mrb[0].mxu0
      %1342 = vmatprep.mubr.f32.mxu0 0.0
      %1343 = vmatmul.mubr.f32.gmra.mrb[0].mxu0 %v1241
      %v1344 = vpop.f32.mrb[0].mxu0
      %v1345 = vadd.f32 0.0, %v1344
      %v1346 = vpop.f32.mrb[0].mxu0
      %1347 = vmatprep.mubr.f32.mxu0 0.0
      %1348 = vmatmul.mubr.f32.gmra.mrb[0].mxu0 %v1242
      %v1349 = vpop.f32.mrb[0].mxu0
      %v1350 = vadd.f32 0.0, %v1349
      %v1351 = vpop.f32.mrb[0].mxu0
      %1352 = vmatprep.mubr.f32.mxu0 0.0
      %1353 = vmatmul.mubr.f32.gmra.mrb[0].mxu0 %v1243
      %v1354 = vpop.f32.mrb[0].mxu0
      %v1355 = vadd.f32 0.0, %v1354
      %v1356 = vpop.f32.mrb[0].mxu0
      %1357 = vmatprep.mubr.f32.mxu0 0.0
      %1358 = vmatmul.mubr.f32.gmra.mrb[0].mxu0 %v1244
      %v1359 = vpop.f32.mrb[0].mxu0
      %v1360 = vadd.f32 0.0, %v1359
      %v1361 = vpop.f32.mrb[0].mxu0
      %1362 = vmatprep.mubr.f32.mxu0 0.0
      %1363 = vmatmul.mubr.f32.gmra.mrb[0].mxu0 %v1245
      %v1364 = vpop.f32.mrb[0].mxu0
      %v1365 = vadd.f32 0.0, %v1364
      %v1366 = vpop.f32.mrb[0].mxu0
      %1367 = vdwg.mxu0
      %v1368 = vadd.f32 %v1230, %v1330
      %v1369 = vadd.f32 %v1231, %v1335
      %v1370 = vadd.f32 %v1232, %v1340
      %v1371 = vadd.f32 %v1233, %v1345
      %v1372 = vadd.f32 %v1234, %v1350
      %v1373 = vadd.f32 %v1235, %v1355
      %v1374 = vadd.f32 %v1236, %v1360
      %v1375 = vadd.f32 %v1237, %v1365
      %v1376 = vld [vmem:[%s1099 + $0x2] sm:$0xff]
      %v1377 = vld [vmem:[%s1099 + $0xa] sm:$0xff]
      %v1378 = vld [vmem:[%s1099 + $0x1a] sm:$0xff]
      %v1379 = vld [vmem:[%s1099 + $0x22] sm:$0xff]
      %v1380 = vld [vmem:[%s1099 + $0x32] sm:$0xff]
      %v1381 = vld [vmem:[%s1099 + $0x3a] sm:$0xff]
      %v1382 = vld [vmem:[%s1099 + $0x4a] sm:$0xff]
      %v1383 = vld [vmem:[%s1099 + $0x52] sm:$0xff]
      %s1384 = scalar_lea.vmem %s4, 640
      %v1385 = vld [vmem:[%s1384] sm:$0xff]
      %v1386 = vld [vmem:[%s1384 + $0x8] sm:$0xff]
      %v1387 = vld [vmem:[%s1384 + $0x10] sm:$0xff]
      %v1388 = vld [vmem:[%s1384 + $0x18] sm:$0xff]
      %v1389 = vld [vmem:[%s1384 + $0x20] sm:$0xff]
      %v1390 = vld [vmem:[%s1384 + $0x28] sm:$0xff]
      %v1391 = vld [vmem:[%s1384 + $0x30] sm:$0xff]
      %v1392 = vld [vmem:[%s1384 + $0x38] sm:$0xff]
      %v1393 = vld [vmem:[%s1384 + $0x40] sm:$0xff]
      %v1394 = vld [vmem:[%s1384 + $0x48] sm:$0xff]
      %v1395 = vld [vmem:[%s1384 + $0x50] sm:$0xff]
      %v1396 = vld [vmem:[%s1384 + $0x58] sm:$0xff]
      %v1397 = vld [vmem:[%s1384 + $0x60] sm:$0xff]
      %v1398 = vld [vmem:[%s1384 + $0x68] sm:$0xff]
      %v1399 = vld [vmem:[%s1384 + $0x70] sm:$0xff]
      %v1400 = vld [vmem:[%s1384 + $0x78] sm:$0xff]
      %1401 = vmatprep.subr.mxu0 0.0
      %1402 = vmatpush1.msra.mxu0 %v1385
      %1403 = vmatprep.subr.mxu0 0.0
      %1404 = vmatpush1.msra.mxu0 %v1386
      %1405 = vmatprep.subr.mxu0 0.0
      %1406 = vmatpush1.msra.mxu0 %v1387
      %1407 = vmatprep.subr.mxu0 0.0
      %1408 = vmatpush1.msra.mxu0 %v1388
      %1409 = vmatprep.subr.mxu0 0.0
      %1410 = vmatpush1.msra.mxu0 %v1389
      %1411 = vmatprep.subr.mxu0 0.0
      %1412 = vmatpush1.msra.mxu0 %v1390
      %1413 = vmatprep.subr.mxu0 0.0
      %1414 = vmatpush1.msra.mxu0 %v1391
      %1415 = vmatprep.subr.mxu0 0.0
      %1416 = vmatpush1.msra.mxu0 %v1392
      %1417 = vmatprep.subr.mxu0 0.0
      %1418 = vmatpush1.msra.mxu0 %v1393
      %1419 = vmatprep.subr.mxu0 0.0
      %1420 = vmatpush1.msra.mxu0 %v1394
      %1421 = vmatprep.subr.mxu0 0.0
      %1422 = vmatpush1.msra.mxu0 %v1395
      %1423 = vmatprep.subr.mxu0 0.0
      %1424 = vmatpush1.msra.mxu0 %v1396
      %1425 = vmatprep.subr.mxu0 0.0
      %1426 = vmatpush1.msra.mxu0 %v1397
      %1427 = vmatprep.subr.mxu0 0.0
      %1428 = vmatpush1.msra.mxu0 %v1398
      %1429 = vmatprep.subr.mxu0 0.0
      %1430 = vmatpush1.msra.mxu0 %v1399
      %1431 = vmatprep.subr.mxu0 0.0
      %1432 = vmatpush1.msra.mxu0 %v1400
      %1433 = vmatprep.subr.mxu0 0.0
      %1434 = vmatpush1.msra.mxu0 0.0
      %1435 = vmatprep.subr.mxu0 0.0
      %1436 = vmatpush1.msra.mxu0 0.0
      %1437 = vmatprep.subr.mxu0 0.0
      %1438 = vmatpush1.msra.mxu0 0.0
      %1439 = vmatprep.subr.mxu0 0.0
      %1440 = vmatpush1.msra.mxu0 0.0
      %1441 = vmatprep.subr.mxu0 0.0
      %1442 = vmatpush1.msra.mxu0 0.0
      %1443 = vmatprep.subr.mxu0 0.0
      %1444 = vmatpush1.msra.mxu0 0.0
      %1445 = vmatprep.subr.mxu0 0.0
      %1446 = vmatpush1.msra.mxu0 0.0
      %1447 = vmatprep.subr.mxu0 0.0
      %1448 = vmatpush1.msra.mxu0 0.0
      %1449 = vmatprep.subr.mxu0 0.0
      %1450 = vmatpush1.msra.mxu0 0.0
      %1451 = vmatprep.subr.mxu0 0.0
      %1452 = vmatpush1.msra.mxu0 0.0
      %1453 = vmatprep.subr.mxu0 0.0
      %1454 = vmatpush1.msra.mxu0 0.0
      %1455 = vmatprep.subr.mxu0 0.0
      %1456 = vmatpush1.msra.mxu0 0.0
      %1457 = vmatprep.subr.mxu0 0.0
      %1458 = vmatpush1.msra.mxu0 0.0
      %1459 = vmatprep.subr.mxu0 0.0
      %1460 = vmatpush1.msra.mxu0 0.0
      %1461 = vmatprep.subr.mxu0 0.0
      %1462 = vmatpush1.msra.mxu0 0.0
      %1463 = vmatprep.subr.mxu0 0.0
      %1464 = vmatpush1.msra.mxu0 0.0
      %1465 = vmatprep.mubr.f32.mxu0 0.0
      %1466 = vmatmul.mubr.f32.gmra.mrb[0].mxu0 %v1376
      %v1467 = vpop.f32.mrb[0].mxu0
      %v1468 = vadd.f32 0.0, %v1467
      %v1469 = vpop.f32.mrb[0].mxu0
      %1470 = vmatprep.mubr.f32.mxu0 0.0
      %1471 = vmatmul.mubr.f32.gmra.mrb[0].mxu0 %v1377
      %v1472 = vpop.f32.mrb[0].mxu0
      %v1473 = vadd.f32 0.0, %v1472
      %v1474 = vpop.f32.mrb[0].mxu0
      %1475 = vmatprep.mubr.f32.mxu0 0.0
      %1476 = vmatmul.mubr.f32.gmra.mrb[0].mxu0 %v1378
      %v1477 = vpop.f32.mrb[0].mxu0
      %v1478 = vadd.f32 0.0, %v1477
      %v1479 = vpop.f32.mrb[0].mxu0
      %1480 = vmatprep.mubr.f32.mxu0 0.0
      %1481 = vmatmul.mubr.f32.gmra.mrb[0].mxu0 %v1379
      %v1482 = vpop.f32.mrb[0].mxu0
      %v1483 = vadd.f32 0.0, %v1482
      %v1484 = vpop.f32.mrb[0].mxu0
      %1485 = vmatprep.mubr.f32.mxu0 0.0
      %1486 = vmatmul.mubr.f32.gmra.mrb[0].mxu0 %v1380
      %v1487 = vpop.f32.mrb[0].mxu0
      %v1488 = vadd.f32 0.0, %v1487
      %v1489 = vpop.f32.mrb[0].mxu0
      %1490 = vmatprep.mubr.f32.mxu0 0.0
      %1491 = vmatmul.mubr.f32.gmra.mrb[0].mxu0 %v1381
      %v1492 = vpop.f32.mrb[0].mxu0
      %v1493 = vadd.f32 0.0, %v1492
      %v1494 = vpop.f32.mrb[0].mxu0
      %1495 = vmatprep.mubr.f32.mxu0 0.0
      %1496 = vmatmul.mubr.f32.gmra.mrb[0].mxu0 %v1382
      %v1497 = vpop.f32.mrb[0].mxu0
      %v1498 = vadd.f32 0.0, %v1497
      %v1499 = vpop.f32.mrb[0].mxu0
      %1500 = vmatprep.mubr.f32.mxu0 0.0
      %1501 = vmatmul.mubr.f32.gmra.mrb[0].mxu0 %v1383
      %v1502 = vpop.f32.mrb[0].mxu0
      %v1503 = vadd.f32 0.0, %v1502
      %v1504 = vpop.f32.mrb[0].mxu0
      %1505 = vdwg.mxu0
      %v1506 = vadd.f32 %v1368, %v1468
      %v1507 = vadd.f32 %v1369, %v1473
      %v1508 = vadd.f32 %v1370, %v1478
      %v1509 = vadd.f32 %v1371, %v1483
      %v1510 = vadd.f32 %v1372, %v1488
      %v1511 = vadd.f32 %v1373, %v1493
      %v1512 = vadd.f32 %v1374, %v1498
      %v1513 = vadd.f32 %v1375, %v1503
      %s1514 = scalar_lea.vmem [#allocation2], 48
      %v1515 = vld [vmem:[%s1514] sm:$0xff]
      %v1516 = vld [vmem:[%s1514 + $0x8] sm:$0xff]
      %v1517 = vld [vmem:[%s1514 + $0x18] sm:$0xff]
      %v1518 = vld [vmem:[%s1514 + $0x20] sm:$0xff]
      %v1519 = vld [vmem:[%s1514 + $0x30] sm:$0xff]
      %v1520 = vld [vmem:[%s1514 + $0x38] sm:$0xff]
      %v1521 = vld [vmem:[%s1514 + $0x48] sm:$0xff]
      %v1522 = vld [vmem:[%s1514 + $0x50] sm:$0xff]
      %s1523 = scalar_lea.vmem %s4, 768
      %v1524 = vld [vmem:[%s1523] sm:$0xff]
      %v1525 = vld [vmem:[%s1523 + $0x8] sm:$0xff]
      %v1526 = vld [vmem:[%s1523 + $0x10] sm:$0xff]
      %v1527 = vld [vmem:[%s1523 + $0x18] sm:$0xff]
      %v1528 = vld [vmem:[%s1523 + $0x20] sm:$0xff]
      %v1529 = vld [vmem:[%s1523 + $0x28] sm:$0xff]
      %v1530 = vld [vmem:[%s1523 + $0x30] sm:$0xff]
      %v1531 = vld [vmem:[%s1523 + $0x38] sm:$0xff]
      %v1532 = vld [vmem:[%s1523 + $0x40] sm:$0xff]
      %v1533 = vld [vmem:[%s1523 + $0x48] sm:$0xff]
      %v1534 = vld [vmem:[%s1523 + $0x50] sm:$0xff]
      %v1535 = vld [vmem:[%s1523 + $0x58] sm:$0xff]
      %v1536 = vld [vmem:[%s1523 + $0x60] sm:$0xff]
      %v1537 = vld [vmem:[%s1523 + $0x68] sm:$0xff]
      %v1538 = vld [vmem:[%s1523 + $0x70] sm:$0xff]
      %v1539 = vld [vmem:[%s1523 + $0x78] sm:$0xff]
      %1540 = vmatprep.subr.mxu0 0.0
      %1541 = vmatpush1.msra.mxu0 %v1524
      %1542 = vmatprep.subr.mxu0 0.0
      %1543 = vmatpush1.msra.mxu0 %v1525
      %1544 = vmatprep.subr.mxu0 0.0
      %1545 = vmatpush1.msra.mxu0 %v1526
      %1546 = vmatprep.subr.mxu0 0.0
      %1547 = vmatpush1.msra.mxu0 %v1527
      %1548 = vmatprep.subr.mxu0 0.0
      %1549 = vmatpush1.msra.mxu0 %v1528
      %1550 = vmatprep.subr.mxu0 0.0
      %1551 = vmatpush1.msra.mxu0 %v1529
      %1552 = vmatprep.subr.mxu0 0.0
      %1553 = vmatpush1.msra.mxu0 %v1530
      %1554 = vmatprep.subr.mxu0 0.0
      %1555 = vmatpush1.msra.mxu0 %v1531
      %1556 = vmatprep.subr.mxu0 0.0
      %1557 = vmatpush1.msra.mxu0 %v1532
      %1558 = vmatprep.subr.mxu0 0.0
      %1559 = vmatpush1.msra.mxu0 %v1533
      %1560 = vmatprep.subr.mxu0 0.0
      %1561 = vmatpush1.msra.mxu0 %v1534
      %1562 = vmatprep.subr.mxu0 0.0
      %1563 = vmatpush1.msra.mxu0 %v1535
      %1564 = vmatprep.subr.mxu0 0.0
      %1565 = vmatpush1.msra.mxu0 %v1536
      %1566 = vmatprep.subr.mxu0 0.0
      %1567 = vmatpush1.msra.mxu0 %v1537
      %1568 = vmatprep.subr.mxu0 0.0
      %1569 = vmatpush1.msra.mxu0 %v1538
      %1570 = vmatprep.subr.mxu0 0.0
      %1571 = vmatpush1.msra.mxu0 %v1539
      %1572 = vmatprep.subr.mxu0 0.0
      %1573 = vmatpush1.msra.mxu0 0.0
      %1574 = vmatprep.subr.mxu0 0.0
      %1575 = vmatpush1.msra.mxu0 0.0
      %1576 = vmatprep.subr.mxu0 0.0
      %1577 = vmatpush1.msra.mxu0 0.0
      %1578 = vmatprep.subr.mxu0 0.0
      %1579 = vmatpush1.msra.mxu0 0.0
      %1580 = vmatprep.subr.mxu0 0.0
      %1581 = vmatpush1.msra.mxu0 0.0
      %1582 = vmatprep.subr.mxu0 0.0
      %1583 = vmatpush1.msra.mxu0 0.0
      %1584 = vmatprep.subr.mxu0 0.0
      %1585 = vmatpush1.msra.mxu0 0.0
      %1586 = vmatprep.subr.mxu0 0.0
      %1587 = vmatpush1.msra.mxu0 0.0
      %1588 = vmatprep.subr.mxu0 0.0
      %1589 = vmatpush1.msra.mxu0 0.0
      %1590 = vmatprep.subr.mxu0 0.0
      %1591 = vmatpush1.msra.mxu0 0.0
      %1592 = vmatprep.subr.mxu0 0.0
      %1593 = vmatpush1.msra.mxu0 0.0
      %1594 = vmatprep.subr.mxu0 0.0
      %1595 = vmatpush1.msra.mxu0 0.0
      %1596 = vmatprep.subr.mxu0 0.0
      %1597 = vmatpush1.msra.mxu0 0.0
      %1598 = vmatprep.subr.mxu0 0.0
      %1599 = vmatpush1.msra.mxu0 0.0
      %1600 = vmatprep.subr.mxu0 0.0
      %1601 = vmatpush1.msra.mxu0 0.0
      %1602 = vmatprep.subr.mxu0 0.0
      %1603 = vmatpush1.msra.mxu0 0.0
      %1604 = vmatprep.mubr.f32.mxu0 0.0
      %1605 = vmatmul.mubr.f32.gmra.mrb[0].mxu0 %v1515
      %v1606 = vpop.f32.mrb[0].mxu0
      %v1607 = vadd.f32 0.0, %v1606
      %v1608 = vpop.f32.mrb[0].mxu0
      %1609 = vmatprep.mubr.f32.mxu0 0.0
      %1610 = vmatmul.mubr.f32.gmra.mrb[0].mxu0 %v1516
      %v1611 = vpop.f32.mrb[0].mxu0
      %v1612 = vadd.f32 0.0, %v1611
      %v1613 = vpop.f32.mrb[0].mxu0
      %1614 = vmatprep.mubr.f32.mxu0 0.0
      %1615 = vmatmul.mubr.f32.gmra.mrb[0].mxu0 %v1517
      %v1616 = vpop.f32.mrb[0].mxu0
      %v1617 = vadd.f32 0.0, %v1616
      %v1618 = vpop.f32.mrb[0].mxu0
      %1619 = vmatprep.mubr.f32.mxu0 0.0
      %1620 = vmatmul.mubr.f32.gmra.mrb[0].mxu0 %v1518
      %v1621 = vpop.f32.mrb[0].mxu0
      %v1622 = vadd.f32 0.0, %v1621
      %v1623 = vpop.f32.mrb[0].mxu0
      %1624 = vmatprep.mubr.f32.mxu0 0.0
      %1625 = vmatmul.mubr.f32.gmra.mrb[0].mxu0 %v1519
      %v1626 = vpop.f32.mrb[0].mxu0
      %v1627 = vadd.f32 0.0, %v1626
      %v1628 = vpop.f32.mrb[0].mxu0
      %1629 = vmatprep.mubr.f32.mxu0 0.0
      %1630 = vmatmul.mubr.f32.gmra.mrb[0].mxu0 %v1520
      %v1631 = vpop.f32.mrb[0].mxu0
      %v1632 = vadd.f32 0.0, %v1631
      %v1633 = vpop.f32.mrb[0].mxu0
      %1634 = vmatprep.mubr.f32.mxu0 0.0
      %1635 = vmatmul.mubr.f32.gmra.mrb[0].mxu0 %v1521
      %v1636 = vpop.f32.mrb[0].mxu0
      %v1637 = vadd.f32 0.0, %v1636
      %v1638 = vpop.f32.mrb[0].mxu0
      %1639 = vmatprep.mubr.f32.mxu0 0.0
      %1640 = vmatmul.mubr.f32.gmra.mrb[0].mxu0 %v1522
      %v1641 = vpop.f32.mrb[0].mxu0
      %v1642 = vadd.f32 0.0, %v1641
      %v1643 = vpop.f32.mrb[0].mxu0
      %1644 = vdwg.mxu0
      %v1645 = vadd.f32 %v1506, %v1607
      %v1646 = vadd.f32 %v1507, %v1612
      %v1647 = vadd.f32 %v1508, %v1617
      %v1648 = vadd.f32 %v1509, %v1622
      %v1649 = vadd.f32 %v1510, %v1627
      %v1650 = vadd.f32 %v1511, %v1632
      %v1651 = vadd.f32 %v1512, %v1637
      %v1652 = vadd.f32 %v1513, %v1642
      %v1653 = vld [vmem:[%s1514 + $0x1] sm:$0xff]
      %v1654 = vld [vmem:[%s1514 + $0x9] sm:$0xff]
      %v1655 = vld [vmem:[%s1514 + $0x19] sm:$0xff]
      %v1656 = vld [vmem:[%s1514 + $0x21] sm:$0xff]
      %v1657 = vld [vmem:[%s1514 + $0x31] sm:$0xff]
      %v1658 = vld [vmem:[%s1514 + $0x39] sm:$0xff]
      %v1659 = vld [vmem:[%s1514 + $0x49] sm:$0xff]
      %v1660 = vld [vmem:[%s1514 + $0x51] sm:$0xff]
      %s1661 = scalar_lea.vmem %s4, 896
      %v1662 = vld [vmem:[%s1661] sm:$0xff]
      %v1663 = vld [vmem:[%s1661 + $0x8] sm:$0xff]
      %v1664 = vld [vmem:[%s1661 + $0x10] sm:$0xff]
      %v1665 = vld [vmem:[%s1661 + $0x18] sm:$0xff]
      %v1666 = vld [vmem:[%s1661 + $0x20] sm:$0xff]
      %v1667 = vld [vmem:[%s1661 + $0x28] sm:$0xff]
      %v1668 = vld [vmem:[%s1661 + $0x30] sm:$0xff]
      %v1669 = vld [vmem:[%s1661 + $0x38] sm:$0xff]
      %v1670 = vld [vmem:[%s1661 + $0x40] sm:$0xff]
      %v1671 = vld [vmem:[%s1661 + $0x48] sm:$0xff]
      %v1672 = vld [vmem:[%s1661 + $0x50] sm:$0xff]
      %v1673 = vld [vmem:[%s1661 + $0x58] sm:$0xff]
      %v1674 = vld [vmem:[%s1661 + $0x60] sm:$0xff]
      %v1675 = vld [vmem:[%s1661 + $0x68] sm:$0xff]
      %v1676 = vld [vmem:[%s1661 + $0x70] sm:$0xff]
      %v1677 = vld [vmem:[%s1661 + $0x78] sm:$0xff]
      %1678 = vmatprep.subr.mxu0 0.0
      %1679 = vmatpush1.msra.mxu0 %v1662
      %1680 = vmatprep.subr.mxu0 0.0
      %1681 = vmatpush1.msra.mxu0 %v1663
      %1682 = vmatprep.subr.mxu0 0.0
      %1683 = vmatpush1.msra.mxu0 %v1664
      %1684 = vmatprep.subr.mxu0 0.0
      %1685 = vmatpush1.msra.mxu0 %v1665
      %1686 = vmatprep.subr.mxu0 0.0
      %1687 = vmatpush1.msra.mxu0 %v1666
      %1688 = vmatprep.subr.mxu0 0.0
      %1689 = vmatpush1.msra.mxu0 %v1667
      %1690 = vmatprep.subr.mxu0 0.0
      %1691 = vmatpush1.msra.mxu0 %v1668
      %1692 = vmatprep.subr.mxu0 0.0
      %1693 = vmatpush1.msra.mxu0 %v1669
      %1694 = vmatprep.subr.mxu0 0.0
      %1695 = vmatpush1.msra.mxu0 %v1670
      %1696 = vmatprep.subr.mxu0 0.0
      %1697 = vmatpush1.msra.mxu0 %v1671
      %1698 = vmatprep.subr.mxu0 0.0
      %1699 = vmatpush1.msra.mxu0 %v1672
      %1700 = vmatprep.subr.mxu0 0.0
      %1701 = vmatpush1.msra.mxu0 %v1673
      %1702 = vmatprep.subr.mxu0 0.0
      %1703 = vmatpush1.msra.mxu0 %v1674
      %1704 = vmatprep.subr.mxu0 0.0
      %1705 = vmatpush1.msra.mxu0 %v1675
      %1706 = vmatprep.subr.mxu0 0.0
      %1707 = vmatpush1.msra.mxu0 %v1676
      %1708 = vmatprep.subr.mxu0 0.0
      %1709 = vmatpush1.msra.mxu0 %v1677
      %1710 = vmatprep.subr.mxu0 0.0
      %1711 = vmatpush1.msra.mxu0 0.0
      %1712 = vmatprep.subr.mxu0 0.0
      %1713 = vmatpush1.msra.mxu0 0.0
      %1714 = vmatprep.subr.mxu0 0.0
      %1715 = vmatpush1.msra.mxu0 0.0
      %1716 = vmatprep.subr.mxu0 0.0
      %1717 = vmatpush1.msra.mxu0 0.0
      %1718 = vmatprep.subr.mxu0 0.0
      %1719 = vmatpush1.msra.mxu0 0.0
      %1720 = vmatprep.subr.mxu0 0.0
      %1721 = vmatpush1.msra.mxu0 0.0
      %1722 = vmatprep.subr.mxu0 0.0
      %1723 = vmatpush1.msra.mxu0 0.0
      %1724 = vmatprep.subr.mxu0 0.0
      %1725 = vmatpush1.msra.mxu0 0.0
      %1726 = vmatprep.subr.mxu0 0.0
      %1727 = vmatpush1.msra.mxu0 0.0
      %1728 = vmatprep.subr.mxu0 0.0
      %1729 = vmatpush1.msra.mxu0 0.0
      %1730 = vmatprep.subr.mxu0 0.0
      %1731 = vmatpush1.msra.mxu0 0.0
      %1732 = vmatprep.subr.mxu0 0.0
      %1733 = vmatpush1.msra.mxu0 0.0
      %1734 = vmatprep.subr.mxu0 0.0
      %1735 = vmatpush1.msra.mxu0 0.0
      %1736 = vmatprep.subr.mxu0 0.0
      %1737 = vmatpush1.msra.mxu0 0.0
      %1738 = vmatprep.subr.mxu0 0.0
      %1739 = vmatpush1.msra.mxu0 0.0
      %1740 = vmatprep.subr.mxu0 0.0
      %1741 = vmatpush1.msra.mxu0 0.0
      %1742 = vmatprep.mubr.f32.mxu0 0.0
      %1743 = vmatmul.mubr.f32.gmra.mrb[0].mxu0 %v1653
      %v1744 = vpop.f32.mrb[0].mxu0
      %v1745 = vadd.f32 0.0, %v1744
      %v1746 = vpop.f32.mrb[0].mxu0
      %1747 = vmatprep.mubr.f32.mxu0 0.0
      %1748 = vmatmul.mubr.f32.gmra.mrb[0].mxu0 %v1654
      %v1749 = vpop.f32.mrb[0].mxu0
      %v1750 = vadd.f32 0.0, %v1749
      %v1751 = vpop.f32.mrb[0].mxu0
      %1752 = vmatprep.mubr.f32.mxu0 0.0
      %1753 = vmatmul.mubr.f32.gmra.mrb[0].mxu0 %v1655
      %v1754 = vpop.f32.mrb[0].mxu0
      %v1755 = vadd.f32 0.0, %v1754
      %v1756 = vpop.f32.mrb[0].mxu0
      %1757 = vmatprep.mubr.f32.mxu0 0.0
      %1758 = vmatmul.mubr.f32.gmra.mrb[0].mxu0 %v1656
      %v1759 = vpop.f32.mrb[0].mxu0
      %v1760 = vadd.f32 0.0, %v1759
      %v1761 = vpop.f32.mrb[0].mxu0
      %1762 = vmatprep.mubr.f32.mxu0 0.0
      %1763 = vmatmul.mubr.f32.gmra.mrb[0].mxu0 %v1657
      %v1764 = vpop.f32.mrb[0].mxu0
      %v1765 = vadd.f32 0.0, %v1764
      %v1766 = vpop.f32.mrb[0].mxu0
      %1767 = vmatprep.mubr.f32.mxu0 0.0
      %1768 = vmatmul.mubr.f32.gmra.mrb[0].mxu0 %v1658
      %v1769 = vpop.f32.mrb[0].mxu0
      %v1770 = vadd.f32 0.0, %v1769
      %v1771 = vpop.f32.mrb[0].mxu0
      %1772 = vmatprep.mubr.f32.mxu0 0.0
      %1773 = vmatmul.mubr.f32.gmra.mrb[0].mxu0 %v1659
      %v1774 = vpop.f32.mrb[0].mxu0
      %v1775 = vadd.f32 0.0, %v1774
      %v1776 = vpop.f32.mrb[0].mxu0
      %1777 = vmatprep.mubr.f32.mxu0 0.0
      %1778 = vmatmul.mubr.f32.gmra.mrb[0].mxu0 %v1660
      %v1779 = vpop.f32.mrb[0].mxu0
      %v1780 = vadd.f32 0.0, %v1779
      %v1781 = vpop.f32.mrb[0].mxu0
      %1782 = vdwg.mxu0
      %v1783 = vadd.f32 %v1645, %v1745
      %v1784 = vadd.f32 %v1646, %v1750
      %v1785 = vadd.f32 %v1647, %v1755
      %v1786 = vadd.f32 %v1648, %v1760
      %v1787 = vadd.f32 %v1649, %v1765
      %v1788 = vadd.f32 %v1650, %v1770
      %v1789 = vadd.f32 %v1651, %v1775
      %v1790 = vadd.f32 %v1652, %v1780
      %v1791 = vld [vmem:[%s1514 + $0x2] sm:$0xff]
      %v1792 = vld [vmem:[%s1514 + $0xa] sm:$0xff]
      %v1793 = vld [vmem:[%s1514 + $0x1a] sm:$0xff]
      %v1794 = vld [vmem:[%s1514 + $0x22] sm:$0xff]
      %v1795 = vld [vmem:[%s1514 + $0x32] sm:$0xff]
      %v1796 = vld [vmem:[%s1514 + $0x3a] sm:$0xff]
      %v1797 = vld [vmem:[%s1514 + $0x4a] sm:$0xff]
      %v1798 = vld [vmem:[%s1514 + $0x52] sm:$0xff]
      %s1799 = scalar_lea.vmem %s4, 1024
      %v1800 = vld [vmem:[%s1799] sm:$0xff]
      %v1801 = vld [vmem:[%s1799 + $0x8] sm:$0xff]
      %v1802 = vld [vmem:[%s1799 + $0x10] sm:$0xff]
      %v1803 = vld [vmem:[%s1799 + $0x18] sm:$0xff]
      %v1804 = vld [vmem:[%s1799 + $0x20] sm:$0xff]
      %v1805 = vld [vmem:[%s1799 + $0x28] sm:$0xff]
      %v1806 = vld [vmem:[%s1799 + $0x30] sm:$0xff]
      %v1807 = vld [vmem:[%s1799 + $0x38] sm:$0xff]
      %v1808 = vld [vmem:[%s1799 + $0x40] sm:$0xff]
      %v1809 = vld [vmem:[%s1799 + $0x48] sm:$0xff]
      %v1810 = vld [vmem:[%s1799 + $0x50] sm:$0xff]
      %v1811 = vld [vmem:[%s1799 + $0x58] sm:$0xff]
      %v1812 = vld [vmem:[%s1799 + $0x60] sm:$0xff]
      %v1813 = vld [vmem:[%s1799 + $0x68] sm:$0xff]
      %v1814 = vld [vmem:[%s1799 + $0x70] sm:$0xff]
      %v1815 = vld [vmem:[%s1799 + $0x78] sm:$0xff]
      %1816 = vmatprep.subr.mxu0 0.0
      %1817 = vmatpush1.msra.mxu0 %v1800
      %1818 = vmatprep.subr.mxu0 0.0
      %1819 = vmatpush1.msra.mxu0 %v1801
      %1820 = vmatprep.subr.mxu0 0.0
      %1821 = vmatpush1.msra.mxu0 %v1802
      %1822 = vmatprep.subr.mxu0 0.0
      %1823 = vmatpush1.msra.mxu0 %v1803
      %1824 = vmatprep.subr.mxu0 0.0
      %1825 = vmatpush1.msra.mxu0 %v1804
      %1826 = vmatprep.subr.mxu0 0.0
      %1827 = vmatpush1.msra.mxu0 %v1805
      %1828 = vmatprep.subr.mxu0 0.0
      %1829 = vmatpush1.msra.mxu0 %v1806
      %1830 = vmatprep.subr.mxu0 0.0
      %1831 = vmatpush1.msra.mxu0 %v1807
      %1832 = vmatprep.subr.mxu0 0.0
      %1833 = vmatpush1.msra.mxu0 %v1808
      %1834 = vmatprep.subr.mxu0 0.0
      %1835 = vmatpush1.msra.mxu0 %v1809
      %1836 = vmatprep.subr.mxu0 0.0
      %1837 = vmatpush1.msra.mxu0 %v1810
      %1838 = vmatprep.subr.mxu0 0.0
      %1839 = vmatpush1.msra.mxu0 %v1811
      %1840 = vmatprep.subr.mxu0 0.0
      %1841 = vmatpush1.msra.mxu0 %v1812
      %1842 = vmatprep.subr.mxu0 0.0
      %1843 = vmatpush1.msra.mxu0 %v1813
      %1844 = vmatprep.subr.mxu0 0.0
      %1845 = vmatpush1.msra.mxu0 %v1814
      %1846 = vmatprep.subr.mxu0 0.0
      %1847 = vmatpush1.msra.mxu0 %v1815
      %1848 = vmatprep.subr.mxu0 0.0
      %1849 = vmatpush1.msra.mxu0 0.0
      %1850 = vmatprep.subr.mxu0 0.0
      %1851 = vmatpush1.msra.mxu0 0.0
      %1852 = vmatprep.subr.mxu0 0.0
      %1853 = vmatpush1.msra.mxu0 0.0
      %1854 = vmatprep.subr.mxu0 0.0
      %1855 = vmatpush1.msra.mxu0 0.0
      %1856 = vmatprep.subr.mxu0 0.0
      %1857 = vmatpush1.msra.mxu0 0.0
      %1858 = vmatprep.subr.mxu0 0.0
      %1859 = vmatpush1.msra.mxu0 0.0
      %1860 = vmatprep.subr.mxu0 0.0
      %1861 = vmatpush1.msra.mxu0 0.0
      %1862 = vmatprep.subr.mxu0 0.0
      %1863 = vmatpush1.msra.mxu0 0.0
      %1864 = vmatprep.subr.mxu0 0.0
      %1865 = vmatpush1.msra.mxu0 0.0
      %1866 = vmatprep.subr.mxu0 0.0
      %1867 = vmatpush1.msra.mxu0 0.0
      %1868 = vmatprep.subr.mxu0 0.0
      %1869 = vmatpush1.msra.mxu0 0.0
      %1870 = vmatprep.subr.mxu0 0.0
      %1871 = vmatpush1.msra.mxu0 0.0
      %1872 = vmatprep.subr.mxu0 0.0
      %1873 = vmatpush1.msra.mxu0 0.0
      %1874 = vmatprep.subr.mxu0 0.0
      %1875 = vmatpush1.msra.mxu0 0.0
      %1876 = vmatprep.subr.mxu0 0.0
      %1877 = vmatpush1.msra.mxu0 0.0
      %1878 = vmatprep.subr.mxu0 0.0
      %1879 = vmatpush1.msra.mxu0 0.0
      %1880 = vmatprep.mubr.f32.mxu0 0.0
      %1881 = vmatmul.mubr.f32.gmra.mrb[0].mxu0 %v1791
      %v1882 = vpop.f32.mrb[0].mxu0
      %v1883 = vadd.f32 0.0, %v1882
      %v1884 = vpop.f32.mrb[0].mxu0
      %1885 = vmatprep.mubr.f32.mxu0 0.0
      %1886 = vmatmul.mubr.f32.gmra.mrb[0].mxu0 %v1792
      %v1887 = vpop.f32.mrb[0].mxu0
      %v1888 = vadd.f32 0.0, %v1887
      %v1889 = vpop.f32.mrb[0].mxu0
      %1890 = vmatprep.mubr.f32.mxu0 0.0
      %1891 = vmatmul.mubr.f32.gmra.mrb[0].mxu0 %v1793
      %v1892 = vpop.f32.mrb[0].mxu0
      %v1893 = vadd.f32 0.0, %v1892
      %v1894 = vpop.f32.mrb[0].mxu0
      %1895 = vmatprep.mubr.f32.mxu0 0.0
      %1896 = vmatmul.mubr.f32.gmra.mrb[0].mxu0 %v1794
      %v1897 = vpop.f32.mrb[0].mxu0
      %v1898 = vadd.f32 0.0, %v1897
      %v1899 = vpop.f32.mrb[0].mxu0
      %1900 = vmatprep.mubr.f32.mxu0 0.0
      %1901 = vmatmul.mubr.f32.gmra.mrb[0].mxu0 %v1795
      %v1902 = vpop.f32.mrb[0].mxu0
      %v1903 = vadd.f32 0.0, %v1902
      %v1904 = vpop.f32.mrb[0].mxu0
      %1905 = vmatprep.mubr.f32.mxu0 0.0
      %1906 = vmatmul.mubr.f32.gmra.mrb[0].mxu0 %v1796
      %v1907 = vpop.f32.mrb[0].mxu0
      %v1908 = vadd.f32 0.0, %v1907
      %v1909 = vpop.f32.mrb[0].mxu0
      %1910 = vmatprep.mubr.f32.mxu0 0.0
      %1911 = vmatmul.mubr.f32.gmra.mrb[0].mxu0 %v1797
      %v1912 = vpop.f32.mrb[0].mxu0
      %v1913 = vadd.f32 0.0, %v1912
      %v1914 = vpop.f32.mrb[0].mxu0
      %1915 = vmatprep.mubr.f32.mxu0 0.0
      %1916 = vmatmul.mubr.f32.gmra.mrb[0].mxu0 %v1798
      %v1917 = vpop.f32.mrb[0].mxu0
      %v1918 = vadd.f32 0.0, %v1917
      %v1919 = vpop.f32.mrb[0].mxu0
      %1920 = vdwg.mxu0
      %v1921 = vadd.f32 %v1783, %v1883
      %v1922 = vadd.f32 %v1784, %v1888
      %v1923 = vadd.f32 %v1785, %v1893
      %v1924 = vadd.f32 %v1786, %v1898
      %v1925 = vadd.f32 %v1787, %v1903
      %v1926 = vadd.f32 %v1788, %v1908
      %v1927 = vadd.f32 %v1789, %v1913
      %v1928 = vadd.f32 %v1790, %v1918
      %v1929 = vld [vmem:[%s5] sm:$0x1]
      %v1931 = vlaneseq
      %v1932 = vshrl.u32 %v1931, 7
      %v1933 = vsub.s32 0, %v1932
      %v1934 = vrot.slane %v1929, %v1933
      %v1936 = vadd.f32 %v1921, %v1934
      %v1937 = vadd.f32 %v1922, %v1934
      %v1938 = vadd.f32 %v1923, %v1934
      %v1939 = vadd.f32 %v1924, %v1934
      %v1940 = vadd.f32 %v1925, %v1934
      %v1941 = vadd.f32 %v1926, %v1934
      %v1942 = vadd.f32 %v1927, %v1934
      %v1943 = vadd.f32 %v1928, %v1934
      %v1944 = vmax.f32 %v1936, 0.0
      %v1945 = vmax.f32 %v1937, 0.0
      %v1946 = vmax.f32 %v1938, 0.0
      %v1947 = vmax.f32 %v1939, 0.0
      %v1948 = vmax.f32 %v1940, 0.0
      %v1949 = vmax.f32 %v1941, 0.0
      %v1950 = vmax.f32 %v1942, 0.0
      %v1951 = vmax.f32 %v1943, 0.0
      %1952 = vst [vmem:[%s551] sm:$0xff] %v1944
      %1953 = vst [vmem:[%s551 + $0x8] sm:$0xff] %v1945
      %1954 = vst [vmem:[%s551 + $0x10] sm:$0xff] %v1946
      %1955 = vst [vmem:[%s551 + $0x18] sm:$0xff] %v1947
      %1956 = vst [vmem:[%s551 + $0x20] sm:$0xff] %v1948
      %1957 = vst [vmem:[%s551 + $0x28] sm:$0xff] %v1949
      %1958 = vst [vmem:[%s551 + $0x30] sm:$0xff] %v1950
      %1959 = vst [vmem:[%s551 + $0x38] sm:$0xff] %v1951
      %v1960 = vld [vmem:[%s540] sm:$0xff]
      %v1961 = vld [vmem:[%s540 + $0x8] sm:$0xff]
      %v1962 = vld [vmem:[%s540 + $0x10] sm:$0xff]
      %v1963 = vld [vmem:[%s540 + $0x18] sm:$0xff]
      %v1964 = vld [vmem:[%s540 + $0x20] sm:$0xff]
      %v1965 = vld [vmem:[%s540 + $0x28] sm:$0xff]
      %v1966 = vld [vmem:[%s540 + $0x30] sm:$0xff]
      %v1967 = vld [vmem:[%s540 + $0x38] sm:$0xff]
      %v1968 = vadd.f32 %v1944, %v1945
      %v1969 = vadd.f32 %v1968, %v1946
      %v1970 = vadd.f32 %v1969, %v1947
      %v1971 = vadd.f32 %v1970, %v1948
      %v1972 = vadd.f32 %v1971, %v1949
      %v1973 = vadd.f32 %v1972, %v1950
      %v1974 = vadd.f32 %v1973, %v1951
      %v1975 = vrot.slane %v1974, 4
      %v1976 = vadd.f32 %v1974, %v1975
      %v1977 = vrot.slane %v1976, 2
      %v1978 = vadd.f32 %v1976, %v1977
      %v1979 = vrot.slane %v1978, 1
      %v1980 = vadd.f32 %v1978, %v1979
      %v1981 = vrcp.pop 64.0
      %v1982 = vmul.f32 %v1980, %v1981
      %v1983 = vsub.f32 %v1944, %v1982
      %v1984 = vsub.f32 %v1945, %v1982
      %v1985 = vsub.f32 %v1946, %v1982
      %v1986 = vsub.f32 %v1947, %v1982
      %v1987 = vsub.f32 %v1948, %v1982
      %v1988 = vsub.f32 %v1949, %v1982
      %v1989 = vsub.f32 %v1950, %v1982
      %v1990 = vsub.f32 %v1951, %v1982
      %v1991 = vmul.f32 %v1983, %v1983
      %v1992 = vmul.f32 %v1984, %v1984
      %v1993 = vmul.f32 %v1985, %v1985
      %v1994 = vmul.f32 %v1986, %v1986
      %v1995 = vmul.f32 %v1987, %v1987
      %v1996 = vmul.f32 %v1988, %v1988
      %v1997 = vmul.f32 %v1989, %v1989
      %v1998 = vmul.f32 %v1990, %v1990
      %v1999 = vadd.f32 %v1991, %v1992
      %v2000 = vadd.f32 %v1999, %v1993
      %v2001 = vadd.f32 %v2000, %v1994
      %v2002 = vadd.f32 %v2001, %v1995
      %v2003 = vadd.f32 %v2002, %v1996
      %v2004 = vadd.f32 %v2003, %v1997
      %v2005 = vadd.f32 %v2004, %v1998
      %v2006 = vrot.slane %v2005, 4
      %v2007 = vadd.f32 %v2005, %v2006
      %v2008 = vrot.slane %v2007, 2
      %v2009 = vadd.f32 %v2007, %v2008
      %v2010 = vrot.slane %v2009, 1
      %v2011 = vadd.f32 %v2009, %v2010
      %v2012 = vadd.f32 %v1960, %v1961
      %v2013 = vadd.f32 %v2012, %v1962
      %v2014 = vadd.f32 %v2013, %v1963
      %v2015 = vadd.f32 %v2014, %v1964
      %v2016 = vadd.f32 %v2015, %v1965
      %v2017 = vadd.f32 %v2016, %v1966
      %v2018 = vadd.f32 %v2017, %v1967
      %v2019 = vrot.slane %v2018, 4
      %v2020 = vadd.f32 %v2018, %v2019
      %v2021 = vrot.slane %v2020, 2
      %v2022 = vadd.f32 %v2020, %v2021
      %v2023 = vrot.slane %v2022, 1
      %v2024 = vadd.f32 %v2022, %v2023
      %v2025 = vmul.f32 %v2024, %v1981
      %v2026 = vsub.f32 %v1960, %v2025
      %v2027 = vsub.f32 %v1961, %v2025
      %v2028 = vsub.f32 %v1962, %v2025
      %v2029 = vsub.f32 %v1963, %v2025
      %v2030 = vsub.f32 %v1964, %v2025
      %v2031 = vsub.f32 %v1965, %v2025
      %v2032 = vsub.f32 %v1966, %v2025
      %v2033 = vsub.f32 %v1967, %v2025
      %v2034 = vmul.f32 %v1983, %v2026
      %v2035 = vmul.f32 %v1984, %v2027
      %v2036 = vmul.f32 %v1985, %v2028
      %v2037 = vmul.f32 %v1986, %v2029
      %v2038 = vmul.f32 %v1987, %v2030
      %v2039 = vmul.f32 %v1988, %v2031
      %v2040 = vmul.f32 %v1989, %v2032
      %v2041 = vmul.f32 %v1990, %v2033
      %v2042 = vadd.f32 %v2034, %v2035
      %v2043 = vadd.f32 %v2042, %v2036
      %v2044 = vadd.f32 %v2043, %v2037
      %v2045 = vadd.f32 %v2044, %v2038
      %v2046 = vadd.f32 %v2045, %v2039
      %v2047 = vadd.f32 %v2046, %v2040
      %v2048 = vadd.f32 %v2047, %v2041
      %v2049 = vrot.slane %v2048, 4
      %v2050 = vadd.f32 %v2048, %v2049
      %v2051 = vrot.slane %v2050, 2
      %v2052 = vadd.f32 %v2050, %v2051
      %v2053 = vrot.slane %v2052, 1
      %v2054 = vadd.f32 %v2052, %v2053
      %v2055 = vsel %vm635, %v1980, %v2011
      %vm2056 = vcmask 1041408
      %v2057 = vsel %vm2056, %v2055, %v2054
      %vm2058 = vcmask 1042432
      %v2059 = vsel %vm2058, %v2057, %v2024
      %2060 = vst [vmem:[%s560] sm:$0xf] %v2059
      %s2061 = smul.u32 4, %s26
      %p2062 = scmp.lt.s32.totalorder %s25, 1
      %s2063 = scalar_select %p2062, %s25, 1
      %p2064 = scmp.lt.s32.totalorder %s2061, 15
      %s2065 = scalar_select %p2064, %s2061, 15
      %s2066 = smul.addr %s2065, 2
      %s2067 = smul.addr %s2063, 32
      %s2068 = sadd.s32 %s2066, %s2067
      %s2069 = smul.addr %s2068, 8
      %s2070 = scalar_lea.vmem %s8, %s2069
      %p2071 = scmp.lt.s32.totalorder %s25, 1
      %s2072 = scalar_select %p2071, %s25, 1
      %p2073 = scmp.lt.s32.totalorder %s26, 3
      %s2074 = scalar_select %p2073, %s26, 3
      %s2075 = smul.addr %s2072, 4
      %s2076 = sadd.s32 %s2074, %s2075
      %s2077 = smul.addr %s2076, 4
      %s2078 = scalar_lea.vmem %s9, %s2077
      // Predicated region
      $region53: #{resnet_conv_forward.3} parent=51 // pred_check
        %p2079 = pneg %p265
      $region54: #{resnet_conv_forward.3} parent=51 // pred_check_branch
        %2081 = sbr.rel (%p2079) target = $region56
      $region55: #{resnet_conv_forward.3} parent=51 // pred_region
        %s2082 = smul.u32 4, %s26
      $region56: #{resnet_conv_forward.3} parent=51 // pred_fallthru
        _
      // Predicated region
      $region57: #{resnet_conv_forward.3} parent=51 // pred_check
        %p2083 = pneg %p293
      $region58: #{resnet_conv_forward.3} parent=51 // pred_check_branch
        %2085 = sbr.rel (%p2083) target = $region60
      $region59: #{resnet_conv_forward.3} parent=51 // pred_region
        _
      $region60: #{resnet_conv_forward.3} parent=51 // pred_fallthru
        _
    $region52: #{resnet_conv_forward.3} parent=5 // pred_fallthru
      _
    %p2086 = scmp.le.s32.totalorder 2, %s16
    // Predicated region
    $region61: #{resnet_conv_forward.3} parent=5 // pred_check
      %p2087 = pneg %p2086
    $region62: #{resnet_conv_forward.3} parent=5 // pred_check_branch
      %2089 = sbr.rel (%p2087) target = $region64
    $region63: #{resnet_conv_forward.3} parent=5 // pred_region
      %s2090 = ssub.s32 %s16, 2
      // Predicated region
      $region65: #{resnet_conv_forward.3} parent=63 // pred_check
        %p2091 = pneg %p271
      $region66: #{resnet_conv_forward.3} parent=63 // pred_check_branch
        %2093 = sbr.rel (%p2091) target = $region68
      $region67: #{resnet_conv_forward.3} parent=63 // pred_region
        %s2094 = smul.u32 4, %s28
        %p2095 = scmp.lt.s32.totalorder %s27, 1
        %s2096 = scalar_select %p2095, %s27, 1
        %p2097 = scmp.lt.s32.totalorder %s2094, 15
        %s2098 = scalar_select %p2097, %s2094, 15
        %s2099 = smul.addr %s2098, 2
        %s2100 = smul.addr %s2096, 32
        %s2101 = sadd.s32 %s2099, %s2100
        %s2102 = smul.addr %s2101, 8
        %s2103 = scalar_lea.vmem %s8, %s2102
      $region68: #{resnet_conv_forward.3} parent=63 // pred_fallthru
        _
      // Predicated region
      $region69: #{resnet_conv_forward.3} parent=63 // pred_check
        %p2104 = pneg %p299
      $region70: #{resnet_conv_forward.3} parent=63 // pred_check_branch
        %2106 = sbr.rel (%p2104) target = $region72
      $region71: #{resnet_conv_forward.3} parent=63 // pred_region
        %p2107 = scmp.lt.s32.totalorder %s27, 1
        %s2108 = scalar_select %p2107, %s27, 1
        %p2109 = scmp.lt.s32.totalorder %s28, 3
        %s2110 = scalar_select %p2109, %s28, 3
        %s2111 = smul.addr %s2108, 4
        %s2112 = sadd.s32 %s2110, %s2111
        %s2113 = smul.addr %s2112, 4
        %s2114 = scalar_lea.vmem %s9, %s2113
      $region72: #{resnet_conv_forward.3} parent=63 // pred_fallthru
        _
    $region64: #{resnet_conv_forward.3} parent=5 // pred_fallthru
      _
  $region6: #{resnet_conv_forward.3} parent=0 // loop_footer
    %s20 = sadd.s32 1, %s16
  $region7: #{resnet_conv_forward.3} parent=0 // loop_footer_branch
    %15 = sbr.rel target = $region3
  $region8: #{resnet_conv_forward.3} parent=0 // loop_exit
    _

</llo_original>
